<compile_context>
chip_gen: v7x
topology: tpu7x:2x2x1
jax: 0.10.0
libtpu: 0.0.40
codegen_flags: <defaults>
</compile_context>

<pallas_src>
import math

import jax
import jax.numpy as jnp
from jax.experimental import pallas as pl
from jax.experimental.pallas import tpu as pltpu

# ---- module hyper-parameters (small, consistent with the PyTorch module) ----
INPUT_SIZE = 32
RNN_SIZE = 32          # == INPUT_SIZE so `x + top_h` is valid for layers > 0
ATT_SIZE = 16
OUTPUT_SIZE = 16
NUM_LAYERS = 2
NUM_PARALLELS = 2
DROPOUT = 0.0          # TODO(synk): F.dropout(training=True, p>0) needs in-kernel RNG; p=0 here.
BATCH = 8


# ------------------------------- Pallas kernel --------------------------------
def lstm_att_kernel(x_ref, att_ref, c0_ref, h0_ref,
                    wslab_ref, bslab_ref, gate_ref, out_ref):
    R = RNN_SIZE
    A = ATT_SIZE
    L = NUM_LAYERS
    NP = NUM_PARALLELS
    x = x_ref[...]                        # (B, R)
    att3 = att_ref[...]                   # (B, A, R)
    h0 = h0_ref[...]                      # (L, B, R)
    B = x.shape[0]

    # ---- unpack the two small weight slabs (one DMA each) ----
    wslab = wslab_ref[...]                # (R, 4A+OUT): [a2a|a2a1|h2a|h2a1|proj]
    bslab = bslab_ref[...]                # (3, 4A+OUT)
    h2a_w = wslab[:, 2 * A:3 * A]
    h2a1_w = wslab[:, 3 * A:4 * A]
    proj_w = wslab[:, 4 * A:4 * A + OUTPUT_SIZE]
    attb = bslab[0:1, :]
    h2a_b = attb[:, 2 * A:3 * A]
    h2a1_b = attb[:, 3 * A:4 * A]
    proj_b = attb[:, 4 * A:4 * A + OUTPUT_SIZE]
    dw1 = bslab[1:2, 0:A]                 # d2d weight as a row over the proj axis
    dw2 = bslab[1:2, A:2 * A]
    db1 = bslab[2:3, 0:1]
    db2 = bslab[2:3, 1:2]

    gate = gate_ref[...]                  # (3R+1, NP*4R): [i2h; h2h; a2h; bias]
    i2h_w = gate[0:R, :]
    h2h_w = gate[R:2 * R, :]
    a2h_w = gate[2 * R:3 * R, :]
    gate_b = gate[3 * R:3 * R + 1, :]     # (1, NP*4R), per-branch biases pre-summed

    # ---- layer-invariant: a2a AND a2a1 projections of att as ONE fused matmul ----
    att_flat = att3.reshape(B * A, R)                                     # free (leading-dim merge)
    av_both = jax.nn.relu(
        jnp.dot(att_flat, wslab[:, 0:2 * A], preferred_element_type=jnp.float32)
        + attb[:, 0:2 * A])                                               # (B*A, 2A)
    av_both = av_both.reshape(B, A, 2 * A)
    av1 = av_both[:, :, 0:A]              # relu(a2a(att))  (B, A, A)
    av2 = av_both[:, :, A:2 * A]          # relu(a2a1(att)) (B, A, A)

    # ---- attention #1 hoisted out of the layer loop, batched over layers ----
    # prev_h = h0[i] is an input, so all of attention #1 is layer-loop independent.
    h0_flat = h0.reshape(L * B, R)                                        # (L*B, R)
    ah1 = jax.nn.relu(jnp.dot(h0_flat, h2a_w, preferred_element_type=jnp.float32)
                      + h2a_b)                                            # (L*B, A)
    av1_rep = jnp.concatenate([av1] * L, axis=0)                          # (L*B, A, A)
    att_rep = jnp.concatenate([att3] * L, axis=0)                         # (L*B, A, R)
    t1 = jnp.tanh(av1_rep + ah1[:, :, None])                              # (L*B, A, A)
    d1 = jax.nn.relu(jnp.sum(t1 * dw1, axis=2) + db1)                     # (L*B, A)
    m1 = jnp.max(d1, axis=1, keepdims=True)
    e1 = jnp.exp(d1 - m1)
    w1 = e1 / jnp.sum(e1, axis=1, keepdims=True)                          # softmax over A
    att_res_flat = jnp.sum(att_rep * w1[:, :, None], axis=1)              # (L*B, R)

    # ---- precompute the h2h/a2h gate partials (batched over layers) ----
    # Only xt @ i2h remains on the per-layer serial path.
    partial = (jnp.dot(h0_flat, h2h_w, preferred_element_type=jnp.float32)
               + jnp.dot(att_res_flat, a2h_w, preferred_element_type=jnp.float32)
               + gate_b)                                                  # (L*B, NP*4R)

    def attention2(h):
        # Second attention (depends on next_h -> inherently on the critical path).
        # Broadcast matches PyTorch att_h.unsqueeze(2).expand_as(att_v).
        ah = jax.nn.relu(jnp.dot(h, h2a1_w, preferred_element_type=jnp.float32)
                         + h2a1_b)                                        # (B, A)
        t = jnp.tanh(av2 + ah[:, :, None])                                # (B, A, A)
        d = jax.nn.relu(jnp.sum(t * dw2, axis=2) + db2)                   # (B, A)
        m = jnp.max(d, axis=1, keepdims=True)
        e = jnp.exp(d - m)
        w = e / jnp.sum(e, axis=1, keepdims=True)
        return jnp.sum(att3 * w[:, :, None], axis=1)                      # (B, R)

    top_h = None
    for i in range(L):                    # static unroll over layers
        prev_c = c0_ref[i]                # (B, R)
        xt = x if i == 0 else x + top_h

        # critical-path gate work: one (B, R) @ (R, NP*4R) matmul + add
        sums_all = (partial[i * B:(i + 1) * B, :]
                    + jnp.dot(xt, i2h_w, preferred_element_type=jnp.float32))  # (B, NP*4R)

        acc_c = jnp.zeros((B, R), jnp.float32)
        acc_h = jnp.zeros((B, R), jnp.float32)
        for j in range(NP):               # static unroll over parallel cells
            s = sums_all[:, j * 4 * R:(j + 1) * 4 * R]
            sig = jax.nn.sigmoid(s[:, 0:3 * R])
            in_transform = jnp.tanh(s[:, 3 * R:4 * R])
            c_j = sig[:, R:2 * R] * prev_c + sig[:, 0:R] * in_transform
            h_j = sig[:, 2 * R:3 * R] * jnp.tanh(c_j)
            acc_c = acc_c + c_j
            acc_h = acc_h + h_j
        next_c = acc_c * (1.0 / NP)
        next_h = acc_h * (1.0 / NP)

        # ---- second attention (on next_h) ----
        att_res2 = attention2(next_h)
        top_h = att_res2 + next_h

        # packed output: [ next_c (layer 0..L-1) | top_h (layer 0..L-1) | logsoft ]
        out_ref[:, i * R:(i + 1) * R] = next_c
        out_ref[:, (L + i) * R:(L + i + 1) * R] = top_h

    # TODO(synk): dropout on top_h skipped (DROPOUT == 0); would need pltpu.prng_* for p>0.
    logits = jnp.dot(top_h, proj_w, preferred_element_type=jnp.float32) + proj_b
    m = jnp.max(logits, axis=1, keepdims=True)
    lse = m + jnp.log(jnp.sum(jnp.exp(logits - m), axis=1, keepdims=True))
    out_ref[:, 2 * L * R:2 * L * R + OUTPUT_SIZE] = logits - lse


# ------------------------------ wrapper / packing ------------------------------
def pack_params(p):
    """Consolidate the 20 small parameter arrays into 3 packed kernel operands."""
    A = ATT_SIZE
    width = 4 * A + OUTPUT_SIZE
    wslab = jnp.concatenate(
        [p["a2a_w"], p["a2a1_w"], p["h2a_w"], p["h2a1_w"], p["proj_w"]], axis=1)   # (R, 4A+OUT)
    row0 = jnp.concatenate(
        [p["a2a_b"], p["a2a1_b"], p["h2a_b"], p["h2a1_b"], p["proj_b"]], axis=1)   # (1, 4A+OUT)
    row1 = jnp.zeros((1, width), jnp.float32)
    row1 = row1.at[:, 0:A].set(p["d2d_w"].T).at[:, A:2 * A].set(p["d2d1_w"].T)
    row2 = jnp.zeros((1, width), jnp.float32)
    row2 = row2.at[:, 0:1].set(p["d2d_b"]).at[:, 1:2].set(p["d2d1_b"])
    bslab = jnp.concatenate([row0, row1, row2], axis=0)                            # (3, 4A+OUT)

    gate_w = jnp.concatenate(
        [jnp.concatenate([p["i2h_w"][j], p["h2h_w"][j], p["a2h_w"][j]], axis=0)
         for j in range(NUM_PARALLELS)], axis=1)                                   # (3R, NP*4R)
    gate_b = jnp.concatenate(
        [(p["i2h_b"][j] + p["h2h_b"][j] + p["a2h_b"][j])[None, :]
         for j in range(NUM_PARALLELS)], axis=1)                                   # (1, NP*4R)
    gate_slab = jnp.concatenate([gate_w, gate_b], axis=0)                          # (3R+1, NP*4R)
    return wslab, bslab, gate_slab


@jax.jit
def lstm_double_att_forward(x, att, c0, h0, params):
    wslab, bslab, gate_slab = pack_params(params)
    B = x.shape[0]
    L, R = NUM_LAYERS, RNN_SIZE
    total = 2 * L * R + OUTPUT_SIZE
    vmem = pl.BlockSpec(memory_space=pltpu.MemorySpace.VMEM)
    cost = pl.CostEstimate(flops=1_200_000, transcendentals=12_000,
                           bytes_accessed=140_000)
    fn = pl.pallas_call(
        lstm_att_kernel,
        out_shape=jax.ShapeDtypeStruct((B, total), jnp.float32),
        in_specs=[vmem] * 7,
        out_specs=vmem,
        cost_estimate=cost,
    )
    packed = fn(x, att, c0, h0, wslab, bslab, gate_slab)
    out_c = packed[:, 0:L * R].reshape(B, L, R).transpose(1, 0, 2)
    out_h = packed[:, L * R:2 * L * R].reshape(B, L, R).transpose(1, 0, 2)
    logsoft = packed[:, 2 * L * R:]
    return out_c, out_h, logsoft


# ----------------------------- parameter init --------------------------------
def _xavier_normal(key, in_dim, out_dim):
    std = math.sqrt(2.0 / (in_dim + out_dim))
    return std * jax.random.normal(key, (in_dim, out_dim), jnp.float32)


def _bias(key, in_dim, out_dim):
    bound = 1.0 / math.sqrt(in_dim)
    return jax.random.uniform(key, (1, out_dim), jnp.float32, -bound, bound)


def make_params(key):
    ks = iter(jax.random.split(key, 64))
    p = {}
    # attention #1
    p["a2a_w"] = _xavier_normal(next(ks), RNN_SIZE, ATT_SIZE)
    p["a2a_b"] = _bias(next(ks), RNN_SIZE, ATT_SIZE)
    p["h2a_w"] = _xavier_normal(next(ks), RNN_SIZE, ATT_SIZE)
    p["h2a_b"] = _bias(next(ks), RNN_SIZE, ATT_SIZE)
    p["d2d_w"] = _xavier_normal(next(ks), ATT_SIZE, 1)
    p["d2d_b"] = _bias(next(ks), ATT_SIZE, 1)
    # attention #2
    p["a2a1_w"] = _xavier_normal(next(ks), RNN_SIZE, ATT_SIZE)
    p["a2a1_b"] = _bias(next(ks), RNN_SIZE, ATT_SIZE)
    p["h2a1_w"] = _xavier_normal(next(ks), RNN_SIZE, ATT_SIZE)
    p["h2a1_b"] = _bias(next(ks), RNN_SIZE, ATT_SIZE)
    p["d2d1_w"] = _xavier_normal(next(ks), ATT_SIZE, 1)
    p["d2d1_b"] = _bias(next(ks), ATT_SIZE, 1)
    # parallel LSTM cells (shared across layers, one set per parallel branch)
    p["i2h_w"] = jnp.stack([_xavier_normal(next(ks), INPUT_SIZE, 4 * RNN_SIZE)
                            for _ in range(NUM_PARALLELS)])
    p["i2h_b"] = jnp.concatenate([_bias(next(ks), INPUT_SIZE, 4 * RNN_SIZE)
                                  for _ in range(NUM_PARALLELS)], axis=0)
    p["h2h_w"] = jnp.stack([_xavier_normal(next(ks), RNN_SIZE, 4 * RNN_SIZE)
                            for _ in range(NUM_PARALLELS)])
    p["h2h_b"] = jnp.concatenate([_bias(next(ks), RNN_SIZE, 4 * RNN_SIZE)
                                  for _ in range(NUM_PARALLELS)], axis=0)
    p["a2h_w"] = jnp.stack([_xavier_normal(next(ks), RNN_SIZE, 4 * RNN_SIZE)
                            for _ in range(NUM_PARALLELS)])
    p["a2h_b"] = jnp.concatenate([_bias(next(ks), RNN_SIZE, 4 * RNN_SIZE)
                                  for _ in range(NUM_PARALLELS)], axis=0)
    # projection head
    p["proj_w"] = _xavier_normal(next(ks), RNN_SIZE, OUTPUT_SIZE)
    p["proj_b"] = _bias(next(ks), RNN_SIZE, OUTPUT_SIZE)
    return p


# ----------------------------- pure-JAX reference ----------------------------
def reference_forward(x, att, c0, h0, p):
    """Mirrors the PyTorch forward (incl. ReLUs and unsqueeze(2) broadcast)."""
    B = x.shape[0]
    R = RNN_SIZE
    A = ATT_SIZE

    def attention(h, aw, ab, hw, hb, dw, db):
        av = jax.nn.relu(att.reshape(-1, R) @ aw + ab).reshape(B, A, A)
        ah = jax.nn.relu(h @ hw + hb)                                  # (B, A)
        dot = jnp.tanh(av + ah[:, :, None])                            # unsqueeze(2) broadcast
        d = jax.nn.relu(dot.reshape(-1, A) @ dw + db).reshape(B, A)
        w = jax.nn.softmax(d, axis=1)
        return jnp.einsum('bar,ba->br', att, w)                        # (B, R)

    top_h = None
    out_c, out_h = [], []
    for i in range(NUM_LAYERS):
        prev_c, prev_h = c0[i], h0[i]
        xt = x if i == 0 else x + top_h
        att_res = attention(prev_h, p["a2a_w"], p["a2a_b"],
                            p["h2a_w"], p["h2a_b"], p["d2d_w"], p["d2d_b"])
        cs, hs = [], []
        for j in range(NUM_PARALLELS):
            sums = (xt @ p["i2h_w"][j] + p["i2h_b"][j]
                    + prev_h @ p["h2h_w"][j] + p["h2h_b"][j]
                    + att_res @ p["a2h_w"][j] + p["a2h_b"][j])
            sig = jax.nn.sigmoid(sums[:, :3 * R])
            c_j = sig[:, R:2 * R] * prev_c + sig[:, :R] * jnp.tanh(sums[:, 3 * R:])
            h_j = sig[:, 2 * R:3 * R] * jnp.tanh(c_j)
            cs.append(c_j)
            hs.append(h_j)
        next_c = sum(cs) / NUM_PARALLELS
        next_h = sum(hs) / NUM_PARALLELS
        att_res2 = attention(next_h, p["a2a1_w"], p["a2a1_b"],
                             p["h2a1_w"], p["h2a1_b"], p["d2d1_w"], p["d2d1_b"])
        top_h = att_res2 + next_h
        out_c.append(next_c)
        out_h.append(top_h)
    logits = top_h @ p["proj_w"] + p["proj_b"]
    logsoft = jax.nn.log_softmax(logits, axis=1)
    return jnp.stack(out_c), jnp.stack(out_h), logsoft


if __name__ == "__main__":
    key = jax.random.PRNGKey(0)
    k_x, k_att, k_c, k_h, k_p = jax.random.split(key, 5)

    x = jax.random.normal(k_x, (BATCH, INPUT_SIZE), jnp.float32)
    att = jax.random.normal(k_att, (BATCH, ATT_SIZE, RNN_SIZE), jnp.float32)
    c0 = jax.random.normal(k_c, (NUM_LAYERS, BATCH, RNN_SIZE), jnp.float32)
    h0 = jax.random.normal(k_h, (NUM_LAYERS, BATCH, RNN_SIZE), jnp.float32)
    params = make_params(k_p)

    out_c, out_h, logsoft = jax.block_until_ready(
        lstm_double_att_forward(x, att, c0, h0, params))

    ref_c, ref_h, ref_ls = reference_forward(x, att, c0, h0, params)
    assert jnp.allclose(out_c, ref_c, atol=1e-4, rtol=1e-4)
    assert jnp.allclose(out_h, ref_h, atol=1e-4, rtol=1e-4)
    assert jnp.allclose(logsoft, ref_ls, atol=1e-4, rtol=1e-4)

    print("KERNEL_OK")
</pallas_src>

<mosaic_0001>
module attributes {stable_mosaic.version = 11 : i64} {
  func.func @lstm_att_kernel(%arg0: memref<8x32xf32, #tpu.memory_space<vmem>>, %arg1: memref<8x16x32xf32, #tpu.memory_space<vmem>>, %arg2: memref<2x8x32xf32, #tpu.memory_space<vmem>>, %arg3: memref<2x8x32xf32, #tpu.memory_space<vmem>>, %arg4: memref<32x80xf32, #tpu.memory_space<vmem>>, %arg5: memref<3x80xf32, #tpu.memory_space<vmem>>, %arg6: memref<97x256xf32, #tpu.memory_space<vmem>>, %arg7: memref<8x144xf32, #tpu.memory_space<vmem>>) attributes {dimension_semantics = [], scalar_prefetch = 0 : i64, scratch_operands = 0 : i64, tpu.core_type = #tpu.core_type<tc>} {
    %c0 = arith.constant 0 : index
    %c0_0 = arith.constant 0 : index
    %0 = vector.load %arg0[%c0, %c0_0] : memref<8x32xf32, #tpu.memory_space<vmem>>, vector<8x32xf32>
    %c0_1 = arith.constant 0 : index
    %c0_2 = arith.constant 0 : index
    %c0_3 = arith.constant 0 : index
    %1 = vector.load %arg1[%c0_1, %c0_2, %c0_3] : memref<8x16x32xf32, #tpu.memory_space<vmem>>, vector<8x16x32xf32>
    %c0_4 = arith.constant 0 : index
    %c0_5 = arith.constant 0 : index
    %c0_6 = arith.constant 0 : index
    %2 = vector.load %arg3[%c0_4, %c0_5, %c0_6] : memref<2x8x32xf32, #tpu.memory_space<vmem>>, vector<2x8x32xf32>
    %c0_7 = arith.constant 0 : index
    %c0_8 = arith.constant 0 : index
    %3 = vector.load %arg4[%c0_7, %c0_8] : memref<32x80xf32, #tpu.memory_space<vmem>>, vector<32x80xf32>
    %c0_9 = arith.constant 0 : index
    %c0_10 = arith.constant 0 : index
    %4 = vector.load %arg5[%c0_9, %c0_10] : memref<3x80xf32, #tpu.memory_space<vmem>>, vector<3x80xf32>
    %5 = vector.extract_strided_slice %3 {offsets = [0, 32], sizes = [32, 16], strides = [1, 1]} : vector<32x80xf32> to vector<32x16xf32>
    %6 = vector.extract_strided_slice %3 {offsets = [0, 48], sizes = [32, 16], strides = [1, 1]} : vector<32x80xf32> to vector<32x16xf32>
    %7 = vector.extract_strided_slice %3 {offsets = [0, 64], sizes = [32, 16], strides = [1, 1]} : vector<32x80xf32> to vector<32x16xf32>
    %8 = vector.extract_strided_slice %4 {offsets = [0, 0], sizes = [1, 80], strides = [1, 1]} : vector<3x80xf32> to vector<1x80xf32>
    %9 = vector.extract_strided_slice %8 {offsets = [0, 32], sizes = [1, 16], strides = [1, 1]} : vector<1x80xf32> to vector<1x16xf32>
    %10 = vector.extract_strided_slice %8 {offsets = [0, 48], sizes = [1, 16], strides = [1, 1]} : vector<1x80xf32> to vector<1x16xf32>
    %11 = vector.extract_strided_slice %8 {offsets = [0, 64], sizes = [1, 16], strides = [1, 1]} : vector<1x80xf32> to vector<1x16xf32>
    %12 = vector.extract_strided_slice %4 {offsets = [1, 0], sizes = [1, 16], strides = [1, 1]} : vector<3x80xf32> to vector<1x16xf32>
    %13 = vector.extract_strided_slice %4 {offsets = [1, 16], sizes = [1, 16], strides = [1, 1]} : vector<3x80xf32> to vector<1x16xf32>
    %14 = vector.extract_strided_slice %4 {offsets = [2, 0], sizes = [1, 1], strides = [1, 1]} : vector<3x80xf32> to vector<1x1xf32>
    %15 = vector.extract_strided_slice %4 {offsets = [2, 1], sizes = [1, 1], strides = [1, 1]} : vector<3x80xf32> to vector<1x1xf32>
    %c0_11 = arith.constant 0 : index
    %c0_12 = arith.constant 0 : index
    %16 = vector.load %arg6[%c0_11, %c0_12] : memref<97x256xf32, #tpu.memory_space<vmem>>, vector<97x256xf32>
    %17 = vector.extract_strided_slice %16 {offsets = [0, 0], sizes = [32, 256], strides = [1, 1]} : vector<97x256xf32> to vector<32x256xf32>
    %18 = vector.extract_strided_slice %16 {offsets = [32, 0], sizes = [32, 256], strides = [1, 1]} : vector<97x256xf32> to vector<32x256xf32>
    %19 = vector.extract_strided_slice %16 {offsets = [64, 0], sizes = [32, 256], strides = [1, 1]} : vector<97x256xf32> to vector<32x256xf32>
    %20 = vector.extract_strided_slice %16 {offsets = [96, 0], sizes = [1, 256], strides = [1, 1]} : vector<97x256xf32> to vector<1x256xf32>
    %21 = vector.shape_cast %1 : vector<8x16x32xf32> to vector<128x32xf32>
    %22 = vector.extract_strided_slice %3 {offsets = [0, 0], sizes = [32, 32], strides = [1, 1]} : vector<32x80xf32> to vector<32x32xf32>
    %cst = arith.constant dense<0.000000e+00> : vector<128x32xf32>
    %23 = tpu.matmul %21, %22, %cst {dimension_numbers = #tpu.dot_dimension_numbers<[1], [0], [0], [1], [0, 0, 1, 1], [], []>} : vector<128x32xf32>, vector<32x32xf32>, vector<128x32xf32> -> vector<128x32xf32>
    %24 = vector.extract_strided_slice %8 {offsets = [0, 0], sizes = [1, 32], strides = [1, 1]} : vector<1x80xf32> to vector<1x32xf32>
    %25 = vector.broadcast %24 : vector<1x32xf32> to vector<128x32xf32>
    %26 = arith.addf %23, %25 : vector<128x32xf32>
    %cst_13 = arith.constant 0.000000e+00 : f32
    %27 = vector.broadcast %cst_13 : f32 to vector<128x32xf32>
    %28 = arith.maximumf %26, %27 : vector<128x32xf32>
    %29 = vector.shape_cast %28 : vector<128x32xf32> to vector<8x16x32xf32>
    %30 = vector.extract_strided_slice %29 {offsets = [0, 0, 0], sizes = [8, 16, 16], strides = [1, 1, 1]} : vector<8x16x32xf32> to vector<8x16x16xf32>
    %31 = vector.extract_strided_slice %29 {offsets = [0, 0, 16], sizes = [8, 16, 16], strides = [1, 1, 1]} : vector<8x16x32xf32> to vector<8x16x16xf32>
    %32 = vector.shape_cast %2 : vector<2x8x32xf32> to vector<16x32xf32>
    %cst_14 = arith.constant dense<0.000000e+00> : vector<16x16xf32>
    %33 = tpu.matmul %32, %5, %cst_14 {dimension_numbers = #tpu.dot_dimension_numbers<[1], [0], [0], [1], [0, 0, 1, 1], [], []>} : vector<16x32xf32>, vector<32x16xf32>, vector<16x16xf32> -> vector<16x16xf32>
    %34 = vector.broadcast %9 : vector<1x16xf32> to vector<16x16xf32>
    %35 = arith.addf %33, %34 : vector<16x16xf32>
    %cst_15 = arith.constant 0.000000e+00 : f32
    %36 = vector.broadcast %cst_15 : f32 to vector<16x16xf32>
    %37 = arith.maximumf %35, %36 : vector<16x16xf32>
    %38 = tpu.concatenate %30, %30 in 0 : vector<8x16x16xf32>, vector<8x16x16xf32> -> vector<16x16x16xf32>
    %39 = tpu.concatenate %1, %1 in 0 : vector<8x16x32xf32>, vector<8x16x32xf32> -> vector<16x16x32xf32>
    %40 = vector.shape_cast %37 : vector<16x16xf32> to vector<16x16x1xf32>
    %41 = vector.broadcast %40 : vector<16x16x1xf32> to vector<16x16x16xf32>
    %42 = arith.addf %38, %41 : vector<16x16x16xf32>
    %43 = math.tanh %42 : vector<16x16x16xf32>
    %44 = vector.shape_cast %12 : vector<1x16xf32> to vector<1x1x16xf32>
    %45 = vector.broadcast %44 : vector<1x1x16xf32> to vector<16x16x16xf32>
    %46 = arith.mulf %43, %45 : vector<16x16x16xf32>
    %cst_16 = arith.constant dense<0.000000e+00> : vector<16x16xf32>
    %47 = vector.multi_reduction <add>, %46, %cst_16 [2] : vector<16x16x16xf32> to vector<16x16xf32>
    %48 = vector.broadcast %14 : vector<1x1xf32> to vector<16x16xf32>
    %49 = arith.addf %47, %48 : vector<16x16xf32>
    %cst_17 = arith.constant 0.000000e+00 : f32
    %50 = vector.broadcast %cst_17 : f32 to vector<16x16xf32>
    %51 = arith.maximumf %49, %50 : vector<16x16xf32>
    %cst_18 = arith.constant dense<0xFF800000> : vector<16xf32>
    %52 = vector.multi_reduction <maximumf>, %51, %cst_18 [1] : vector<16x16xf32> to vector<16xf32>
    %53 = vector.shape_cast %52 : vector<16xf32> to vector<16x1xf32>
    %54 = vector.broadcast %53 : vector<16x1xf32> to vector<16x16xf32>
    %55 = arith.subf %51, %54 : vector<16x16xf32>
    %56 = math.exp %55 : vector<16x16xf32>
    %cst_19 = arith.constant dense<0.000000e+00> : vector<16xf32>
    %57 = vector.multi_reduction <add>, %56, %cst_19 [1] : vector<16x16xf32> to vector<16xf32>
    %58 = vector.shape_cast %57 : vector<16xf32> to vector<16x1xf32>
    %59 = vector.broadcast %58 : vector<16x1xf32> to vector<16x16xf32>
    %60 = arith.divf %56, %59 : vector<16x16xf32>
    %61 = vector.shape_cast %60 : vector<16x16xf32> to vector<16x16x1xf32>
    %62 = vector.broadcast %61 : vector<16x16x1xf32> to vector<16x16x32xf32>
    %63 = arith.mulf %39, %62 : vector<16x16x32xf32>
    %cst_20 = arith.constant dense<0.000000e+00> : vector<16x32xf32>
    %64 = vector.multi_reduction <add>, %63, %cst_20 [1] : vector<16x16x32xf32> to vector<16x32xf32>
    %cst_21 = arith.constant dense<0.000000e+00> : vector<16x256xf32>
    %65 = tpu.matmul %32, %18, %cst_21 {dimension_numbers = #tpu.dot_dimension_numbers<[1], [0], [0], [1], [0, 0, 1, 1], [], []>} : vector<16x32xf32>, vector<32x256xf32>, vector<16x256xf32> -> vector<16x256xf32>
    %cst_22 = arith.constant dense<0.000000e+00> : vector<16x256xf32>
    %66 = tpu.matmul %64, %19, %cst_22 {dimension_numbers = #tpu.dot_dimension_numbers<[1], [0], [0], [1], [0, 0, 1, 1], [], []>} : vector<16x32xf32>, vector<32x256xf32>, vector<16x256xf32> -> vector<16x256xf32>
    %67 = arith.addf %65, %66 : vector<16x256xf32>
    %68 = vector.broadcast %20 : vector<1x256xf32> to vector<16x256xf32>
    %69 = arith.addf %67, %68 : vector<16x256xf32>
    %c0_23 = arith.constant 0 : index
    %c0_24 = arith.constant 0 : index
    %c0_25 = arith.constant 0 : index
    %70 = vector.load %arg2[%c0_23, %c0_24, %c0_25] : memref<2x8x32xf32, #tpu.memory_space<vmem>>, vector<1x8x32xf32>
    %71 = vector.shape_cast %70 : vector<1x8x32xf32> to vector<8x32xf32>
    %72 = vector.extract_strided_slice %69 {offsets = [0, 0], sizes = [8, 256], strides = [1, 1]} : vector<16x256xf32> to vector<8x256xf32>
    %cst_26 = arith.constant dense<0.000000e+00> : vector<8x256xf32>
    %73 = tpu.matmul %0, %17, %cst_26 {dimension_numbers = #tpu.dot_dimension_numbers<[1], [0], [0], [1], [0, 0, 1, 1], [], []>} : vector<8x32xf32>, vector<32x256xf32>, vector<8x256xf32> -> vector<8x256xf32>
    %74 = arith.addf %72, %73 : vector<8x256xf32>
    %cst_27 = arith.constant 0.000000e+00 : f32
    %75 = vector.broadcast %cst_27 : f32 to vector<8x32xf32>
    %cst_28 = arith.constant 0.000000e+00 : f32
    %76 = vector.broadcast %cst_28 : f32 to vector<8x32xf32>
    %77 = vector.extract_strided_slice %74 {offsets = [0, 0], sizes = [8, 128], strides = [1, 1]} : vector<8x256xf32> to vector<8x128xf32>
    %78 = vector.extract_strided_slice %77 {offsets = [0, 0], sizes = [8, 96], strides = [1, 1]} : vector<8x128xf32> to vector<8x96xf32>
    %79 = arith.negf %78 : vector<8x96xf32>
    %80 = math.exp %79 : vector<8x96xf32>
    %cst_29 = arith.constant 1.000000e+00 : f32
    %81 = vector.broadcast %cst_29 : f32 to vector<8x96xf32>
    %82 = arith.addf %81, %80 : vector<8x96xf32>
    %83 = arith.divf %81, %82 : vector<8x96xf32>
    %84 = vector.extract_strided_slice %77 {offsets = [0, 96], sizes = [8, 32], strides = [1, 1]} : vector<8x128xf32> to vector<8x32xf32>
    %85 = math.tanh %84 : vector<8x32xf32>
    %86 = vector.extract_strided_slice %83 {offsets = [0, 32], sizes = [8, 32], strides = [1, 1]} : vector<8x96xf32> to vector<8x32xf32>
    %87 = arith.mulf %86, %71 : vector<8x32xf32>
    %88 = vector.extract_strided_slice %83 {offsets = [0, 0], sizes = [8, 32], strides = [1, 1]} : vector<8x96xf32> to vector<8x32xf32>
    %89 = arith.mulf %88, %85 : vector<8x32xf32>
    %90 = arith.addf %87, %89 : vector<8x32xf32>
    %91 = vector.extract_strided_slice %83 {offsets = [0, 64], sizes = [8, 32], strides = [1, 1]} : vector<8x96xf32> to vector<8x32xf32>
    %92 = math.tanh %90 : vector<8x32xf32>
    %93 = arith.mulf %91, %92 : vector<8x32xf32>
    %94 = arith.addf %75, %90 : vector<8x32xf32>
    %95 = arith.addf %76, %93 : vector<8x32xf32>
    %96 = vector.extract_strided_slice %74 {offsets = [0, 128], sizes = [8, 128], strides = [1, 1]} : vector<8x256xf32> to vector<8x128xf32>
    %97 = vector.extract_strided_slice %96 {offsets = [0, 0], sizes = [8, 96], strides = [1, 1]} : vector<8x128xf32> to vector<8x96xf32>
    %98 = arith.negf %97 : vector<8x96xf32>
    %99 = math.exp %98 : vector<8x96xf32>
    %cst_30 = arith.constant 1.000000e+00 : f32
    %100 = vector.broadcast %cst_30 : f32 to vector<8x96xf32>
    %101 = arith.addf %100, %99 : vector<8x96xf32>
    %102 = arith.divf %100, %101 : vector<8x96xf32>
    %103 = vector.extract_strided_slice %96 {offsets = [0, 96], sizes = [8, 32], strides = [1, 1]} : vector<8x128xf32> to vector<8x32xf32>
    %104 = math.tanh %103 : vector<8x32xf32>
    %105 = vector.extract_strided_slice %102 {offsets = [0, 32], sizes = [8, 32], strides = [1, 1]} : vector<8x96xf32> to vector<8x32xf32>
    %106 = arith.mulf %105, %71 : vector<8x32xf32>
    %107 = vector.extract_strided_slice %102 {offsets = [0, 0], sizes = [8, 32], strides = [1, 1]} : vector<8x96xf32> to vector<8x32xf32>
    %108 = arith.mulf %107, %104 : vector<8x32xf32>
    %109 = arith.addf %106, %108 : vector<8x32xf32>
    %110 = vector.extract_strided_slice %102 {offsets = [0, 64], sizes = [8, 32], strides = [1, 1]} : vector<8x96xf32> to vector<8x32xf32>
    %111 = math.tanh %109 : vector<8x32xf32>
    %112 = arith.mulf %110, %111 : vector<8x32xf32>
    %113 = arith.addf %94, %109 : vector<8x32xf32>
    %114 = arith.addf %95, %112 : vector<8x32xf32>
    %cst_31 = arith.constant 5.000000e-01 : f32
    %115 = vector.broadcast %cst_31 : f32 to vector<8x32xf32>
    %116 = arith.mulf %113, %115 : vector<8x32xf32>
    %cst_32 = arith.constant 5.000000e-01 : f32
    %117 = vector.broadcast %cst_32 : f32 to vector<8x32xf32>
    %118 = arith.mulf %114, %117 : vector<8x32xf32>
    %cst_33 = arith.constant dense<0.000000e+00> : vector<8x16xf32>
    %119 = tpu.matmul %118, %6, %cst_33 {dimension_numbers = #tpu.dot_dimension_numbers<[1], [0], [0], [1], [0, 0, 1, 1], [], []>} : vector<8x32xf32>, vector<32x16xf32>, vector<8x16xf32> -> vector<8x16xf32>
    %120 = vector.broadcast %10 : vector<1x16xf32> to vector<8x16xf32>
    %121 = arith.addf %119, %120 : vector<8x16xf32>
    %cst_34 = arith.constant 0.000000e+00 : f32
    %122 = vector.broadcast %cst_34 : f32 to vector<8x16xf32>
    %123 = arith.maximumf %121, %122 : vector<8x16xf32>
    %124 = vector.shape_cast %123 : vector<8x16xf32> to vector<8x16x1xf32>
    %125 = vector.broadcast %124 : vector<8x16x1xf32> to vector<8x16x16xf32>
    %126 = arith.addf %31, %125 : vector<8x16x16xf32>
    %127 = math.tanh %126 : vector<8x16x16xf32>
    %128 = vector.shape_cast %13 : vector<1x16xf32> to vector<1x1x16xf32>
    %129 = vector.broadcast %128 : vector<1x1x16xf32> to vector<8x16x16xf32>
    %130 = arith.mulf %127, %129 : vector<8x16x16xf32>
    %cst_35 = arith.constant dense<0.000000e+00> : vector<8x16xf32>
    %131 = vector.multi_reduction <add>, %130, %cst_35 [2] : vector<8x16x16xf32> to vector<8x16xf32>
    %132 = vector.broadcast %15 : vector<1x1xf32> to vector<8x16xf32>
    %133 = arith.addf %131, %132 : vector<8x16xf32>
    %cst_36 = arith.constant 0.000000e+00 : f32
    %134 = vector.broadcast %cst_36 : f32 to vector<8x16xf32>
    %135 = arith.maximumf %133, %134 : vector<8x16xf32>
    %cst_37 = arith.constant dense<0xFF800000> : vector<8xf32>
    %136 = vector.multi_reduction <maximumf>, %135, %cst_37 [1] : vector<8x16xf32> to vector<8xf32>
    %137 = vector.shape_cast %136 : vector<8xf32> to vector<8x1xf32>
    %138 = vector.broadcast %137 : vector<8x1xf32> to vector<8x16xf32>
    %139 = arith.subf %135, %138 : vector<8x16xf32>
    %140 = math.exp %139 : vector<8x16xf32>
    %cst_38 = arith.constant dense<0.000000e+00> : vector<8xf32>
    %141 = vector.multi_reduction <add>, %140, %cst_38 [1] : vector<8x16xf32> to vector<8xf32>
    %142 = vector.shape_cast %141 : vector<8xf32> to vector<8x1xf32>
    %143 = vector.broadcast %142 : vector<8x1xf32> to vector<8x16xf32>
    %144 = arith.divf %140, %143 : vector<8x16xf32>
    %145 = vector.shape_cast %144 : vector<8x16xf32> to vector<8x16x1xf32>
    %146 = vector.broadcast %145 : vector<8x16x1xf32> to vector<8x16x32xf32>
    %147 = arith.mulf %1, %146 : vector<8x16x32xf32>
    %cst_39 = arith.constant dense<0.000000e+00> : vector<8x32xf32>
    %148 = vector.multi_reduction <add>, %147, %cst_39 [1] : vector<8x16x32xf32> to vector<8x32xf32>
    %149 = arith.addf %148, %118 : vector<8x32xf32>
    %c0_40 = arith.constant 0 : index
    %c0_41 = arith.constant 0 : index
    %150 = vector.load %arg7[%c0_40, %c0_41] : memref<8x144xf32, #tpu.memory_space<vmem>>, vector<8x32xf32>
    tpu.vector_store %arg7[%c0_40, %c0_41], %116 {strides = array<i32>} : memref<8x144xf32, #tpu.memory_space<vmem>>, vector<8x32xf32>,
    %c0_42 = arith.constant 0 : index
    %c64 = arith.constant 64 : index
    %151 = vector.load %arg7[%c0_42, %c64] : memref<8x144xf32, #tpu.memory_space<vmem>>, vector<8x32xf32>
    tpu.vector_store %arg7[%c0_42, %c64], %149 {strides = array<i32>} : memref<8x144xf32, #tpu.memory_space<vmem>>, vector<8x32xf32>,
    %c1 = arith.constant 1 : index
    %c0_43 = arith.constant 0 : index
    %c0_44 = arith.constant 0 : index
    %152 = vector.load %arg2[%c1, %c0_43, %c0_44] : memref<2x8x32xf32, #tpu.memory_space<vmem>>, vector<1x8x32xf32>
    %153 = vector.shape_cast %152 : vector<1x8x32xf32> to vector<8x32xf32>
    %154 = arith.addf %0, %149 : vector<8x32xf32>
    %155 = vector.extract_strided_slice %69 {offsets = [8, 0], sizes = [8, 256], strides = [1, 1]} : vector<16x256xf32> to vector<8x256xf32>
    %cst_45 = arith.constant dense<0.000000e+00> : vector<8x256xf32>
    %156 = tpu.matmul %154, %17, %cst_45 {dimension_numbers = #tpu.dot_dimension_numbers<[1], [0], [0], [1], [0, 0, 1, 1], [], []>} : vector<8x32xf32>, vector<32x256xf32>, vector<8x256xf32> -> vector<8x256xf32>
    %157 = arith.addf %155, %156 : vector<8x256xf32>
    %cst_46 = arith.constant 0.000000e+00 : f32
    %158 = vector.broadcast %cst_46 : f32 to vector<8x32xf32>
    %cst_47 = arith.constant 0.000000e+00 : f32
    %159 = vector.broadcast %cst_47 : f32 to vector<8x32xf32>
    %160 = vector.extract_strided_slice %157 {offsets = [0, 0], sizes = [8, 128], strides = [1, 1]} : vector<8x256xf32> to vector<8x128xf32>
    %161 = vector.extract_strided_slice %160 {offsets = [0, 0], sizes = [8, 96], strides = [1, 1]} : vector<8x128xf32> to vector<8x96xf32>
    %162 = arith.negf %161 : vector<8x96xf32>
    %163 = math.exp %162 : vector<8x96xf32>
    %cst_48 = arith.constant 1.000000e+00 : f32
    %164 = vector.broadcast %cst_48 : f32 to vector<8x96xf32>
    %165 = arith.addf %164, %163 : vector<8x96xf32>
    %166 = arith.divf %164, %165 : vector<8x96xf32>
    %167 = vector.extract_strided_slice %160 {offsets = [0, 96], sizes = [8, 32], strides = [1, 1]} : vector<8x128xf32> to vector<8x32xf32>
    %168 = math.tanh %167 : vector<8x32xf32>
    %169 = vector.extract_strided_slice %166 {offsets = [0, 32], sizes = [8, 32], strides = [1, 1]} : vector<8x96xf32> to vector<8x32xf32>
    %170 = arith.mulf %169, %153 : vector<8x32xf32>
    %171 = vector.extract_strided_slice %166 {offsets = [0, 0], sizes = [8, 32], strides = [1, 1]} : vector<8x96xf32> to vector<8x32xf32>
    %172 = arith.mulf %171, %168 : vector<8x32xf32>
    %173 = arith.addf %170, %172 : vector<8x32xf32>
    %174 = vector.extract_strided_slice %166 {offsets = [0, 64], sizes = [8, 32], strides = [1, 1]} : vector<8x96xf32> to vector<8x32xf32>
    %175 = math.tanh %173 : vector<8x32xf32>
    %176 = arith.mulf %174, %175 : vector<8x32xf32>
    %177 = arith.addf %158, %173 : vector<8x32xf32>
    %178 = arith.addf %159, %176 : vector<8x32xf32>
    %179 = vector.extract_strided_slice %157 {offsets = [0, 128], sizes = [8, 128], strides = [1, 1]} : vector<8x256xf32> to vector<8x128xf32>
    %180 = vector.extract_strided_slice %179 {offsets = [0, 0], sizes = [8, 96], strides = [1, 1]} : vector<8x128xf32> to vector<8x96xf32>
    %181 = arith.negf %180 : vector<8x96xf32>
    %182 = math.exp %181 : vector<8x96xf32>
    %cst_49 = arith.constant 1.000000e+00 : f32
    %183 = vector.broadcast %cst_49 : f32 to vector<8x96xf32>
    %184 = arith.addf %183, %182 : vector<8x96xf32>
    %185 = arith.divf %183, %184 : vector<8x96xf32>
    %186 = vector.extract_strided_slice %179 {offsets = [0, 96], sizes = [8, 32], strides = [1, 1]} : vector<8x128xf32> to vector<8x32xf32>
    %187 = math.tanh %186 : vector<8x32xf32>
    %188 = vector.extract_strided_slice %185 {offsets = [0, 32], sizes = [8, 32], strides = [1, 1]} : vector<8x96xf32> to vector<8x32xf32>
    %189 = arith.mulf %188, %153 : vector<8x32xf32>
    %190 = vector.extract_strided_slice %185 {offsets = [0, 0], sizes = [8, 32], strides = [1, 1]} : vector<8x96xf32> to vector<8x32xf32>
    %191 = arith.mulf %190, %187 : vector<8x32xf32>
    %192 = arith.addf %189, %191 : vector<8x32xf32>
    %193 = vector.extract_strided_slice %185 {offsets = [0, 64], sizes = [8, 32], strides = [1, 1]} : vector<8x96xf32> to vector<8x32xf32>
    %194 = math.tanh %192 : vector<8x32xf32>
    %195 = arith.mulf %193, %194 : vector<8x32xf32>
    %196 = arith.addf %177, %192 : vector<8x32xf32>
    %197 = arith.addf %178, %195 : vector<8x32xf32>
    %cst_50 = arith.constant 5.000000e-01 : f32
    %198 = vector.broadcast %cst_50 : f32 to vector<8x32xf32>
    %199 = arith.mulf %196, %198 : vector<8x32xf32>
    %cst_51 = arith.constant 5.000000e-01 : f32
    %200 = vector.broadcast %cst_51 : f32 to vector<8x32xf32>
    %201 = arith.mulf %197, %200 : vector<8x32xf32>
    %cst_52 = arith.constant dense<0.000000e+00> : vector<8x16xf32>
    %202 = tpu.matmul %201, %6, %cst_52 {dimension_numbers = #tpu.dot_dimension_numbers<[1], [0], [0], [1], [0, 0, 1, 1], [], []>} : vector<8x32xf32>, vector<32x16xf32>, vector<8x16xf32> -> vector<8x16xf32>
    %203 = vector.broadcast %10 : vector<1x16xf32> to vector<8x16xf32>
    %204 = arith.addf %202, %203 : vector<8x16xf32>
    %cst_53 = arith.constant 0.000000e+00 : f32
    %205 = vector.broadcast %cst_53 : f32 to vector<8x16xf32>
    %206 = arith.maximumf %204, %205 : vector<8x16xf32>
    %207 = vector.shape_cast %206 : vector<8x16xf32> to vector<8x16x1xf32>
    %208 = vector.broadcast %207 : vector<8x16x1xf32> to vector<8x16x16xf32>
    %209 = arith.addf %31, %208 : vector<8x16x16xf32>
    %210 = math.tanh %209 : vector<8x16x16xf32>
    %211 = vector.shape_cast %13 : vector<1x16xf32> to vector<1x1x16xf32>
    %212 = vector.broadcast %211 : vector<1x1x16xf32> to vector<8x16x16xf32>
    %213 = arith.mulf %210, %212 : vector<8x16x16xf32>
    %cst_54 = arith.constant dense<0.000000e+00> : vector<8x16xf32>
    %214 = vector.multi_reduction <add>, %213, %cst_54 [2] : vector<8x16x16xf32> to vector<8x16xf32>
    %215 = vector.broadcast %15 : vector<1x1xf32> to vector<8x16xf32>
    %216 = arith.addf %214, %215 : vector<8x16xf32>
    %cst_55 = arith.constant 0.000000e+00 : f32
    %217 = vector.broadcast %cst_55 : f32 to vector<8x16xf32>
    %218 = arith.maximumf %216, %217 : vector<8x16xf32>
    %cst_56 = arith.constant dense<0xFF800000> : vector<8xf32>
    %219 = vector.multi_reduction <maximumf>, %218, %cst_56 [1] : vector<8x16xf32> to vector<8xf32>
    %220 = vector.shape_cast %219 : vector<8xf32> to vector<8x1xf32>
    %221 = vector.broadcast %220 : vector<8x1xf32> to vector<8x16xf32>
    %222 = arith.subf %218, %221 : vector<8x16xf32>
    %223 = math.exp %222 : vector<8x16xf32>
    %cst_57 = arith.constant dense<0.000000e+00> : vector<8xf32>
    %224 = vector.multi_reduction <add>, %223, %cst_57 [1] : vector<8x16xf32> to vector<8xf32>
    %225 = vector.shape_cast %224 : vector<8xf32> to vector<8x1xf32>
    %226 = vector.broadcast %225 : vector<8x1xf32> to vector<8x16xf32>
    %227 = arith.divf %223, %226 : vector<8x16xf32>
    %228 = vector.shape_cast %227 : vector<8x16xf32> to vector<8x16x1xf32>
    %229 = vector.broadcast %228 : vector<8x16x1xf32> to vector<8x16x32xf32>
    %230 = arith.mulf %1, %229 : vector<8x16x32xf32>
    %cst_58 = arith.constant dense<0.000000e+00> : vector<8x32xf32>
    %231 = vector.multi_reduction <add>, %230, %cst_58 [1] : vector<8x16x32xf32> to vector<8x32xf32>
    %232 = arith.addf %231, %201 : vector<8x32xf32>
    %c0_59 = arith.constant 0 : index
    %c32 = arith.constant 32 : index
    %233 = vector.load %arg7[%c0_59, %c32] : memref<8x144xf32, #tpu.memory_space<vmem>>, vector<8x32xf32>
    tpu.vector_store %arg7[%c0_59, %c32], %199 {strides = array<i32>} : memref<8x144xf32, #tpu.memory_space<vmem>>, vector<8x32xf32>,
    %c0_60 = arith.constant 0 : index
    %c96 = arith.constant 96 : index
    %234 = vector.load %arg7[%c0_60, %c96] : memref<8x144xf32, #tpu.memory_space<vmem>>, vector<8x32xf32>
    tpu.vector_store %arg7[%c0_60, %c96], %232 {strides = array<i32>} : memref<8x144xf32, #tpu.memory_space<vmem>>, vector<8x32xf32>,
    %cst_61 = arith.constant dense<0.000000e+00> : vector<8x16xf32>
    %235 = tpu.matmul %232, %7, %cst_61 {dimension_numbers = #tpu.dot_dimension_numbers<[1], [0], [0], [1], [0, 0, 1, 1], [], []>} : vector<8x32xf32>, vector<32x16xf32>, vector<8x16xf32> -> vector<8x16xf32>
    %236 = vector.broadcast %11 : vector<1x16xf32> to vector<8x16xf32>
    %237 = arith.addf %235, %236 : vector<8x16xf32>
    %cst_62 = arith.constant dense<0xFF800000> : vector<8xf32>
    %238 = vector.multi_reduction <maximumf>, %237, %cst_62 [1] : vector<8x16xf32> to vector<8xf32>
    %239 = vector.shape_cast %238 : vector<8xf32> to vector<8x1xf32>
    %240 = vector.broadcast %239 : vector<8x1xf32> to vector<8x16xf32>
    %241 = arith.subf %237, %240 : vector<8x16xf32>
    %242 = math.exp %241 : vector<8x16xf32>
    %cst_63 = arith.constant dense<0.000000e+00> : vector<8xf32>
    %243 = vector.multi_reduction <add>, %242, %cst_63 [1] : vector<8x16xf32> to vector<8xf32>
    %244 = vector.shape_cast %243 : vector<8xf32> to vector<8x1xf32>
    %245 = math.log %244 : vector<8x1xf32>
    %246 = arith.addf %239, %245 : vector<8x1xf32>
    %247 = vector.broadcast %246 : vector<8x1xf32> to vector<8x16xf32>
    %248 = arith.subf %237, %247 : vector<8x16xf32>
    %c0_64 = arith.constant 0 : index
    %c128 = arith.constant 128 : index
    %249 = vector.load %arg7[%c0_64, %c128] : memref<8x144xf32, #tpu.memory_space<vmem>>, vector<8x16xf32>
    tpu.vector_store %arg7[%c0_64, %c128], %248 {strides = array<i32>} : memref<8x144xf32, #tpu.memory_space<vmem>>, vector<8x16xf32>,
    return
  }
}

</mosaic_0001>

<llo_original>
// kernel: lstm_double_att_forward.1
$region0: #{lstm_double_att_forward.1}
  #allocation0 [shape = 'u32[]', space=smem, size = 0x4, offset = 0x4, fixed_abs, tag = 'smem constant byte address 0x4 - core index']
  #allocation1 [shape = 'u32[144,128]{1,0:T(1,128)}', space=vmem, size = 0x12000, scoped, tag = 'internal scratch']
  %s0 = inlined_call_operand.vmem [shape: f32[8,32], index: 0, kind: input, shape index: {}]
  %s1 = inlined_call_operand.vmem [shape: f32[8,16,32], index: 1, kind: input, shape index: {}]
  %s2 = inlined_call_operand.vmem [shape: f32[2,8,32], index: 2, kind: input, shape index: {}]
  %s3 = inlined_call_operand.vmem [shape: f32[2,8,32], index: 3, kind: input, shape index: {}]
  %s4 = inlined_call_operand.vmem [shape: f32[32,80], index: 4, kind: input, shape index: {}]
  %s5 = inlined_call_operand.vmem [shape: f32[3,80], index: 5, kind: input, shape index: {}]
  %s6 = inlined_call_operand.vmem [shape: f32[97,256], index: 6, kind: input, shape index: {}]
  %s7 = inlined_call_operand.vmem [shape: f32[8,144], index: 7, kind: output, shape index: {}]
  %s8 = sld [smem:[#allocation0]]
  $region38: #{lstm_double_att_forward.1} parent=0
    _
  %s10 = ssub.s32 1, %s8
  %s11 = scalar_select 0, %s10, %s8
  // Predicated region
  $region2: #{lstm_double_att_forward.1} parent=0 // pred_check
    _
  $region3: #{lstm_double_att_forward.1} parent=0 // pred_check_branch
    %13 = sbr.rel (0) target = $region5
  $region4: #{lstm_double_att_forward.1} parent=0 // pred_region
    _
  $region5: #{lstm_double_att_forward.1} parent=0 // pred_fallthru
    _
  // Predicated region
  $region6: #{lstm_double_att_forward.1} parent=0 // pred_check
    _
  $region7: #{lstm_double_att_forward.1} parent=0 // pred_check_branch
    %15 = sbr.rel (0) target = $region9
  $region8: #{lstm_double_att_forward.1} parent=0 // pred_region
    _
  $region9: #{lstm_double_att_forward.1} parent=0 // pred_fallthru
    _
  // Predicated region
  $region10: #{lstm_double_att_forward.1} parent=0 // pred_check
    _
  $region11: #{lstm_double_att_forward.1} parent=0 // pred_check_branch
    %17 = sbr.rel (0) target = $region13
  $region12: #{lstm_double_att_forward.1} parent=0 // pred_region
    _
  $region13: #{lstm_double_att_forward.1} parent=0 // pred_fallthru
    _
  // Predicated region
  $region14: #{lstm_double_att_forward.1} parent=0 // pred_check
    _
  $region15: #{lstm_double_att_forward.1} parent=0 // pred_check_branch
    %19 = sbr.rel (0) target = $region17
  $region16: #{lstm_double_att_forward.1} parent=0 // pred_region
    _
  $region17: #{lstm_double_att_forward.1} parent=0 // pred_fallthru
    _
  // Predicated region
  $region18: #{lstm_double_att_forward.1} parent=0 // pred_check
    _
  $region19: #{lstm_double_att_forward.1} parent=0 // pred_check_branch
    %21 = sbr.rel (0) target = $region21
  $region20: #{lstm_double_att_forward.1} parent=0 // pred_region
    _
  $region21: #{lstm_double_att_forward.1} parent=0 // pred_fallthru
    _
  // Predicated region
  $region22: #{lstm_double_att_forward.1} parent=0 // pred_check
    _
  $region23: #{lstm_double_att_forward.1} parent=0 // pred_check_branch
    %23 = sbr.rel (0) target = $region25
  $region24: #{lstm_double_att_forward.1} parent=0 // pred_region
    _
  $region25: #{lstm_double_att_forward.1} parent=0 // pred_fallthru
    _
  // Predicated region
  $region26: #{lstm_double_att_forward.1} parent=0 // pred_check
    _
  $region27: #{lstm_double_att_forward.1} parent=0 // pred_check_branch
    %25 = sbr.rel (0) target = $region29
  $region28: #{lstm_double_att_forward.1} parent=0 // pred_region
    _
  $region29: #{lstm_double_att_forward.1} parent=0 // pred_fallthru
    _
  %v26 = vld [vmem:[%s0] sm:$0xff]
  %v27 = vld [vmem:[%s1] sm:$0xff]
  %v28 = vld [vmem:[%s1 + $0x8] sm:$0xff]
  %v29 = vld [vmem:[%s1 + $0x10] sm:$0xff]
  %v30 = vld [vmem:[%s1 + $0x18] sm:$0xff]
  %v31 = vld [vmem:[%s1 + $0x20] sm:$0xff]
  %v32 = vld [vmem:[%s1 + $0x28] sm:$0xff]
  %v33 = vld [vmem:[%s1 + $0x30] sm:$0xff]
  %v34 = vld [vmem:[%s1 + $0x38] sm:$0xff]
  %v35 = vld [vmem:[%s1 + $0x40] sm:$0xff]
  %v36 = vld [vmem:[%s1 + $0x48] sm:$0xff]
  %v37 = vld [vmem:[%s1 + $0x50] sm:$0xff]
  %v38 = vld [vmem:[%s1 + $0x58] sm:$0xff]
  %v39 = vld [vmem:[%s1 + $0x60] sm:$0xff]
  %v40 = vld [vmem:[%s1 + $0x68] sm:$0xff]
  %v41 = vld [vmem:[%s1 + $0x70] sm:$0xff]
  %v42 = vld [vmem:[%s1 + $0x78] sm:$0xff]
  %v43 = vld [vmem:[%s3] sm:$0xff]
  %v44 = vld [vmem:[%s3 + $0x8] sm:$0xff]
  %v45 = vld [vmem:[%s4] sm:$0xff]
  %v46 = vld [vmem:[%s4 + $0x8] sm:$0xff]
  %v47 = vld [vmem:[%s4 + $0x10] sm:$0xff]
  %v48 = vld [vmem:[%s4 + $0x18] sm:$0xff]
  %v49 = vld [vmem:[%s5] sm:$0x7]
  %v50 = vld [vmem:[%s6] sm:$0xff]
  %v51 = vld [vmem:[%s6 + $0x8] sm:$0xff]
  %v52 = vld [vmem:[%s6 + $0x10] sm:$0xff]
  %v53 = vld [vmem:[%s6 + $0x18] sm:$0xff]
  %v54 = vld [vmem:[%s6 + $0x20] sm:$0xff]
  %v55 = vld [vmem:[%s6 + $0x28] sm:$0xff]
  %v56 = vld [vmem:[%s6 + $0x30] sm:$0xff]
  %v57 = vld [vmem:[%s6 + $0x38] sm:$0xff]
  %v58 = vld [vmem:[%s6 + $0x40] sm:$0xff]
  %v59 = vld [vmem:[%s6 + $0x48] sm:$0xff]
  %v60 = vld [vmem:[%s6 + $0x50] sm:$0xff]
  %v61 = vld [vmem:[%s6 + $0x58] sm:$0xff]
  %v62 = vld [vmem:[%s6 + $0x60] sm:$0xff]
  %v63 = vld [vmem:[%s6 + $0x68] sm:$0xff]
  %v64 = vld [vmem:[%s6 + $0x70] sm:$0xff]
  %v65 = vld [vmem:[%s6 + $0x78] sm:$0xff]
  %v66 = vld [vmem:[%s6 + $0x80] sm:$0xff]
  %v67 = vld [vmem:[%s6 + $0x88] sm:$0xff]
  %v68 = vld [vmem:[%s6 + $0x90] sm:$0xff]
  %v69 = vld [vmem:[%s6 + $0x98] sm:$0xff]
  %v70 = vld [vmem:[%s6 + $0xa0] sm:$0xff]
  %v71 = vld [vmem:[%s6 + $0xa8] sm:$0xff]
  %v72 = vld [vmem:[%s6 + $0xb0] sm:$0xff]
  %v73 = vld [vmem:[%s6 + $0xb8] sm:$0xff]
  %v74 = vld [vmem:[%s6 + $0xc0] sm:$0x1]
  %v75 = vld [vmem:[%s6 + $0xc8] sm:$0x1]
  %v76 = vlaneseq
  %v77 = vshrl.u32 %v76, 7
  %v78 = vsub.s32 0, %v77
  %v79 = vrot.slane %v49, %v78
  %vm80 = vcmask 261120
  %v82 = vsel %vm80, %v27, 0
  %v85 = vsel %vm80, %v28, 0
  %v88 = vsel %vm80, %v29, 0
  %v91 = vsel %vm80, %v30, 0
  %v94 = vsel %vm80, %v31, 0
  %v97 = vsel %vm80, %v32, 0
  %v100 = vsel %vm80, %v33, 0
  %v103 = vsel %vm80, %v34, 0
  %v106 = vsel %vm80, %v35, 0
  %v109 = vsel %vm80, %v36, 0
  %v112 = vsel %vm80, %v37, 0
  %v115 = vsel %vm80, %v38, 0
  %v118 = vsel %vm80, %v39, 0
  %v121 = vsel %vm80, %v40, 0
  %v124 = vsel %vm80, %v41, 0
  %v127 = vsel %vm80, %v42, 0
  %129 = vmatprep.subr.mxu0 0.0
  %130 = vmatpush1.msra.mxu0 %v45
  %131 = vmatprep.subr.mxu0 0.0
  %132 = vmatpush1.msra.mxu0 %v46
  %133 = vmatprep.subr.mxu0 0.0
  %134 = vmatpush1.msra.mxu0 %v47
  %135 = vmatprep.subr.mxu0 0.0
  %136 = vmatpush1.msra.mxu0 %v48
  %137 = vmatprep.subr.mxu0 0.0
  %138 = vmatpush1.msra.mxu0 0.0
  %139 = vmatprep.subr.mxu0 0.0
  %140 = vmatpush1.msra.mxu0 0.0
  %141 = vmatprep.subr.mxu0 0.0
  %142 = vmatpush1.msra.mxu0 0.0
  %143 = vmatprep.subr.mxu0 0.0
  %144 = vmatpush1.msra.mxu0 0.0
  %145 = vmatprep.subr.mxu0 0.0
  %146 = vmatpush1.msra.mxu0 0.0
  %147 = vmatprep.subr.mxu0 0.0
  %148 = vmatpush1.msra.mxu0 0.0
  %149 = vmatprep.subr.mxu0 0.0
  %150 = vmatpush1.msra.mxu0 0.0
  %151 = vmatprep.subr.mxu0 0.0
  %152 = vmatpush1.msra.mxu0 0.0
  %153 = vmatprep.subr.mxu0 0.0
  %154 = vmatpush1.msra.mxu0 0.0
  %155 = vmatprep.subr.mxu0 0.0
  %156 = vmatpush1.msra.mxu0 0.0
  %157 = vmatprep.subr.mxu0 0.0
  %158 = vmatpush1.msra.mxu0 0.0
  %159 = vmatprep.subr.mxu0 0.0
  %160 = vmatpush1.msra.mxu0 0.0
  %161 = vmatprep.subr.mxu0 0.0
  %162 = vmatpush1.msra.mxu0 0.0
  %163 = vmatprep.subr.mxu0 0.0
  %164 = vmatpush1.msra.mxu0 0.0
  %165 = vmatprep.subr.mxu0 0.0
  %166 = vmatpush1.msra.mxu0 0.0
  %167 = vmatprep.subr.mxu0 0.0
  %168 = vmatpush1.msra.mxu0 0.0
  %169 = vmatprep.subr.mxu0 0.0
  %170 = vmatpush1.msra.mxu0 0.0
  %171 = vmatprep.subr.mxu0 0.0
  %172 = vmatpush1.msra.mxu0 0.0
  %173 = vmatprep.subr.mxu0 0.0
  %174 = vmatpush1.msra.mxu0 0.0
  %175 = vmatprep.subr.mxu0 0.0
  %176 = vmatpush1.msra.mxu0 0.0
  %177 = vmatprep.subr.mxu0 0.0
  %178 = vmatpush1.msra.mxu0 0.0
  %179 = vmatprep.subr.mxu0 0.0
  %180 = vmatpush1.msra.mxu0 0.0
  %181 = vmatprep.subr.mxu0 0.0
  %182 = vmatpush1.msra.mxu0 0.0
  %183 = vmatprep.subr.mxu0 0.0
  %184 = vmatpush1.msra.mxu0 0.0
  %185 = vmatprep.subr.mxu0 0.0
  %186 = vmatpush1.msra.mxu0 0.0
  %187 = vmatprep.subr.mxu0 0.0
  %188 = vmatpush1.msra.mxu0 0.0
  %189 = vmatprep.subr.mxu0 0.0
  %190 = vmatpush1.msra.mxu0 0.0
  %191 = vmatprep.subr.mxu0 0.0
  %192 = vmatpush1.msra.mxu0 0.0
  %193 = vmatprep.mubr.f32.mxu0 0.0
  %194 = vmatmul.mubr.f32.gmra.mrb[0].mxu0 %v82
  %v195 = vpop.f32.mrb[0].mxu0
  %v196 = vadd.f32 %v79, %v195
  %v197 = vpop.f32.mrb[0].mxu0
  %198 = vmatprep.mubr.f32.mxu0 0.0
  %199 = vmatmul.mubr.f32.gmra.mrb[0].mxu0 %v85
  %v200 = vpop.f32.mrb[0].mxu0
  %v201 = vadd.f32 %v79, %v200
  %v202 = vpop.f32.mrb[0].mxu0
  %203 = vmatprep.mubr.f32.mxu0 0.0
  %204 = vmatmul.mubr.f32.gmra.mrb[0].mxu0 %v88
  %v205 = vpop.f32.mrb[0].mxu0
  %v206 = vadd.f32 %v79, %v205
  %v207 = vpop.f32.mrb[0].mxu0
  %208 = vmatprep.mubr.f32.mxu0 0.0
  %209 = vmatmul.mubr.f32.gmra.mrb[0].mxu0 %v91
  %v210 = vpop.f32.mrb[0].mxu0
  %v211 = vadd.f32 %v79, %v210
  %v212 = vpop.f32.mrb[0].mxu0
  %213 = vmatprep.mubr.f32.mxu0 0.0
  %214 = vmatmul.mubr.f32.gmra.mrb[0].mxu0 %v94
  %v215 = vpop.f32.mrb[0].mxu0
  %v216 = vadd.f32 %v79, %v215
  %v217 = vpop.f32.mrb[0].mxu0
  %218 = vmatprep.mubr.f32.mxu0 0.0
  %219 = vmatmul.mubr.f32.gmra.mrb[0].mxu0 %v97
  %v220 = vpop.f32.mrb[0].mxu0
  %v221 = vadd.f32 %v79, %v220
  %v222 = vpop.f32.mrb[0].mxu0
  %223 = vmatprep.mubr.f32.mxu0 0.0
  %224 = vmatmul.mubr.f32.gmra.mrb[0].mxu0 %v100
  %v225 = vpop.f32.mrb[0].mxu0
  %v226 = vadd.f32 %v79, %v225
  %v227 = vpop.f32.mrb[0].mxu0
  %228 = vmatprep.mubr.f32.mxu0 0.0
  %229 = vmatmul.mubr.f32.gmra.mrb[0].mxu0 %v103
  %v230 = vpop.f32.mrb[0].mxu0
  %v231 = vadd.f32 %v79, %v230
  %v232 = vpop.f32.mrb[0].mxu0
  %233 = vmatprep.mubr.f32.mxu0 0.0
  %234 = vmatmul.mubr.f32.gmra.mrb[0].mxu0 %v106
  %v235 = vpop.f32.mrb[0].mxu0
  %v236 = vadd.f32 %v79, %v235
  %v237 = vpop.f32.mrb[0].mxu0
  %238 = vmatprep.mubr.f32.mxu0 0.0
  %239 = vmatmul.mubr.f32.gmra.mrb[0].mxu0 %v109
  %v240 = vpop.f32.mrb[0].mxu0
  %v241 = vadd.f32 %v79, %v240
  %v242 = vpop.f32.mrb[0].mxu0
  %243 = vmatprep.mubr.f32.mxu0 0.0
  %244 = vmatmul.mubr.f32.gmra.mrb[0].mxu0 %v112
  %v245 = vpop.f32.mrb[0].mxu0
  %v246 = vadd.f32 %v79, %v245
  %v247 = vpop.f32.mrb[0].mxu0
  %248 = vmatprep.mubr.f32.mxu0 0.0
  %249 = vmatmul.mubr.f32.gmra.mrb[0].mxu0 %v115
  %v250 = vpop.f32.mrb[0].mxu0
  %v251 = vadd.f32 %v79, %v250
  %v252 = vpop.f32.mrb[0].mxu0
  %253 = vmatprep.mubr.f32.mxu0 0.0
  %254 = vmatmul.mubr.f32.gmra.mrb[0].mxu0 %v118
  %v255 = vpop.f32.mrb[0].mxu0
  %v256 = vadd.f32 %v79, %v255
  %v257 = vpop.f32.mrb[0].mxu0
  %258 = vmatprep.mubr.f32.mxu0 0.0
  %259 = vmatmul.mubr.f32.gmra.mrb[0].mxu0 %v121
  %v260 = vpop.f32.mrb[0].mxu0
  %v261 = vadd.f32 %v79, %v260
  %v262 = vpop.f32.mrb[0].mxu0
  %263 = vmatprep.mubr.f32.mxu0 0.0
  %264 = vmatmul.mubr.f32.gmra.mrb[0].mxu0 %v124
  %v265 = vpop.f32.mrb[0].mxu0
  %v266 = vadd.f32 %v79, %v265
  %v267 = vpop.f32.mrb[0].mxu0
  %268 = vmatprep.mubr.f32.mxu0 0.0
  %269 = vmatmul.mubr.f32.gmra.mrb[0].mxu0 %v127
  %v270 = vpop.f32.mrb[0].mxu0
  %v271 = vadd.f32 %v79, %v270
  %v272 = vpop.f32.mrb[0].mxu0
  %273 = vdwg.mxu0
  %v274 = vmax.f32 %v196, 0.0
  %v275 = vmax.f32 %v201, 0.0
  %v276 = vmax.f32 %v206, 0.0
  %v277 = vmax.f32 %v211, 0.0
  %v278 = vmax.f32 %v216, 0.0
  %v279 = vmax.f32 %v221, 0.0
  %v280 = vmax.f32 %v226, 0.0
  %v281 = vmax.f32 %v231, 0.0
  %v282 = vmax.f32 %v236, 0.0
  %v283 = vmax.f32 %v241, 0.0
  %v284 = vmax.f32 %v246, 0.0
  %v285 = vmax.f32 %v251, 0.0
  %v286 = vmax.f32 %v256, 0.0
  %v287 = vmax.f32 %v261, 0.0
  %v288 = vmax.f32 %v266, 0.0
  %v289 = vmax.f32 %v271, 0.0
  %294 = vrot.lane.b32.xlu0 %v45, 96
  %v295 = vpop.permute.xlu0 %294
  %296 = vrot.lane.b32.xlu0 %v46, 96
  %v297 = vpop.permute.xlu0 %296
  %298 = vrot.lane.b32.xlu0 %v47, 96
  %v299 = vpop.permute.xlu0 %298
  %300 = vrot.lane.b32.xlu0 %v48, 96
  %v301 = vpop.permute.xlu0 %300
  %307 = vrot.lane.b32.xlu0 %v79, 96
  %v308 = vpop.permute.xlu0 %307
  %v311 = vsel %vm80, %v43, 0
  %v314 = vsel %vm80, %v44, 0
  %316 = vmatprep.subr.mxu0 0.0
  %317 = vmatpush1.msra.mxu0 %v295
  %318 = vmatprep.subr.mxu0 0.0
  %319 = vmatpush1.msra.mxu0 %v297
  %320 = vmatprep.subr.mxu0 0.0
  %321 = vmatpush1.msra.mxu0 %v299
  %322 = vmatprep.subr.mxu0 0.0
  %323 = vmatpush1.msra.mxu0 %v301
  %324 = vmatprep.subr.mxu0 0.0
  %325 = vmatpush1.msra.mxu0 0.0
  %326 = vmatprep.subr.mxu0 0.0
  %327 = vmatpush1.msra.mxu0 0.0
  %328 = vmatprep.subr.mxu0 0.0
  %329 = vmatpush1.msra.mxu0 0.0
  %330 = vmatprep.subr.mxu0 0.0
  %331 = vmatpush1.msra.mxu0 0.0
  %332 = vmatprep.subr.mxu0 0.0
  %333 = vmatpush1.msra.mxu0 0.0
  %334 = vmatprep.subr.mxu0 0.0
  %335 = vmatpush1.msra.mxu0 0.0
  %336 = vmatprep.subr.mxu0 0.0
  %337 = vmatpush1.msra.mxu0 0.0
  %338 = vmatprep.subr.mxu0 0.0
  %339 = vmatpush1.msra.mxu0 0.0
  %340 = vmatprep.subr.mxu0 0.0
  %341 = vmatpush1.msra.mxu0 0.0
  %342 = vmatprep.subr.mxu0 0.0
  %343 = vmatpush1.msra.mxu0 0.0
  %344 = vmatprep.subr.mxu0 0.0
  %345 = vmatpush1.msra.mxu0 0.0
  %346 = vmatprep.subr.mxu0 0.0
  %347 = vmatpush1.msra.mxu0 0.0
  %348 = vmatprep.subr.mxu0 0.0
  %349 = vmatpush1.msra.mxu0 0.0
  %350 = vmatprep.subr.mxu0 0.0
  %351 = vmatpush1.msra.mxu0 0.0
  %352 = vmatprep.subr.mxu0 0.0
  %353 = vmatpush1.msra.mxu0 0.0
  %354 = vmatprep.subr.mxu0 0.0
  %355 = vmatpush1.msra.mxu0 0.0
  %356 = vmatprep.subr.mxu0 0.0
  %357 = vmatpush1.msra.mxu0 0.0
  %358 = vmatprep.subr.mxu0 0.0
  %359 = vmatpush1.msra.mxu0 0.0
  %360 = vmatprep.subr.mxu0 0.0
  %361 = vmatpush1.msra.mxu0 0.0
  %362 = vmatprep.subr.mxu0 0.0
  %363 = vmatpush1.msra.mxu0 0.0
  %364 = vmatprep.subr.mxu0 0.0
  %365 = vmatpush1.msra.mxu0 0.0
  %366 = vmatprep.subr.mxu0 0.0
  %367 = vmatpush1.msra.mxu0 0.0
  %368 = vmatprep.subr.mxu0 0.0
  %369 = vmatpush1.msra.mxu0 0.0
  %370 = vmatprep.subr.mxu0 0.0
  %371 = vmatpush1.msra.mxu0 0.0
  %372 = vmatprep.subr.mxu0 0.0
  %373 = vmatpush1.msra.mxu0 0.0
  %374 = vmatprep.subr.mxu0 0.0
  %375 = vmatpush1.msra.mxu0 0.0
  %376 = vmatprep.subr.mxu0 0.0
  %377 = vmatpush1.msra.mxu0 0.0
  %378 = vmatprep.subr.mxu0 0.0
  %379 = vmatpush1.msra.mxu0 0.0
  %380 = vmatprep.mubr.f32.mxu0 0.0
  %381 = vmatmul.mubr.f32.gmra.mrb[0].mxu0 %v311
  %v382 = vpop.f32.mrb[0].mxu0
  %v383 = vadd.f32 %v308, %v382
  %v384 = vpop.f32.mrb[0].mxu0
  %385 = vmatprep.mubr.f32.mxu0 0.0
  %386 = vmatmul.mubr.f32.gmra.mrb[0].mxu0 %v314
  %v387 = vpop.f32.mrb[0].mxu0
  %v388 = vadd.f32 %v308, %v387
  %v389 = vpop.f32.mrb[0].mxu0
  %390 = vdwg.mxu0
  %v391 = vmax.f32 %v383, 0.0
  %v392 = vmax.f32 %v388, 0.0
  %v393 = vlaneseq
  %v394 = vshrl.u32 %v393, 7
  %v395 = vsub.s32 0, %v394
  %v396 = vrot.slane %v391, %v395
  %398 = vbcast.lane.b32.xlu0 %v396, 256
  %v399 = vpop.permute.xlu0 %398
  %s401 = sor.u32 256, 8
  %402 = vbcast.lane.b32.xlu0 %v396, %s401
  %v403 = vpop.permute.xlu0 %402
  %v404 = vlaneseq
  %v405 = vshrl.u32 %v404, 7
  %v406 = vsub.s32 1, %v405
  %v407 = vrot.slane %v391, %v406
  %409 = vbcast.lane.b32.xlu0 %v407, 256
  %v410 = vpop.permute.xlu0 %409
  %s412 = sor.u32 256, 8
  %413 = vbcast.lane.b32.xlu0 %v407, %s412
  %v414 = vpop.permute.xlu0 %413
  %v415 = vlaneseq
  %v416 = vshrl.u32 %v415, 7
  %v417 = vsub.s32 2, %v416
  %v418 = vrot.slane %v391, %v417
  %420 = vbcast.lane.b32.xlu0 %v418, 256
  %v421 = vpop.permute.xlu0 %420
  %s423 = sor.u32 256, 8
  %424 = vbcast.lane.b32.xlu0 %v418, %s423
  %v425 = vpop.permute.xlu0 %424
  %v426 = vlaneseq
  %v427 = vshrl.u32 %v426, 7
  %v428 = vsub.s32 3, %v427
  %v429 = vrot.slane %v391, %v428
  %431 = vbcast.lane.b32.xlu0 %v429, 256
  %v432 = vpop.permute.xlu0 %431
  %s434 = sor.u32 256, 8
  %435 = vbcast.lane.b32.xlu0 %v429, %s434
  %v436 = vpop.permute.xlu0 %435
  %v437 = vlaneseq
  %v438 = vshrl.u32 %v437, 7
  %v439 = vsub.s32 4, %v438
  %v440 = vrot.slane %v391, %v439
  %442 = vbcast.lane.b32.xlu0 %v440, 256
  %v443 = vpop.permute.xlu0 %442
  %s445 = sor.u32 256, 8
  %446 = vbcast.lane.b32.xlu0 %v440, %s445
  %v447 = vpop.permute.xlu0 %446
  %v448 = vlaneseq
  %v449 = vshrl.u32 %v448, 7
  %v450 = vsub.s32 5, %v449
  %v451 = vrot.slane %v391, %v450
  %453 = vbcast.lane.b32.xlu0 %v451, 256
  %v454 = vpop.permute.xlu0 %453
  %s456 = sor.u32 256, 8
  %457 = vbcast.lane.b32.xlu0 %v451, %s456
  %v458 = vpop.permute.xlu0 %457
  %v459 = vlaneseq
  %v460 = vshrl.u32 %v459, 7
  %v461 = vsub.s32 6, %v460
  %v462 = vrot.slane %v391, %v461
  %464 = vbcast.lane.b32.xlu0 %v462, 256
  %v465 = vpop.permute.xlu0 %464
  %s467 = sor.u32 256, 8
  %468 = vbcast.lane.b32.xlu0 %v462, %s467
  %v469 = vpop.permute.xlu0 %468
  %v470 = vlaneseq
  %v471 = vshrl.u32 %v470, 7
  %v472 = vsub.s32 7, %v471
  %v473 = vrot.slane %v391, %v472
  %475 = vbcast.lane.b32.xlu0 %v473, 256
  %v476 = vpop.permute.xlu0 %475
  %s478 = sor.u32 256, 8
  %479 = vbcast.lane.b32.xlu0 %v473, %s478
  %v480 = vpop.permute.xlu0 %479
  %v481 = vlaneseq
  %v482 = vshrl.u32 %v481, 7
  %v483 = vsub.s32 0, %v482
  %v484 = vrot.slane %v392, %v483
  %486 = vbcast.lane.b32.xlu0 %v484, 256
  %v487 = vpop.permute.xlu0 %486
  %s489 = sor.u32 256, 8
  %490 = vbcast.lane.b32.xlu0 %v484, %s489
  %v491 = vpop.permute.xlu0 %490
  %v492 = vlaneseq
  %v493 = vshrl.u32 %v492, 7
  %v494 = vsub.s32 1, %v493
  %v495 = vrot.slane %v392, %v494
  %497 = vbcast.lane.b32.xlu0 %v495, 256
  %v498 = vpop.permute.xlu0 %497
  %s500 = sor.u32 256, 8
  %501 = vbcast.lane.b32.xlu0 %v495, %s500
  %v502 = vpop.permute.xlu0 %501
  %v503 = vlaneseq
  %v504 = vshrl.u32 %v503, 7
  %v505 = vsub.s32 2, %v504
  %v506 = vrot.slane %v392, %v505
  %508 = vbcast.lane.b32.xlu0 %v506, 256
  %v509 = vpop.permute.xlu0 %508
  %s511 = sor.u32 256, 8
  %512 = vbcast.lane.b32.xlu0 %v506, %s511
  %v513 = vpop.permute.xlu0 %512
  %v514 = vlaneseq
  %v515 = vshrl.u32 %v514, 7
  %v516 = vsub.s32 3, %v515
  %v517 = vrot.slane %v392, %v516
  %519 = vbcast.lane.b32.xlu0 %v517, 256
  %v520 = vpop.permute.xlu0 %519
  %s522 = sor.u32 256, 8
  %523 = vbcast.lane.b32.xlu0 %v517, %s522
  %v524 = vpop.permute.xlu0 %523
  %v525 = vlaneseq
  %v526 = vshrl.u32 %v525, 7
  %v527 = vsub.s32 4, %v526
  %v528 = vrot.slane %v392, %v527
  %530 = vbcast.lane.b32.xlu0 %v528, 256
  %v531 = vpop.permute.xlu0 %530
  %s533 = sor.u32 256, 8
  %534 = vbcast.lane.b32.xlu0 %v528, %s533
  %v535 = vpop.permute.xlu0 %534
  %v536 = vlaneseq
  %v537 = vshrl.u32 %v536, 7
  %v538 = vsub.s32 5, %v537
  %v539 = vrot.slane %v392, %v538
  %541 = vbcast.lane.b32.xlu0 %v539, 256
  %v542 = vpop.permute.xlu0 %541
  %s544 = sor.u32 256, 8
  %545 = vbcast.lane.b32.xlu0 %v539, %s544
  %v546 = vpop.permute.xlu0 %545
  %v547 = vlaneseq
  %v548 = vshrl.u32 %v547, 7
  %v549 = vsub.s32 6, %v548
  %v550 = vrot.slane %v392, %v549
  %552 = vbcast.lane.b32.xlu0 %v550, 256
  %v553 = vpop.permute.xlu0 %552
  %s555 = sor.u32 256, 8
  %556 = vbcast.lane.b32.xlu0 %v550, %s555
  %v557 = vpop.permute.xlu0 %556
  %v558 = vlaneseq
  %v559 = vshrl.u32 %v558, 7
  %v560 = vsub.s32 7, %v559
  %v561 = vrot.slane %v392, %v560
  %563 = vbcast.lane.b32.xlu0 %v561, 256
  %v564 = vpop.permute.xlu0 %563
  %s566 = sor.u32 256, 8
  %567 = vbcast.lane.b32.xlu0 %v561, %s566
  %v568 = vpop.permute.xlu0 %567
  %v569 = vadd.f32 %v274, %v399
  %v570 = vadd.f32 %v275, %v403
  %v571 = vadd.f32 %v276, %v410
  %v572 = vadd.f32 %v277, %v414
  %v573 = vadd.f32 %v278, %v421
  %v574 = vadd.f32 %v279, %v425
  %v575 = vadd.f32 %v280, %v432
  %v576 = vadd.f32 %v281, %v436
  %v577 = vadd.f32 %v282, %v443
  %v578 = vadd.f32 %v283, %v447
  %v579 = vadd.f32 %v284, %v454
  %v580 = vadd.f32 %v285, %v458
  %v581 = vadd.f32 %v286, %v465
  %v582 = vadd.f32 %v287, %v469
  %v583 = vadd.f32 %v288, %v476
  %v584 = vadd.f32 %v289, %v480
  %v585 = vadd.f32 %v274, %v487
  %v586 = vadd.f32 %v275, %v491
  %v587 = vadd.f32 %v276, %v498
  %v588 = vadd.f32 %v277, %v502
  %v589 = vadd.f32 %v278, %v509
  %v590 = vadd.f32 %v279, %v513
  %v591 = vadd.f32 %v280, %v520
  %v592 = vadd.f32 %v281, %v524
  %v593 = vadd.f32 %v282, %v531
  %v594 = vadd.f32 %v283, %v535
  %v595 = vadd.f32 %v284, %v542
  %v596 = vadd.f32 %v285, %v546
  %v597 = vadd.f32 %v286, %v553
  %v598 = vadd.f32 %v287, %v557
  %v599 = vadd.f32 %v288, %v564
  %v600 = vadd.f32 %v289, %v568
  %v601 = vtanh.pop %v569
  %v602 = vtanh.pop %v570
  %v603 = vtanh.pop %v571
  %v604 = vtanh.pop %v572
  %v605 = vtanh.pop %v573
  %v606 = vtanh.pop %v574
  %v607 = vtanh.pop %v575
  %v608 = vtanh.pop %v576
  %v609 = vtanh.pop %v577
  %v610 = vtanh.pop %v578
  %v611 = vtanh.pop %v579
  %v612 = vtanh.pop %v580
  %v613 = vtanh.pop %v581
  %v614 = vtanh.pop %v582
  %v615 = vtanh.pop %v583
  %v616 = vtanh.pop %v584
  %v617 = vtanh.pop %v585
  %v618 = vtanh.pop %v586
  %v619 = vtanh.pop %v587
  %v620 = vtanh.pop %v588
  %v621 = vtanh.pop %v589
  %v622 = vtanh.pop %v590
  %v623 = vtanh.pop %v591
  %v624 = vtanh.pop %v592
  %v625 = vtanh.pop %v593
  %v626 = vtanh.pop %v594
  %v627 = vtanh.pop %v595
  %v628 = vtanh.pop %v596
  %v629 = vtanh.pop %v597
  %v630 = vtanh.pop %v598
  %v631 = vtanh.pop %v599
  %v632 = vtanh.pop %v600
  %v633 = vlaneseq
  %v634 = vshrl.u32 %v633, 7
  %v635 = vsub.s32 1, %v634
  %v636 = vrot.slane %v49, %v635
  %v637 = vmul.f32 %v601, %v636
  %v638 = vmul.f32 %v602, %v636
  %v639 = vmul.f32 %v603, %v636
  %v640 = vmul.f32 %v604, %v636
  %v641 = vmul.f32 %v605, %v636
  %v642 = vmul.f32 %v606, %v636
  %v643 = vmul.f32 %v607, %v636
  %v644 = vmul.f32 %v608, %v636
  %v645 = vmul.f32 %v609, %v636
  %v646 = vmul.f32 %v610, %v636
  %v647 = vmul.f32 %v611, %v636
  %v648 = vmul.f32 %v612, %v636
  %v649 = vmul.f32 %v613, %v636
  %v650 = vmul.f32 %v614, %v636
  %v651 = vmul.f32 %v615, %v636
  %v652 = vmul.f32 %v616, %v636
  %v653 = vmul.f32 %v617, %v636
  %v654 = vmul.f32 %v618, %v636
  %v655 = vmul.f32 %v619, %v636
  %v656 = vmul.f32 %v620, %v636
  %v657 = vmul.f32 %v621, %v636
  %v658 = vmul.f32 %v622, %v636
  %v659 = vmul.f32 %v623, %v636
  %v660 = vmul.f32 %v624, %v636
  %v661 = vmul.f32 %v625, %v636
  %v662 = vmul.f32 %v626, %v636
  %v663 = vmul.f32 %v627, %v636
  %v664 = vmul.f32 %v628, %v636
  %v665 = vmul.f32 %v629, %v636
  %v666 = vmul.f32 %v630, %v636
  %v667 = vmul.f32 %v631, %v636
  %v668 = vmul.f32 %v632, %v636
  %vm669 = vcmask 130048
  %v670 = vsel %vm669, %v637, 0.0
  %671 = vadd.xlane.f32.xlu0 %v670
  %v672 = vpop.xlane.xlu0 %671
  %v673 = vsel %vm669, %v638, 0.0
  %674 = vadd.xlane.f32.xlu0 %v673
  %v675 = vpop.xlane.xlu0 %674
  %v676 = vsel %vm669, %v639, 0.0
  %677 = vadd.xlane.f32.xlu0 %v676
  %v678 = vpop.xlane.xlu0 %677
  %v679 = vsel %vm669, %v640, 0.0
  %680 = vadd.xlane.f32.xlu0 %v679
  %v681 = vpop.xlane.xlu0 %680
  %v682 = vsel %vm669, %v641, 0.0
  %683 = vadd.xlane.f32.xlu0 %v682
  %v684 = vpop.xlane.xlu0 %683
  %v685 = vsel %vm669, %v642, 0.0
  %686 = vadd.xlane.f32.xlu0 %v685
  %v687 = vpop.xlane.xlu0 %686
  %v688 = vsel %vm669, %v643, 0.0
  %689 = vadd.xlane.f32.xlu0 %v688
  %v690 = vpop.xlane.xlu0 %689
  %v691 = vsel %vm669, %v644, 0.0
  %692 = vadd.xlane.f32.xlu0 %v691
  %v693 = vpop.xlane.xlu0 %692
  %v694 = vsel %vm669, %v645, 0.0
  %695 = vadd.xlane.f32.xlu0 %v694
  %v696 = vpop.xlane.xlu0 %695
  %v697 = vsel %vm669, %v646, 0.0
  %698 = vadd.xlane.f32.xlu0 %v697
  %v699 = vpop.xlane.xlu0 %698
  %v700 = vsel %vm669, %v647, 0.0
  %701 = vadd.xlane.f32.xlu0 %v700
  %v702 = vpop.xlane.xlu0 %701
  %v703 = vsel %vm669, %v648, 0.0
  %704 = vadd.xlane.f32.xlu0 %v703
  %v705 = vpop.xlane.xlu0 %704
  %v706 = vsel %vm669, %v649, 0.0
  %707 = vadd.xlane.f32.xlu0 %v706
  %v708 = vpop.xlane.xlu0 %707
  %v709 = vsel %vm669, %v650, 0.0
  %710 = vadd.xlane.f32.xlu0 %v709
  %v711 = vpop.xlane.xlu0 %710
  %v712 = vsel %vm669, %v651, 0.0
  %713 = vadd.xlane.f32.xlu0 %v712
  %v714 = vpop.xlane.xlu0 %713
  %v715 = vsel %vm669, %v652, 0.0
  %716 = vadd.xlane.f32.xlu0 %v715
  %v717 = vpop.xlane.xlu0 %716
  %v718 = vsel %vm669, %v653, 0.0
  %719 = vadd.xlane.f32.xlu0 %v718
  %v720 = vpop.xlane.xlu0 %719
  %v721 = vsel %vm669, %v654, 0.0
  %722 = vadd.xlane.f32.xlu0 %v721
  %v723 = vpop.xlane.xlu0 %722
  %v724 = vsel %vm669, %v655, 0.0
  %725 = vadd.xlane.f32.xlu0 %v724
  %v726 = vpop.xlane.xlu0 %725
  %v727 = vsel %vm669, %v656, 0.0
  %728 = vadd.xlane.f32.xlu0 %v727
  %v729 = vpop.xlane.xlu0 %728
  %v730 = vsel %vm669, %v657, 0.0
  %731 = vadd.xlane.f32.xlu0 %v730
  %v732 = vpop.xlane.xlu0 %731
  %v733 = vsel %vm669, %v658, 0.0
  %734 = vadd.xlane.f32.xlu0 %v733
  %v735 = vpop.xlane.xlu0 %734
  %v736 = vsel %vm669, %v659, 0.0
  %737 = vadd.xlane.f32.xlu0 %v736
  %v738 = vpop.xlane.xlu0 %737
  %v739 = vsel %vm669, %v660, 0.0
  %740 = vadd.xlane.f32.xlu0 %v739
  %v741 = vpop.xlane.xlu0 %740
  %v742 = vsel %vm669, %v661, 0.0
  %743 = vadd.xlane.f32.xlu0 %v742
  %v744 = vpop.xlane.xlu0 %743
  %v745 = vsel %vm669, %v662, 0.0
  %746 = vadd.xlane.f32.xlu0 %v745
  %v747 = vpop.xlane.xlu0 %746
  %v748 = vsel %vm669, %v663, 0.0
  %749 = vadd.xlane.f32.xlu0 %v748
  %v750 = vpop.xlane.xlu0 %749
  %v751 = vsel %vm669, %v664, 0.0
  %752 = vadd.xlane.f32.xlu0 %v751
  %v753 = vpop.xlane.xlu0 %752
  %v754 = vsel %vm669, %v665, 0.0
  %755 = vadd.xlane.f32.xlu0 %v754
  %v756 = vpop.xlane.xlu0 %755
  %v757 = vsel %vm669, %v666, 0.0
  %758 = vadd.xlane.f32.xlu0 %v757
  %v759 = vpop.xlane.xlu0 %758
  %v760 = vsel %vm669, %v667, 0.0
  %761 = vadd.xlane.f32.xlu0 %v760
  %v762 = vpop.xlane.xlu0 %761
  %v763 = vsel %vm669, %v668, 0.0
  %764 = vadd.xlane.f32.xlu0 %v763
  %v765 = vpop.xlane.xlu0 %764
  %v767 = vrot.slane %v49, 2
  %s768 = vtos %v767
  %v769 = vstv %s768
  %v771 = vadd.f32 %v672, %v769
  %v772 = vadd.f32 %v675, %v769
  %v773 = vadd.f32 %v678, %v769
  %v774 = vadd.f32 %v681, %v769
  %v775 = vadd.f32 %v684, %v769
  %v776 = vadd.f32 %v687, %v769
  %v777 = vadd.f32 %v690, %v769
  %v778 = vadd.f32 %v693, %v769
  %v779 = vadd.f32 %v696, %v769
  %v780 = vadd.f32 %v699, %v769
  %v781 = vadd.f32 %v702, %v769
  %v782 = vadd.f32 %v705, %v769
  %v783 = vadd.f32 %v708, %v769
  %v784 = vadd.f32 %v711, %v769
  %v785 = vadd.f32 %v714, %v769
  %v786 = vadd.f32 %v717, %v769
  %v787 = vadd.f32 %v720, %v769
  %v788 = vadd.f32 %v723, %v769
  %v789 = vadd.f32 %v726, %v769
  %v790 = vadd.f32 %v729, %v769
  %v791 = vadd.f32 %v732, %v769
  %v792 = vadd.f32 %v735, %v769
  %v793 = vadd.f32 %v738, %v769
  %v794 = vadd.f32 %v741, %v769
  %v795 = vadd.f32 %v744, %v769
  %v796 = vadd.f32 %v747, %v769
  %v797 = vadd.f32 %v750, %v769
  %v798 = vadd.f32 %v753, %v769
  %v799 = vadd.f32 %v756, %v769
  %v800 = vadd.f32 %v759, %v769
  %v801 = vadd.f32 %v762, %v769
  %v802 = vadd.f32 %v765, %v769
  %v803 = vmax.f32 %v771, 0.0
  %v804 = vmax.f32 %v772, 0.0
  %v805 = vmax.f32 %v773, 0.0
  %v806 = vmax.f32 %v774, 0.0
  %v807 = vmax.f32 %v775, 0.0
  %v808 = vmax.f32 %v776, 0.0
  %v809 = vmax.f32 %v777, 0.0
  %v810 = vmax.f32 %v778, 0.0
  %v811 = vmax.f32 %v779, 0.0
  %v812 = vmax.f32 %v780, 0.0
  %v813 = vmax.f32 %v781, 0.0
  %v814 = vmax.f32 %v782, 0.0
  %v815 = vmax.f32 %v783, 0.0
  %v816 = vmax.f32 %v784, 0.0
  %v817 = vmax.f32 %v785, 0.0
  %v818 = vmax.f32 %v786, 0.0
  %v819 = vmax.f32 %v787, 0.0
  %v820 = vmax.f32 %v788, 0.0
  %v821 = vmax.f32 %v789, 0.0
  %v822 = vmax.f32 %v790, 0.0
  %v823 = vmax.f32 %v791, 0.0
  %v824 = vmax.f32 %v792, 0.0
  %v825 = vmax.f32 %v793, 0.0
  %v826 = vmax.f32 %v794, 0.0
  %v827 = vmax.f32 %v795, 0.0
  %v828 = vmax.f32 %v796, 0.0
  %v829 = vmax.f32 %v797, 0.0
  %v830 = vmax.f32 %v798, 0.0
  %v831 = vmax.f32 %v799, 0.0
  %v832 = vmax.f32 %v800, 0.0
  %v833 = vmax.f32 %v801, 0.0
  %v834 = vmax.f32 %v802, 0.0
  %v867 = vlaneseq
  %v868 = vand.u32 %v867, 127
  %v869 = vlaneseq
  %v870 = vshrl.u32 %v869, 7
  %v871 = vsub.s32 %v868, %v870
  %v872 = vrot.slane %v803, %v871
  %v873 = vadd.s32 %v868, 4294967288
  %v874 = vlaneseq
  %v875 = vshrl.u32 %v874, 7
  %v876 = vsub.s32 %v873, %v875
  %v877 = vrot.slane %v804, %v876
  %vm878 = vcmask 130112
  %v879 = vsel %vm878, %v877, %v872
  %v880 = vlaneseq
  %v881 = vshrl.u32 %v880, 7
  %v882 = vsub.s32 %v868, %v881
  %v883 = vrot.slane %v805, %v882
  %v884 = vlaneseq
  %v885 = vshrl.u32 %v884, 7
  %v886 = vsub.s32 %v873, %v885
  %v887 = vrot.slane %v806, %v886
  %v888 = vsel %vm878, %v887, %v883
  %v889 = vlaneseq
  %v890 = vshrl.u32 %v889, 7
  %v891 = vsub.s32 %v868, %v890
  %v892 = vrot.slane %v807, %v891
  %v893 = vlaneseq
  %v894 = vshrl.u32 %v893, 7
  %v895 = vsub.s32 %v873, %v894
  %v896 = vrot.slane %v808, %v895
  %v897 = vsel %vm878, %v896, %v892
  %v898 = vlaneseq
  %v899 = vshrl.u32 %v898, 7
  %v900 = vsub.s32 %v868, %v899
  %v901 = vrot.slane %v809, %v900
  %v902 = vlaneseq
  %v903 = vshrl.u32 %v902, 7
  %v904 = vsub.s32 %v873, %v903
  %v905 = vrot.slane %v810, %v904
  %v906 = vsel %vm878, %v905, %v901
  %v907 = vlaneseq
  %v908 = vshrl.u32 %v907, 7
  %v909 = vsub.s32 %v868, %v908
  %v910 = vrot.slane %v811, %v909
  %v911 = vlaneseq
  %v912 = vshrl.u32 %v911, 7
  %v913 = vsub.s32 %v873, %v912
  %v914 = vrot.slane %v812, %v913
  %v915 = vsel %vm878, %v914, %v910
  %v916 = vlaneseq
  %v917 = vshrl.u32 %v916, 7
  %v918 = vsub.s32 %v868, %v917
  %v919 = vrot.slane %v813, %v918
  %v920 = vlaneseq
  %v921 = vshrl.u32 %v920, 7
  %v922 = vsub.s32 %v873, %v921
  %v923 = vrot.slane %v814, %v922
  %v924 = vsel %vm878, %v923, %v919
  %v925 = vlaneseq
  %v926 = vshrl.u32 %v925, 7
  %v927 = vsub.s32 %v868, %v926
  %v928 = vrot.slane %v815, %v927
  %v929 = vlaneseq
  %v930 = vshrl.u32 %v929, 7
  %v931 = vsub.s32 %v873, %v930
  %v932 = vrot.slane %v816, %v931
  %v933 = vsel %vm878, %v932, %v928
  %v934 = vlaneseq
  %v935 = vshrl.u32 %v934, 7
  %v936 = vsub.s32 %v868, %v935
  %v937 = vrot.slane %v817, %v936
  %v938 = vlaneseq
  %v939 = vshrl.u32 %v938, 7
  %v940 = vsub.s32 %v873, %v939
  %v941 = vrot.slane %v818, %v940
  %v942 = vsel %vm878, %v941, %v937
  %v943 = vlaneseq
  %v944 = vshrl.u32 %v943, 7
  %v945 = vsub.s32 %v868, %v944
  %v946 = vrot.slane %v819, %v945
  %v947 = vlaneseq
  %v948 = vshrl.u32 %v947, 7
  %v949 = vsub.s32 %v873, %v948
  %v950 = vrot.slane %v820, %v949
  %v951 = vsel %vm878, %v950, %v946
  %v952 = vlaneseq
  %v953 = vshrl.u32 %v952, 7
  %v954 = vsub.s32 %v868, %v953
  %v955 = vrot.slane %v821, %v954
  %v956 = vlaneseq
  %v957 = vshrl.u32 %v956, 7
  %v958 = vsub.s32 %v873, %v957
  %v959 = vrot.slane %v822, %v958
  %v960 = vsel %vm878, %v959, %v955
  %v961 = vlaneseq
  %v962 = vshrl.u32 %v961, 7
  %v963 = vsub.s32 %v868, %v962
  %v964 = vrot.slane %v823, %v963
  %v965 = vlaneseq
  %v966 = vshrl.u32 %v965, 7
  %v967 = vsub.s32 %v873, %v966
  %v968 = vrot.slane %v824, %v967
  %v969 = vsel %vm878, %v968, %v964
  %v970 = vlaneseq
  %v971 = vshrl.u32 %v970, 7
  %v972 = vsub.s32 %v868, %v971
  %v973 = vrot.slane %v825, %v972
  %v974 = vlaneseq
  %v975 = vshrl.u32 %v974, 7
  %v976 = vsub.s32 %v873, %v975
  %v977 = vrot.slane %v826, %v976
  %v978 = vsel %vm878, %v977, %v973
  %v979 = vlaneseq
  %v980 = vshrl.u32 %v979, 7
  %v981 = vsub.s32 %v868, %v980
  %v982 = vrot.slane %v827, %v981
  %v983 = vlaneseq
  %v984 = vshrl.u32 %v983, 7
  %v985 = vsub.s32 %v873, %v984
  %v986 = vrot.slane %v828, %v985
  %v987 = vsel %vm878, %v986, %v982
  %v988 = vlaneseq
  %v989 = vshrl.u32 %v988, 7
  %v990 = vsub.s32 %v868, %v989
  %v991 = vrot.slane %v829, %v990
  %v992 = vlaneseq
  %v993 = vshrl.u32 %v992, 7
  %v994 = vsub.s32 %v873, %v993
  %v995 = vrot.slane %v830, %v994
  %v996 = vsel %vm878, %v995, %v991
  %v997 = vlaneseq
  %v998 = vshrl.u32 %v997, 7
  %v999 = vsub.s32 %v868, %v998
  %v1000 = vrot.slane %v831, %v999
  %v1001 = vlaneseq
  %v1002 = vshrl.u32 %v1001, 7
  %v1003 = vsub.s32 %v873, %v1002
  %v1004 = vrot.slane %v832, %v1003
  %v1005 = vsel %vm878, %v1004, %v1000
  %v1006 = vlaneseq
  %v1007 = vshrl.u32 %v1006, 7
  %v1008 = vsub.s32 %v868, %v1007
  %v1009 = vrot.slane %v833, %v1008
  %v1010 = vlaneseq
  %v1011 = vshrl.u32 %v1010, 7
  %v1012 = vsub.s32 %v873, %v1011
  %v1013 = vrot.slane %v834, %v1012
  %v1014 = vsel %vm878, %v1013, %v1009
  %vm1015 = vcmask 1041409
  %v1016 = vsel %vm1015, %v888, %v879
  %vm1017 = vcmask 1042434
  %v1018 = vsel %vm1017, %v897, %v1016
  %vm1019 = vcmask 1043459
  %v1020 = vsel %vm1019, %v906, %v1018
  %vm1021 = vcmask 1044484
  %v1022 = vsel %vm1021, %v915, %v1020
  %vm1023 = vcmask 1045509
  %v1024 = vsel %vm1023, %v924, %v1022
  %vm1025 = vcmask 1046534
  %v1026 = vsel %vm1025, %v933, %v1024
  %vm1027 = vcmask 1047559
  %v1028 = vsel %vm1027, %v942, %v1026
  %v1029 = vsel %vm1015, %v960, %v951
  %v1030 = vsel %vm1017, %v969, %v1029
  %v1031 = vsel %vm1019, %v978, %v1030
  %v1032 = vsel %vm1021, %v987, %v1031
  %v1033 = vsel %vm1023, %v996, %v1032
  %v1034 = vsel %vm1025, %v1005, %v1033
  %v1035 = vsel %vm1027, %v1014, %v1034
  %v1038 = vsel %vm669, %v1028, -inf
  %1039 = vmax.xlane.f32.xlu0 %v1038
  %v1040 = vpop.xlane.xlu0 %1039
  %v1041 = vsel %vm669, %v1035, -inf
  %1042 = vmax.xlane.f32.xlu0 %v1041
  %v1043 = vpop.xlane.xlu0 %1042
  %v1046 = vlaneseq
  %v1047 = vshrl.u32 %v1046, 7
  %v1048 = vsub.s32 0, %v1047
  %v1049 = vrot.slane %v1040, %v1048
  %v1050 = vlaneseq
  %v1051 = vshrl.u32 %v1050, 7
  %v1052 = vsub.s32 1, %v1051
  %v1053 = vrot.slane %v1040, %v1052
  %v1054 = vlaneseq
  %v1055 = vshrl.u32 %v1054, 7
  %v1056 = vsub.s32 2, %v1055
  %v1057 = vrot.slane %v1040, %v1056
  %v1058 = vlaneseq
  %v1059 = vshrl.u32 %v1058, 7
  %v1060 = vsub.s32 3, %v1059
  %v1061 = vrot.slane %v1040, %v1060
  %v1062 = vlaneseq
  %v1063 = vshrl.u32 %v1062, 7
  %v1064 = vsub.s32 4, %v1063
  %v1065 = vrot.slane %v1040, %v1064
  %v1066 = vlaneseq
  %v1067 = vshrl.u32 %v1066, 7
  %v1068 = vsub.s32 5, %v1067
  %v1069 = vrot.slane %v1040, %v1068
  %v1070 = vlaneseq
  %v1071 = vshrl.u32 %v1070, 7
  %v1072 = vsub.s32 6, %v1071
  %v1073 = vrot.slane %v1040, %v1072
  %v1074 = vlaneseq
  %v1075 = vshrl.u32 %v1074, 7
  %v1076 = vsub.s32 7, %v1075
  %v1077 = vrot.slane %v1040, %v1076
  %v1078 = vlaneseq
  %v1079 = vshrl.u32 %v1078, 7
  %v1080 = vsub.s32 0, %v1079
  %v1081 = vrot.slane %v1043, %v1080
  %v1082 = vlaneseq
  %v1083 = vshrl.u32 %v1082, 7
  %v1084 = vsub.s32 1, %v1083
  %v1085 = vrot.slane %v1043, %v1084
  %v1086 = vlaneseq
  %v1087 = vshrl.u32 %v1086, 7
  %v1088 = vsub.s32 2, %v1087
  %v1089 = vrot.slane %v1043, %v1088
  %v1090 = vlaneseq
  %v1091 = vshrl.u32 %v1090, 7
  %v1092 = vsub.s32 3, %v1091
  %v1093 = vrot.slane %v1043, %v1092
  %v1094 = vlaneseq
  %v1095 = vshrl.u32 %v1094, 7
  %v1096 = vsub.s32 4, %v1095
  %v1097 = vrot.slane %v1043, %v1096
  %v1098 = vlaneseq
  %v1099 = vshrl.u32 %v1098, 7
  %v1100 = vsub.s32 5, %v1099
  %v1101 = vrot.slane %v1043, %v1100
  %v1102 = vlaneseq
  %v1103 = vshrl.u32 %v1102, 7
  %v1104 = vsub.s32 6, %v1103
  %v1105 = vrot.slane %v1043, %v1104
  %v1106 = vlaneseq
  %v1107 = vshrl.u32 %v1106, 7
  %v1108 = vsub.s32 7, %v1107
  %v1109 = vrot.slane %v1043, %v1108
  %v1126 = vsub.f32 %v803, %v1049
  %v1127 = vsub.f32 %v804, %v1049
  %v1128 = vsub.f32 %v805, %v1053
  %v1129 = vsub.f32 %v806, %v1053
  %v1130 = vsub.f32 %v807, %v1057
  %v1131 = vsub.f32 %v808, %v1057
  %v1132 = vsub.f32 %v809, %v1061
  %v1133 = vsub.f32 %v810, %v1061
  %v1134 = vsub.f32 %v811, %v1065
  %v1135 = vsub.f32 %v812, %v1065
  %v1136 = vsub.f32 %v813, %v1069
  %v1137 = vsub.f32 %v814, %v1069
  %v1138 = vsub.f32 %v815, %v1073
  %v1139 = vsub.f32 %v816, %v1073
  %v1140 = vsub.f32 %v817, %v1077
  %v1141 = vsub.f32 %v818, %v1077
  %v1142 = vsub.f32 %v819, %v1081
  %v1143 = vsub.f32 %v820, %v1081
  %v1144 = vsub.f32 %v821, %v1085
  %v1145 = vsub.f32 %v822, %v1085
  %v1146 = vsub.f32 %v823, %v1089
  %v1147 = vsub.f32 %v824, %v1089
  %v1148 = vsub.f32 %v825, %v1093
  %v1149 = vsub.f32 %v826, %v1093
  %v1150 = vsub.f32 %v827, %v1097
  %v1151 = vsub.f32 %v828, %v1097
  %v1152 = vsub.f32 %v829, %v1101
  %v1153 = vsub.f32 %v830, %v1101
  %v1154 = vsub.f32 %v831, %v1105
  %v1155 = vsub.f32 %v832, %v1105
  %v1156 = vsub.f32 %v833, %v1109
  %v1157 = vsub.f32 %v834, %v1109
  %v1158 = vmul.f32 %v1126, 1.442695
  %v1159 = vpow.pop %v1158
  %v1160 = vmul.f32 %v1127, 1.442695
  %v1161 = vpow.pop %v1160
  %v1162 = vmul.f32 %v1128, 1.442695
  %v1163 = vpow.pop %v1162
  %v1164 = vmul.f32 %v1129, 1.442695
  %v1165 = vpow.pop %v1164
  %v1166 = vmul.f32 %v1130, 1.442695
  %v1167 = vpow.pop %v1166
  %v1168 = vmul.f32 %v1131, 1.442695
  %v1169 = vpow.pop %v1168
  %v1170 = vmul.f32 %v1132, 1.442695
  %v1171 = vpow.pop %v1170
  %v1172 = vmul.f32 %v1133, 1.442695
  %v1173 = vpow.pop %v1172
  %v1174 = vmul.f32 %v1134, 1.442695
  %v1175 = vpow.pop %v1174
  %v1176 = vmul.f32 %v1135, 1.442695
  %v1177 = vpow.pop %v1176
  %v1178 = vmul.f32 %v1136, 1.442695
  %v1179 = vpow.pop %v1178
  %v1180 = vmul.f32 %v1137, 1.442695
  %v1181 = vpow.pop %v1180
  %v1182 = vmul.f32 %v1138, 1.442695
  %v1183 = vpow.pop %v1182
  %v1184 = vmul.f32 %v1139, 1.442695
  %v1185 = vpow.pop %v1184
  %v1186 = vmul.f32 %v1140, 1.442695
  %v1187 = vpow.pop %v1186
  %v1188 = vmul.f32 %v1141, 1.442695
  %v1189 = vpow.pop %v1188
  %v1190 = vmul.f32 %v1142, 1.442695
  %v1191 = vpow.pop %v1190
  %v1192 = vmul.f32 %v1143, 1.442695
  %v1193 = vpow.pop %v1192
  %v1194 = vmul.f32 %v1144, 1.442695
  %v1195 = vpow.pop %v1194
  %v1196 = vmul.f32 %v1145, 1.442695
  %v1197 = vpow.pop %v1196
  %v1198 = vmul.f32 %v1146, 1.442695
  %v1199 = vpow.pop %v1198
  %v1200 = vmul.f32 %v1147, 1.442695
  %v1201 = vpow.pop %v1200
  %v1202 = vmul.f32 %v1148, 1.442695
  %v1203 = vpow.pop %v1202
  %v1204 = vmul.f32 %v1149, 1.442695
  %v1205 = vpow.pop %v1204
  %v1206 = vmul.f32 %v1150, 1.442695
  %v1207 = vpow.pop %v1206
  %v1208 = vmul.f32 %v1151, 1.442695
  %v1209 = vpow.pop %v1208
  %v1210 = vmul.f32 %v1152, 1.442695
  %v1211 = vpow.pop %v1210
  %v1212 = vmul.f32 %v1153, 1.442695
  %v1213 = vpow.pop %v1212
  %v1214 = vmul.f32 %v1154, 1.442695
  %v1215 = vpow.pop %v1214
  %v1216 = vmul.f32 %v1155, 1.442695
  %v1217 = vpow.pop %v1216
  %v1218 = vmul.f32 %v1156, 1.442695
  %v1219 = vpow.pop %v1218
  %v1220 = vmul.f32 %v1157, 1.442695
  %v1221 = vpow.pop %v1220
  %1254 = vset.pattern.permute.xlu0 0
  %1255 = vperm.xlu0 %1254, %v1159
  %v1256 = vpop.permute.xlu0 %1255
  %1257 = vset.pattern.permute.xlu0 0
  %1258 = vperm.xlu0 %1257, %v1161
  %v1259 = vpop.permute.xlu0 %1258
  %1260 = vset.pattern.permute.xlu0 0
  %1261 = vperm.xlu0 %1260, %v1163
  %v1262 = vpop.permute.xlu0 %1261
  %1263 = vset.pattern.permute.xlu0 0
  %1264 = vperm.xlu0 %1263, %v1165
  %v1265 = vpop.permute.xlu0 %1264
  %1266 = vset.pattern.permute.xlu0 0
  %1267 = vperm.xlu0 %1266, %v1167
  %v1268 = vpop.permute.xlu0 %1267
  %1269 = vset.pattern.permute.xlu0 0
  %1270 = vperm.xlu0 %1269, %v1169
  %v1271 = vpop.permute.xlu0 %1270
  %1272 = vset.pattern.permute.xlu0 0
  %1273 = vperm.xlu0 %1272, %v1171
  %v1274 = vpop.permute.xlu0 %1273
  %1275 = vset.pattern.permute.xlu0 0
  %1276 = vperm.xlu0 %1275, %v1173
  %v1277 = vpop.permute.xlu0 %1276
  %1278 = vset.pattern.permute.xlu0 0
  %1279 = vperm.xlu0 %1278, %v1175
  %v1280 = vpop.permute.xlu0 %1279
  %1281 = vset.pattern.permute.xlu0 0
  %1282 = vperm.xlu0 %1281, %v1177
  %v1283 = vpop.permute.xlu0 %1282
  %1284 = vset.pattern.permute.xlu0 0
  %1285 = vperm.xlu0 %1284, %v1179
  %v1286 = vpop.permute.xlu0 %1285
  %1287 = vset.pattern.permute.xlu0 0
  %1288 = vperm.xlu0 %1287, %v1181
  %v1289 = vpop.permute.xlu0 %1288
  %1290 = vset.pattern.permute.xlu0 0
  %1291 = vperm.xlu0 %1290, %v1183
  %v1292 = vpop.permute.xlu0 %1291
  %1293 = vset.pattern.permute.xlu0 0
  %1294 = vperm.xlu0 %1293, %v1185
  %v1295 = vpop.permute.xlu0 %1294
  %1296 = vset.pattern.permute.xlu0 0
  %1297 = vperm.xlu0 %1296, %v1187
  %v1298 = vpop.permute.xlu0 %1297
  %1299 = vset.pattern.permute.xlu0 0
  %1300 = vperm.xlu0 %1299, %v1189
  %v1301 = vpop.permute.xlu0 %1300
  %1302 = vset.pattern.permute.xlu0 0
  %1303 = vperm.xlu0 %1302, %v1191
  %v1304 = vpop.permute.xlu0 %1303
  %1305 = vset.pattern.permute.xlu0 0
  %1306 = vperm.xlu0 %1305, %v1193
  %v1307 = vpop.permute.xlu0 %1306
  %1308 = vset.pattern.permute.xlu0 0
  %1309 = vperm.xlu0 %1308, %v1195
  %v1310 = vpop.permute.xlu0 %1309
  %1311 = vset.pattern.permute.xlu0 0
  %1312 = vperm.xlu0 %1311, %v1197
  %v1313 = vpop.permute.xlu0 %1312
  %1314 = vset.pattern.permute.xlu0 0
  %1315 = vperm.xlu0 %1314, %v1199
  %v1316 = vpop.permute.xlu0 %1315
  %1317 = vset.pattern.permute.xlu0 0
  %1318 = vperm.xlu0 %1317, %v1201
  %v1319 = vpop.permute.xlu0 %1318
  %1320 = vset.pattern.permute.xlu0 0
  %1321 = vperm.xlu0 %1320, %v1203
  %v1322 = vpop.permute.xlu0 %1321
  %1323 = vset.pattern.permute.xlu0 0
  %1324 = vperm.xlu0 %1323, %v1205
  %v1325 = vpop.permute.xlu0 %1324
  %1326 = vset.pattern.permute.xlu0 0
  %1327 = vperm.xlu0 %1326, %v1207
  %v1328 = vpop.permute.xlu0 %1327
  %1329 = vset.pattern.permute.xlu0 0
  %1330 = vperm.xlu0 %1329, %v1209
  %v1331 = vpop.permute.xlu0 %1330
  %1332 = vset.pattern.permute.xlu0 0
  %1333 = vperm.xlu0 %1332, %v1211
  %v1334 = vpop.permute.xlu0 %1333
  %1335 = vset.pattern.permute.xlu0 0
  %1336 = vperm.xlu0 %1335, %v1213
  %v1337 = vpop.permute.xlu0 %1336
  %1338 = vset.pattern.permute.xlu0 0
  %1339 = vperm.xlu0 %1338, %v1215
  %v1340 = vpop.permute.xlu0 %1339
  %1341 = vset.pattern.permute.xlu0 0
  %1342 = vperm.xlu0 %1341, %v1217
  %v1343 = vpop.permute.xlu0 %1342
  %1344 = vset.pattern.permute.xlu0 0
  %1345 = vperm.xlu0 %1344, %v1219
  %v1346 = vpop.permute.xlu0 %1345
  %1347 = vset.pattern.permute.xlu0 0
  %1348 = vperm.xlu0 %1347, %v1221
  %v1349 = vpop.permute.xlu0 %1348
  %v1350 = vlaneseq
  %v1351 = vshrl.u32 %v1350, 7
  %v1352 = vsub.s32 %v868, %v1351
  %v1353 = vrot.slane %v1256, %v1352
  %v1354 = vlaneseq
  %v1355 = vshrl.u32 %v1354, 7
  %v1356 = vsub.s32 %v873, %v1355
  %v1357 = vrot.slane %v1259, %v1356
  %v1358 = vsel %vm878, %v1357, %v1353
  %v1359 = vlaneseq
  %v1360 = vshrl.u32 %v1359, 7
  %v1361 = vsub.s32 %v868, %v1360
  %v1362 = vrot.slane %v1262, %v1361
  %v1363 = vlaneseq
  %v1364 = vshrl.u32 %v1363, 7
  %v1365 = vsub.s32 %v873, %v1364
  %v1366 = vrot.slane %v1265, %v1365
  %v1367 = vsel %vm878, %v1366, %v1362
  %v1368 = vlaneseq
  %v1369 = vshrl.u32 %v1368, 7
  %v1370 = vsub.s32 %v868, %v1369
  %v1371 = vrot.slane %v1268, %v1370
  %v1372 = vlaneseq
  %v1373 = vshrl.u32 %v1372, 7
  %v1374 = vsub.s32 %v873, %v1373
  %v1375 = vrot.slane %v1271, %v1374
  %v1376 = vsel %vm878, %v1375, %v1371
  %v1377 = vlaneseq
  %v1378 = vshrl.u32 %v1377, 7
  %v1379 = vsub.s32 %v868, %v1378
  %v1380 = vrot.slane %v1274, %v1379
  %v1381 = vlaneseq
  %v1382 = vshrl.u32 %v1381, 7
  %v1383 = vsub.s32 %v873, %v1382
  %v1384 = vrot.slane %v1277, %v1383
  %v1385 = vsel %vm878, %v1384, %v1380
  %v1386 = vlaneseq
  %v1387 = vshrl.u32 %v1386, 7
  %v1388 = vsub.s32 %v868, %v1387
  %v1389 = vrot.slane %v1280, %v1388
  %v1390 = vlaneseq
  %v1391 = vshrl.u32 %v1390, 7
  %v1392 = vsub.s32 %v873, %v1391
  %v1393 = vrot.slane %v1283, %v1392
  %v1394 = vsel %vm878, %v1393, %v1389
  %v1395 = vlaneseq
  %v1396 = vshrl.u32 %v1395, 7
  %v1397 = vsub.s32 %v868, %v1396
  %v1398 = vrot.slane %v1286, %v1397
  %v1399 = vlaneseq
  %v1400 = vshrl.u32 %v1399, 7
  %v1401 = vsub.s32 %v873, %v1400
  %v1402 = vrot.slane %v1289, %v1401
  %v1403 = vsel %vm878, %v1402, %v1398
  %v1404 = vlaneseq
  %v1405 = vshrl.u32 %v1404, 7
  %v1406 = vsub.s32 %v868, %v1405
  %v1407 = vrot.slane %v1292, %v1406
  %v1408 = vlaneseq
  %v1409 = vshrl.u32 %v1408, 7
  %v1410 = vsub.s32 %v873, %v1409
  %v1411 = vrot.slane %v1295, %v1410
  %v1412 = vsel %vm878, %v1411, %v1407
  %v1413 = vlaneseq
  %v1414 = vshrl.u32 %v1413, 7
  %v1415 = vsub.s32 %v868, %v1414
  %v1416 = vrot.slane %v1298, %v1415
  %v1417 = vlaneseq
  %v1418 = vshrl.u32 %v1417, 7
  %v1419 = vsub.s32 %v873, %v1418
  %v1420 = vrot.slane %v1301, %v1419
  %v1421 = vsel %vm878, %v1420, %v1416
  %v1422 = vlaneseq
  %v1423 = vshrl.u32 %v1422, 7
  %v1424 = vsub.s32 %v868, %v1423
  %v1425 = vrot.slane %v1304, %v1424
  %v1426 = vlaneseq
  %v1427 = vshrl.u32 %v1426, 7
  %v1428 = vsub.s32 %v873, %v1427
  %v1429 = vrot.slane %v1307, %v1428
  %v1430 = vsel %vm878, %v1429, %v1425
  %v1431 = vlaneseq
  %v1432 = vshrl.u32 %v1431, 7
  %v1433 = vsub.s32 %v868, %v1432
  %v1434 = vrot.slane %v1310, %v1433
  %v1435 = vlaneseq
  %v1436 = vshrl.u32 %v1435, 7
  %v1437 = vsub.s32 %v873, %v1436
  %v1438 = vrot.slane %v1313, %v1437
  %v1439 = vsel %vm878, %v1438, %v1434
  %v1440 = vlaneseq
  %v1441 = vshrl.u32 %v1440, 7
  %v1442 = vsub.s32 %v868, %v1441
  %v1443 = vrot.slane %v1316, %v1442
  %v1444 = vlaneseq
  %v1445 = vshrl.u32 %v1444, 7
  %v1446 = vsub.s32 %v873, %v1445
  %v1447 = vrot.slane %v1319, %v1446
  %v1448 = vsel %vm878, %v1447, %v1443
  %v1449 = vlaneseq
  %v1450 = vshrl.u32 %v1449, 7
  %v1451 = vsub.s32 %v868, %v1450
  %v1452 = vrot.slane %v1322, %v1451
  %v1453 = vlaneseq
  %v1454 = vshrl.u32 %v1453, 7
  %v1455 = vsub.s32 %v873, %v1454
  %v1456 = vrot.slane %v1325, %v1455
  %v1457 = vsel %vm878, %v1456, %v1452
  %v1458 = vlaneseq
  %v1459 = vshrl.u32 %v1458, 7
  %v1460 = vsub.s32 %v868, %v1459
  %v1461 = vrot.slane %v1328, %v1460
  %v1462 = vlaneseq
  %v1463 = vshrl.u32 %v1462, 7
  %v1464 = vsub.s32 %v873, %v1463
  %v1465 = vrot.slane %v1331, %v1464
  %v1466 = vsel %vm878, %v1465, %v1461
  %v1467 = vlaneseq
  %v1468 = vshrl.u32 %v1467, 7
  %v1469 = vsub.s32 %v868, %v1468
  %v1470 = vrot.slane %v1334, %v1469
  %v1471 = vlaneseq
  %v1472 = vshrl.u32 %v1471, 7
  %v1473 = vsub.s32 %v873, %v1472
  %v1474 = vrot.slane %v1337, %v1473
  %v1475 = vsel %vm878, %v1474, %v1470
  %v1476 = vlaneseq
  %v1477 = vshrl.u32 %v1476, 7
  %v1478 = vsub.s32 %v868, %v1477
  %v1479 = vrot.slane %v1340, %v1478
  %v1480 = vlaneseq
  %v1481 = vshrl.u32 %v1480, 7
  %v1482 = vsub.s32 %v873, %v1481
  %v1483 = vrot.slane %v1343, %v1482
  %v1484 = vsel %vm878, %v1483, %v1479
  %v1485 = vlaneseq
  %v1486 = vshrl.u32 %v1485, 7
  %v1487 = vsub.s32 %v868, %v1486
  %v1488 = vrot.slane %v1346, %v1487
  %v1489 = vlaneseq
  %v1490 = vshrl.u32 %v1489, 7
  %v1491 = vsub.s32 %v873, %v1490
  %v1492 = vrot.slane %v1349, %v1491
  %v1493 = vsel %vm878, %v1492, %v1488
  %v1494 = vsel %vm1015, %v1367, %v1358
  %v1495 = vsel %vm1017, %v1376, %v1494
  %v1496 = vsel %vm1019, %v1385, %v1495
  %v1497 = vsel %vm1021, %v1394, %v1496
  %v1498 = vsel %vm1023, %v1403, %v1497
  %v1499 = vsel %vm1025, %v1412, %v1498
  %v1500 = vsel %vm1027, %v1421, %v1499
  %v1501 = vsel %vm1015, %v1439, %v1430
  %v1502 = vsel %vm1017, %v1448, %v1501
  %v1503 = vsel %vm1019, %v1457, %v1502
  %v1504 = vsel %vm1021, %v1466, %v1503
  %v1505 = vsel %vm1023, %v1475, %v1504
  %v1506 = vsel %vm1025, %v1484, %v1505
  %v1507 = vsel %vm1027, %v1493, %v1506
  %v1510 = vsel %vm669, %v1500, 0.0
  %1511 = vadd.xlane.f32.xlu0 %v1510
  %v1512 = vpop.xlane.xlu0 %1511
  %v1513 = vsel %vm669, %v1507, 0.0
  %1514 = vadd.xlane.f32.xlu0 %v1513
  %v1515 = vpop.xlane.xlu0 %1514
  %v1518 = vlaneseq
  %v1519 = vshrl.u32 %v1518, 7
  %v1520 = vsub.s32 0, %v1519
  %v1521 = vrot.slane %v1512, %v1520
  %v1522 = vlaneseq
  %v1523 = vshrl.u32 %v1522, 7
  %v1524 = vsub.s32 1, %v1523
  %v1525 = vrot.slane %v1512, %v1524
  %v1526 = vlaneseq
  %v1527 = vshrl.u32 %v1526, 7
  %v1528 = vsub.s32 2, %v1527
  %v1529 = vrot.slane %v1512, %v1528
  %v1530 = vlaneseq
  %v1531 = vshrl.u32 %v1530, 7
  %v1532 = vsub.s32 3, %v1531
  %v1533 = vrot.slane %v1512, %v1532
  %v1534 = vlaneseq
  %v1535 = vshrl.u32 %v1534, 7
  %v1536 = vsub.s32 4, %v1535
  %v1537 = vrot.slane %v1512, %v1536
  %v1538 = vlaneseq
  %v1539 = vshrl.u32 %v1538, 7
  %v1540 = vsub.s32 5, %v1539
  %v1541 = vrot.slane %v1512, %v1540
  %v1542 = vlaneseq
  %v1543 = vshrl.u32 %v1542, 7
  %v1544 = vsub.s32 6, %v1543
  %v1545 = vrot.slane %v1512, %v1544
  %v1546 = vlaneseq
  %v1547 = vshrl.u32 %v1546, 7
  %v1548 = vsub.s32 7, %v1547
  %v1549 = vrot.slane %v1512, %v1548
  %v1550 = vlaneseq
  %v1551 = vshrl.u32 %v1550, 7
  %v1552 = vsub.s32 0, %v1551
  %v1553 = vrot.slane %v1515, %v1552
  %v1554 = vlaneseq
  %v1555 = vshrl.u32 %v1554, 7
  %v1556 = vsub.s32 1, %v1555
  %v1557 = vrot.slane %v1515, %v1556
  %v1558 = vlaneseq
  %v1559 = vshrl.u32 %v1558, 7
  %v1560 = vsub.s32 2, %v1559
  %v1561 = vrot.slane %v1515, %v1560
  %v1562 = vlaneseq
  %v1563 = vshrl.u32 %v1562, 7
  %v1564 = vsub.s32 3, %v1563
  %v1565 = vrot.slane %v1515, %v1564
  %v1566 = vlaneseq
  %v1567 = vshrl.u32 %v1566, 7
  %v1568 = vsub.s32 4, %v1567
  %v1569 = vrot.slane %v1515, %v1568
  %v1570 = vlaneseq
  %v1571 = vshrl.u32 %v1570, 7
  %v1572 = vsub.s32 5, %v1571
  %v1573 = vrot.slane %v1515, %v1572
  %v1574 = vlaneseq
  %v1575 = vshrl.u32 %v1574, 7
  %v1576 = vsub.s32 6, %v1575
  %v1577 = vrot.slane %v1515, %v1576
  %v1578 = vlaneseq
  %v1579 = vshrl.u32 %v1578, 7
  %v1580 = vsub.s32 7, %v1579
  %v1581 = vrot.slane %v1515, %v1580
  %v1598 = vrcp.pop %v1521
  %v1599 = vmul.f32 %v1159, %v1598
  %v1600 = vmul.f32 %v1161, %v1598
  %v1601 = vrcp.pop %v1525
  %v1602 = vmul.f32 %v1163, %v1601
  %v1603 = vmul.f32 %v1165, %v1601
  %v1604 = vrcp.pop %v1529
  %v1605 = vmul.f32 %v1167, %v1604
  %v1606 = vmul.f32 %v1169, %v1604
  %v1607 = vrcp.pop %v1533
  %v1608 = vmul.f32 %v1171, %v1607
  %v1609 = vmul.f32 %v1173, %v1607
  %v1610 = vrcp.pop %v1537
  %v1611 = vmul.f32 %v1175, %v1610
  %v1612 = vmul.f32 %v1177, %v1610
  %v1613 = vrcp.pop %v1541
  %v1614 = vmul.f32 %v1179, %v1613
  %v1615 = vmul.f32 %v1181, %v1613
  %v1616 = vrcp.pop %v1545
  %v1617 = vmul.f32 %v1183, %v1616
  %v1618 = vmul.f32 %v1185, %v1616
  %v1619 = vrcp.pop %v1549
  %v1620 = vmul.f32 %v1187, %v1619
  %v1621 = vmul.f32 %v1189, %v1619
  %v1622 = vrcp.pop %v1553
  %v1623 = vmul.f32 %v1191, %v1622
  %v1624 = vmul.f32 %v1193, %v1622
  %v1625 = vrcp.pop %v1557
  %v1626 = vmul.f32 %v1195, %v1625
  %v1627 = vmul.f32 %v1197, %v1625
  %v1628 = vrcp.pop %v1561
  %v1629 = vmul.f32 %v1199, %v1628
  %v1630 = vmul.f32 %v1201, %v1628
  %v1631 = vrcp.pop %v1565
  %v1632 = vmul.f32 %v1203, %v1631
  %v1633 = vmul.f32 %v1205, %v1631
  %v1634 = vrcp.pop %v1569
  %v1635 = vmul.f32 %v1207, %v1634
  %v1636 = vmul.f32 %v1209, %v1634
  %v1637 = vrcp.pop %v1573
  %v1638 = vmul.f32 %v1211, %v1637
  %v1639 = vmul.f32 %v1213, %v1637
  %v1640 = vrcp.pop %v1577
  %v1641 = vmul.f32 %v1215, %v1640
  %v1642 = vmul.f32 %v1217, %v1640
  %v1643 = vrcp.pop %v1581
  %v1644 = vmul.f32 %v1219, %v1643
  %v1645 = vmul.f32 %v1221, %v1643
  %1647 = vset.pattern.permute.xlu0 0
  %1648 = vperm.xlu0 %1647, %v1599
  %v1649 = vpop.permute.xlu0 %1648
  %1652 = vset.pattern.permute.xlu0 0
  %1653 = vperm.xlu0 %1652, %v1600
  %v1654 = vpop.permute.xlu0 %1653
  %1657 = vset.pattern.permute.xlu0 0
  %1658 = vperm.xlu0 %1657, %v1602
  %v1659 = vpop.permute.xlu0 %1658
  %1662 = vset.pattern.permute.xlu0 0
  %1663 = vperm.xlu0 %1662, %v1603
  %v1664 = vpop.permute.xlu0 %1663
  %1667 = vset.pattern.permute.xlu0 0
  %1668 = vperm.xlu0 %1667, %v1605
  %v1669 = vpop.permute.xlu0 %1668
  %1672 = vset.pattern.permute.xlu0 0
  %1673 = vperm.xlu0 %1672, %v1606
  %v1674 = vpop.permute.xlu0 %1673
  %1677 = vset.pattern.permute.xlu0 0
  %1678 = vperm.xlu0 %1677, %v1608
  %v1679 = vpop.permute.xlu0 %1678
  %1682 = vset.pattern.permute.xlu0 0
  %1683 = vperm.xlu0 %1682, %v1609
  %v1684 = vpop.permute.xlu0 %1683
  %1687 = vset.pattern.permute.xlu0 0
  %1688 = vperm.xlu0 %1687, %v1611
  %v1689 = vpop.permute.xlu0 %1688
  %1692 = vset.pattern.permute.xlu0 0
  %1693 = vperm.xlu0 %1692, %v1612
  %v1694 = vpop.permute.xlu0 %1693
  %1697 = vset.pattern.permute.xlu0 0
  %1698 = vperm.xlu0 %1697, %v1614
  %v1699 = vpop.permute.xlu0 %1698
  %1702 = vset.pattern.permute.xlu0 0
  %1703 = vperm.xlu0 %1702, %v1615
  %v1704 = vpop.permute.xlu0 %1703
  %1707 = vset.pattern.permute.xlu0 0
  %1708 = vperm.xlu0 %1707, %v1617
  %v1709 = vpop.permute.xlu0 %1708
  %1712 = vset.pattern.permute.xlu0 0
  %1713 = vperm.xlu0 %1712, %v1618
  %v1714 = vpop.permute.xlu0 %1713
  %1717 = vset.pattern.permute.xlu0 0
  %1718 = vperm.xlu0 %1717, %v1620
  %v1719 = vpop.permute.xlu0 %1718
  %1722 = vset.pattern.permute.xlu0 0
  %1723 = vperm.xlu0 %1722, %v1621
  %v1724 = vpop.permute.xlu0 %1723
  %1727 = vset.pattern.permute.xlu0 0
  %1728 = vperm.xlu0 %1727, %v1623
  %v1729 = vpop.permute.xlu0 %1728
  %1732 = vset.pattern.permute.xlu0 0
  %1733 = vperm.xlu0 %1732, %v1624
  %v1734 = vpop.permute.xlu0 %1733
  %1737 = vset.pattern.permute.xlu0 0
  %1738 = vperm.xlu0 %1737, %v1626
  %v1739 = vpop.permute.xlu0 %1738
  %1742 = vset.pattern.permute.xlu0 0
  %1743 = vperm.xlu0 %1742, %v1627
  %v1744 = vpop.permute.xlu0 %1743
  %1747 = vset.pattern.permute.xlu0 0
  %1748 = vperm.xlu0 %1747, %v1629
  %v1749 = vpop.permute.xlu0 %1748
  %1752 = vset.pattern.permute.xlu0 0
  %1753 = vperm.xlu0 %1752, %v1630
  %v1754 = vpop.permute.xlu0 %1753
  %1757 = vset.pattern.permute.xlu0 0
  %1758 = vperm.xlu0 %1757, %v1632
  %v1759 = vpop.permute.xlu0 %1758
  %1762 = vset.pattern.permute.xlu0 0
  %1763 = vperm.xlu0 %1762, %v1633
  %v1764 = vpop.permute.xlu0 %1763
  %1767 = vset.pattern.permute.xlu0 0
  %1768 = vperm.xlu0 %1767, %v1635
  %v1769 = vpop.permute.xlu0 %1768
  %1772 = vset.pattern.permute.xlu0 0
  %1773 = vperm.xlu0 %1772, %v1636
  %v1774 = vpop.permute.xlu0 %1773
  %1777 = vset.pattern.permute.xlu0 0
  %1778 = vperm.xlu0 %1777, %v1638
  %v1779 = vpop.permute.xlu0 %1778
  %1782 = vset.pattern.permute.xlu0 0
  %1783 = vperm.xlu0 %1782, %v1639
  %v1784 = vpop.permute.xlu0 %1783
  %1787 = vset.pattern.permute.xlu0 0
  %1788 = vperm.xlu0 %1787, %v1641
  %v1789 = vpop.permute.xlu0 %1788
  %1792 = vset.pattern.permute.xlu0 0
  %1793 = vperm.xlu0 %1792, %v1642
  %v1794 = vpop.permute.xlu0 %1793
  %1797 = vset.pattern.permute.xlu0 0
  %1798 = vperm.xlu0 %1797, %v1644
  %v1799 = vpop.permute.xlu0 %1798
  %1802 = vset.pattern.permute.xlu0 0
  %1803 = vperm.xlu0 %1802, %v1645
  %v1804 = vpop.permute.xlu0 %1803
  %v1806 = vmul.f32 %v27, %v1649
  %v1807 = vmul.f32 %v28, %v1654
  %v1808 = vmul.f32 %v29, %v1659
  %v1809 = vmul.f32 %v30, %v1664
  %v1810 = vmul.f32 %v31, %v1669
  %v1811 = vmul.f32 %v32, %v1674
  %v1812 = vmul.f32 %v33, %v1679
  %v1813 = vmul.f32 %v34, %v1684
  %v1814 = vmul.f32 %v35, %v1689
  %v1815 = vmul.f32 %v36, %v1694
  %v1816 = vmul.f32 %v37, %v1699
  %v1817 = vmul.f32 %v38, %v1704
  %v1818 = vmul.f32 %v39, %v1709
  %v1819 = vmul.f32 %v40, %v1714
  %v1820 = vmul.f32 %v41, %v1719
  %v1821 = vmul.f32 %v42, %v1724
  %v1822 = vmul.f32 %v27, %v1729
  %v1823 = vmul.f32 %v28, %v1734
  %v1824 = vmul.f32 %v29, %v1739
  %v1825 = vmul.f32 %v30, %v1744
  %v1826 = vmul.f32 %v31, %v1749
  %v1827 = vmul.f32 %v32, %v1754
  %v1828 = vmul.f32 %v33, %v1759
  %v1829 = vmul.f32 %v34, %v1764
  %v1830 = vmul.f32 %v35, %v1769
  %v1831 = vmul.f32 %v36, %v1774
  %v1832 = vmul.f32 %v37, %v1779
  %v1833 = vmul.f32 %v38, %v1784
  %v1834 = vmul.f32 %v39, %v1789
  %v1835 = vmul.f32 %v40, %v1794
  %v1836 = vmul.f32 %v41, %v1799
  %v1837 = vmul.f32 %v42, %v1804
  %v1838 = vsel %vm80, %v1806, 0.0
  %v1839 = vsel %vm80, %v1807, 0.0
  %v1840 = vadd.f32 %v1838, %v1839
  %v1841 = vrot.slane %v1840, 4
  %v1842 = vadd.f32 %v1840, %v1841
  %v1843 = vrot.slane %v1842, 2
  %v1844 = vadd.f32 %v1842, %v1843
  %v1845 = vrot.slane %v1844, 1
  %v1846 = vadd.f32 %v1844, %v1845
  %v1847 = vsel %vm80, %v1808, 0.0
  %v1848 = vsel %vm80, %v1809, 0.0
  %v1849 = vadd.f32 %v1847, %v1848
  %v1850 = vrot.slane %v1849, 4
  %v1851 = vadd.f32 %v1849, %v1850
  %v1852 = vrot.slane %v1851, 2
  %v1853 = vadd.f32 %v1851, %v1852
  %v1854 = vrot.slane %v1853, 1
  %v1855 = vadd.f32 %v1853, %v1854
  %v1856 = vsel %vm80, %v1810, 0.0
  %v1857 = vsel %vm80, %v1811, 0.0
  %v1858 = vadd.f32 %v1856, %v1857
  %v1859 = vrot.slane %v1858, 4
  %v1860 = vadd.f32 %v1858, %v1859
  %v1861 = vrot.slane %v1860, 2
  %v1862 = vadd.f32 %v1860, %v1861
  %v1863 = vrot.slane %v1862, 1
  %v1864 = vadd.f32 %v1862, %v1863
  %v1865 = vsel %vm80, %v1812, 0.0
  %v1866 = vsel %vm80, %v1813, 0.0
  %v1867 = vadd.f32 %v1865, %v1866
  %v1868 = vrot.slane %v1867, 4
  %v1869 = vadd.f32 %v1867, %v1868
  %v1870 = vrot.slane %v1869, 2
  %v1871 = vadd.f32 %v1869, %v1870
  %v1872 = vrot.slane %v1871, 1
  %v1873 = vadd.f32 %v1871, %v1872
  %v1874 = vsel %vm80, %v1814, 0.0
  %v1875 = vsel %vm80, %v1815, 0.0
  %v1876 = vadd.f32 %v1874, %v1875
  %v1877 = vrot.slane %v1876, 4
  %v1878 = vadd.f32 %v1876, %v1877
  %v1879 = vrot.slane %v1878, 2
  %v1880 = vadd.f32 %v1878, %v1879
  %v1881 = vrot.slane %v1880, 1
  %v1882 = vadd.f32 %v1880, %v1881
  %v1883 = vsel %vm80, %v1816, 0.0
  %v1884 = vsel %vm80, %v1817, 0.0
  %v1885 = vadd.f32 %v1883, %v1884
  %v1886 = vrot.slane %v1885, 4
  %v1887 = vadd.f32 %v1885, %v1886
  %v1888 = vrot.slane %v1887, 2
  %v1889 = vadd.f32 %v1887, %v1888
  %v1890 = vrot.slane %v1889, 1
  %v1891 = vadd.f32 %v1889, %v1890
  %v1892 = vsel %vm80, %v1818, 0.0
  %v1893 = vsel %vm80, %v1819, 0.0
  %v1894 = vadd.f32 %v1892, %v1893
  %v1895 = vrot.slane %v1894, 4
  %v1896 = vadd.f32 %v1894, %v1895
  %v1897 = vrot.slane %v1896, 2
  %v1898 = vadd.f32 %v1896, %v1897
  %v1899 = vrot.slane %v1898, 1
  %v1900 = vadd.f32 %v1898, %v1899
  %v1901 = vsel %vm80, %v1820, 0.0
  %v1902 = vsel %vm80, %v1821, 0.0
  %v1903 = vadd.f32 %v1901, %v1902
  %v1904 = vrot.slane %v1903, 4
  %v1905 = vadd.f32 %v1903, %v1904
  %v1906 = vrot.slane %v1905, 2
  %v1907 = vadd.f32 %v1905, %v1906
  %v1908 = vrot.slane %v1907, 1
  %v1909 = vadd.f32 %v1907, %v1908
  %v1910 = vsel %vm80, %v1822, 0.0
  %v1911 = vsel %vm80, %v1823, 0.0
  %v1912 = vadd.f32 %v1910, %v1911
  %v1913 = vrot.slane %v1912, 4
  %v1914 = vadd.f32 %v1912, %v1913
  %v1915 = vrot.slane %v1914, 2
  %v1916 = vadd.f32 %v1914, %v1915
  %v1917 = vrot.slane %v1916, 1
  %v1918 = vadd.f32 %v1916, %v1917
  %v1919 = vsel %vm80, %v1824, 0.0
  %v1920 = vsel %vm80, %v1825, 0.0
  %v1921 = vadd.f32 %v1919, %v1920
  %v1922 = vrot.slane %v1921, 4
  %v1923 = vadd.f32 %v1921, %v1922
  %v1924 = vrot.slane %v1923, 2
  %v1925 = vadd.f32 %v1923, %v1924
  %v1926 = vrot.slane %v1925, 1
  %v1927 = vadd.f32 %v1925, %v1926
  %v1928 = vsel %vm80, %v1826, 0.0
  %v1929 = vsel %vm80, %v1827, 0.0
  %v1930 = vadd.f32 %v1928, %v1929
  %v1931 = vrot.slane %v1930, 4
  %v1932 = vadd.f32 %v1930, %v1931
  %v1933 = vrot.slane %v1932, 2
  %v1934 = vadd.f32 %v1932, %v1933
  %v1935 = vrot.slane %v1934, 1
  %v1936 = vadd.f32 %v1934, %v1935
  %v1937 = vsel %vm80, %v1828, 0.0
  %v1938 = vsel %vm80, %v1829, 0.0
  %v1939 = vadd.f32 %v1937, %v1938
  %v1940 = vrot.slane %v1939, 4
  %v1941 = vadd.f32 %v1939, %v1940
  %v1942 = vrot.slane %v1941, 2
  %v1943 = vadd.f32 %v1941, %v1942
  %v1944 = vrot.slane %v1943, 1
  %v1945 = vadd.f32 %v1943, %v1944
  %v1946 = vsel %vm80, %v1830, 0.0
  %v1947 = vsel %vm80, %v1831, 0.0
  %v1948 = vadd.f32 %v1946, %v1947
  %v1949 = vrot.slane %v1948, 4
  %v1950 = vadd.f32 %v1948, %v1949
  %v1951 = vrot.slane %v1950, 2
  %v1952 = vadd.f32 %v1950, %v1951
  %v1953 = vrot.slane %v1952, 1
  %v1954 = vadd.f32 %v1952, %v1953
  %v1955 = vsel %vm80, %v1832, 0.0
  %v1956 = vsel %vm80, %v1833, 0.0
  %v1957 = vadd.f32 %v1955, %v1956
  %v1958 = vrot.slane %v1957, 4
  %v1959 = vadd.f32 %v1957, %v1958
  %v1960 = vrot.slane %v1959, 2
  %v1961 = vadd.f32 %v1959, %v1960
  %v1962 = vrot.slane %v1961, 1
  %v1963 = vadd.f32 %v1961, %v1962
  %v1964 = vsel %vm80, %v1834, 0.0
  %v1965 = vsel %vm80, %v1835, 0.0
  %v1966 = vadd.f32 %v1964, %v1965
  %v1967 = vrot.slane %v1966, 4
  %v1968 = vadd.f32 %v1966, %v1967
  %v1969 = vrot.slane %v1968, 2
  %v1970 = vadd.f32 %v1968, %v1969
  %v1971 = vrot.slane %v1970, 1
  %v1972 = vadd.f32 %v1970, %v1971
  %v1973 = vsel %vm80, %v1836, 0.0
  %v1974 = vsel %vm80, %v1837, 0.0
  %v1975 = vadd.f32 %v1973, %v1974
  %v1976 = vrot.slane %v1975, 4
  %v1977 = vadd.f32 %v1975, %v1976
  %v1978 = vrot.slane %v1977, 2
  %v1979 = vadd.f32 %v1977, %v1978
  %v1980 = vrot.slane %v1979, 1
  %v1981 = vadd.f32 %v1979, %v1980
  %v1998 = vsel %vm1015, %v1855, %v1846
  %v1999 = vsel %vm1017, %v1864, %v1998
  %v2000 = vsel %vm1019, %v1873, %v1999
  %v2001 = vsel %vm1021, %v1882, %v2000
  %v2002 = vsel %vm1023, %v1891, %v2001
  %v2003 = vsel %vm1025, %v1900, %v2002
  %v2004 = vsel %vm1027, %v1909, %v2003
  %v2005 = vsel %vm1015, %v1927, %v1918
  %v2006 = vsel %vm1017, %v1936, %v2005
  %v2007 = vsel %vm1019, %v1945, %v2006
  %v2008 = vsel %vm1021, %v1954, %v2007
  %v2009 = vsel %vm1023, %v1963, %v2008
  %v2010 = vsel %vm1025, %v1972, %v2009
  %v2011 = vsel %vm1027, %v1981, %v2010
  %v2012 = vsel %vm80, %v2004, 0
  %v2014 = vsel %vm80, %v2011, 0
  %2016 = vmatprep.subr.mxu0 %v67
  %2017 = vmatpush1.msra.mxu0 %v66
  %2018 = vmatprep.subr.mxu0 %v69
  %2019 = vmatpush1.msra.mxu0 %v68
  %2020 = vmatprep.subr.mxu0 %v71
  %2021 = vmatpush1.msra.mxu0 %v70
  %2022 = vmatprep.subr.mxu0 %v73
  %2023 = vmatpush1.msra.mxu0 %v72
  %2024 = vmatprep.subr.mxu0 0.0
  %2025 = vmatpush1.msra.mxu0 0.0
  %2026 = vmatprep.subr.mxu0 0.0
  %2027 = vmatpush1.msra.mxu0 0.0
  %2028 = vmatprep.subr.mxu0 0.0
  %2029 = vmatpush1.msra.mxu0 0.0
  %2030 = vmatprep.subr.mxu0 0.0
  %2031 = vmatpush1.msra.mxu0 0.0
  %2032 = vmatprep.subr.mxu0 0.0
  %2033 = vmatpush1.msra.mxu0 0.0
  %2034 = vmatprep.subr.mxu0 0.0
  %2035 = vmatpush1.msra.mxu0 0.0
  %2036 = vmatprep.subr.mxu0 0.0
  %2037 = vmatpush1.msra.mxu0 0.0
  %2038 = vmatprep.subr.mxu0 0.0
  %2039 = vmatpush1.msra.mxu0 0.0
  %2040 = vmatprep.subr.mxu0 0.0
  %2041 = vmatpush1.msra.mxu0 0.0
  %2042 = vmatprep.subr.mxu0 0.0
  %2043 = vmatpush1.msra.mxu0 0.0
  %2044 = vmatprep.subr.mxu0 0.0
  %2045 = vmatpush1.msra.mxu0 0.0
  %2046 = vmatprep.subr.mxu0 0.0
  %2047 = vmatpush1.msra.mxu0 0.0
  %2048 = vmatprep.subr.mxu0 0.0
  %2049 = vmatpush1.msra.mxu0 0.0
  %2050 = vmatprep.subr.mxu0 0.0
  %2051 = vmatpush1.msra.mxu0 0.0
  %2052 = vmatprep.subr.mxu0 0.0
  %2053 = vmatpush1.msra.mxu0 0.0
  %2054 = vmatprep.subr.mxu0 0.0
  %2055 = vmatpush1.msra.mxu0 0.0
  %2056 = vmatprep.subr.mxu0 0.0
  %2057 = vmatpush1.msra.mxu0 0.0
  %2058 = vmatprep.subr.mxu0 0.0
  %2059 = vmatpush1.msra.mxu0 0.0
  %2060 = vmatprep.subr.mxu0 0.0
  %2061 = vmatpush1.msra.mxu0 0.0
  %2062 = vmatprep.subr.mxu0 0.0
  %2063 = vmatpush1.msra.mxu0 0.0
  %2064 = vmatprep.subr.mxu0 0.0
  %2065 = vmatpush1.msra.mxu0 0.0
  %2066 = vmatprep.subr.mxu0 0.0
  %2067 = vmatpush1.msra.mxu0 0.0
  %2068 = vmatprep.subr.mxu0 0.0
  %2069 = vmatpush1.msra.mxu0 0.0
  %2070 = vmatprep.subr.mxu0 0.0
  %2071 = vmatpush1.msra.mxu0 0.0
  %2072 = vmatprep.subr.mxu0 0.0
  %2073 = vmatpush1.msra.mxu0 0.0
  %2074 = vmatprep.subr.mxu0 0.0
  %2075 = vmatpush1.msra.mxu0 0.0
  %2076 = vmatprep.subr.mxu0 0.0
  %2077 = vmatpush1.msra.mxu0 0.0
  %2078 = vmatprep.subr.mxu0 0.0
  %2079 = vmatpush1.msra.mxu0 0.0
  %2080 = vmatprep.mubr.f32.mxu0 0.0
  %2081 = vmatmul.mubr.f32.gmra.mrb[0].mxu0 %v2012
  %v2082 = vpop.f32.mrb[0].mxu0
  %v2083 = vadd.f32 0.0, %v2082
  %v2084 = vpop.f32.mrb[0].mxu0
  %v2085 = vadd.f32 0.0, %v2084
  %2086 = vmatprep.mubr.f32.mxu0 0.0
  %2087 = vmatmul.mubr.f32.gmra.mrb[0].mxu0 %v2014
  %v2088 = vpop.f32.mrb[0].mxu0
  %v2089 = vadd.f32 0.0, %v2088
  %v2090 = vpop.f32.mrb[0].mxu0
  %v2091 = vadd.f32 0.0, %v2090
  %2092 = vdwg.mxu0
  %2093 = vmatprep.subr.mxu0 %v59
  %2094 = vmatpush1.msra.mxu0 %v58
  %2095 = vmatprep.subr.mxu0 %v61
  %2096 = vmatpush1.msra.mxu0 %v60
  %2097 = vmatprep.subr.mxu0 %v63
  %2098 = vmatpush1.msra.mxu0 %v62
  %2099 = vmatprep.subr.mxu0 %v65
  %2100 = vmatpush1.msra.mxu0 %v64
  %2101 = vmatprep.subr.mxu0 0.0
  %2102 = vmatpush1.msra.mxu0 0.0
  %2103 = vmatprep.subr.mxu0 0.0
  %2104 = vmatpush1.msra.mxu0 0.0
  %2105 = vmatprep.subr.mxu0 0.0
  %2106 = vmatpush1.msra.mxu0 0.0
  %2107 = vmatprep.subr.mxu0 0.0
  %2108 = vmatpush1.msra.mxu0 0.0
  %2109 = vmatprep.subr.mxu0 0.0
  %2110 = vmatpush1.msra.mxu0 0.0
  %2111 = vmatprep.subr.mxu0 0.0
  %2112 = vmatpush1.msra.mxu0 0.0
  %2113 = vmatprep.subr.mxu0 0.0
  %2114 = vmatpush1.msra.mxu0 0.0
  %2115 = vmatprep.subr.mxu0 0.0
  %2116 = vmatpush1.msra.mxu0 0.0
  %2117 = vmatprep.subr.mxu0 0.0
  %2118 = vmatpush1.msra.mxu0 0.0
  %2119 = vmatprep.subr.mxu0 0.0
  %2120 = vmatpush1.msra.mxu0 0.0
  %2121 = vmatprep.subr.mxu0 0.0
  %2122 = vmatpush1.msra.mxu0 0.0
  %2123 = vmatprep.subr.mxu0 0.0
  %2124 = vmatpush1.msra.mxu0 0.0
  %2125 = vmatprep.subr.mxu0 0.0
  %2126 = vmatpush1.msra.mxu0 0.0
  %2127 = vmatprep.subr.mxu0 0.0
  %2128 = vmatpush1.msra.mxu0 0.0
  %2129 = vmatprep.subr.mxu0 0.0
  %2130 = vmatpush1.msra.mxu0 0.0
  %2131 = vmatprep.subr.mxu0 0.0
  %2132 = vmatpush1.msra.mxu0 0.0
  %2133 = vmatprep.subr.mxu0 0.0
  %2134 = vmatpush1.msra.mxu0 0.0
  %2135 = vmatprep.subr.mxu0 0.0
  %2136 = vmatpush1.msra.mxu0 0.0
  %2137 = vmatprep.subr.mxu0 0.0
  %2138 = vmatpush1.msra.mxu0 0.0
  %2139 = vmatprep.subr.mxu0 0.0
  %2140 = vmatpush1.msra.mxu0 0.0
  %2141 = vmatprep.subr.mxu0 0.0
  %2142 = vmatpush1.msra.mxu0 0.0
  %2143 = vmatprep.subr.mxu0 0.0
  %2144 = vmatpush1.msra.mxu0 0.0
  %2145 = vmatprep.subr.mxu0 0.0
  %2146 = vmatpush1.msra.mxu0 0.0
  %2147 = vmatprep.subr.mxu0 0.0
  %2148 = vmatpush1.msra.mxu0 0.0
  %2149 = vmatprep.subr.mxu0 0.0
  %2150 = vmatpush1.msra.mxu0 0.0
  %2151 = vmatprep.subr.mxu0 0.0
  %2152 = vmatpush1.msra.mxu0 0.0
  %2153 = vmatprep.subr.mxu0 0.0
  %2154 = vmatpush1.msra.mxu0 0.0
  %2155 = vmatprep.subr.mxu0 0.0
  %2156 = vmatpush1.msra.mxu0 0.0
  %2157 = vmatprep.mubr.f32.mxu0 0.0
  %2158 = vmatmul.mubr.f32.gmra.mrb[0].mxu0 %v311
  %v2159 = vpop.f32.mrb[0].mxu0
  %v2160 = vadd.f32 %v2083, %v2159
  %v2161 = vpop.f32.mrb[0].mxu0
  %v2162 = vadd.f32 %v2085, %v2161
  %2163 = vmatprep.mubr.f32.mxu0 0.0
  %2164 = vmatmul.mubr.f32.gmra.mrb[0].mxu0 %v314
  %v2165 = vpop.f32.mrb[0].mxu0
  %v2166 = vadd.f32 %v2089, %v2165
  %v2167 = vpop.f32.mrb[0].mxu0
  %v2168 = vadd.f32 %v2091, %v2167
  %2169 = vdwg.mxu0
  %v2170 = vlaneseq
  %v2171 = vshrl.u32 %v2170, 7
  %v2172 = vsub.s32 0, %v2171
  %v2173 = vrot.slane %v74, %v2172
  %v2174 = vlaneseq
  %v2175 = vshrl.u32 %v2174, 7
  %v2176 = vsub.s32 0, %v2175
  %v2177 = vrot.slane %v75, %v2176
  %v2178 = vadd.f32 %v2160, %v2173
  %v2179 = vadd.f32 %v2162, %v2177
  %v2180 = vadd.f32 %v2166, %v2173
  %v2181 = vadd.f32 %v2168, %v2177
  %v2182 = vld [vmem:[%s2] sm:$0xff]
  %v2184 = vsel %vm80, %v26, 0
  %2186 = vmatprep.subr.mxu0 %v51
  %2187 = vmatpush1.msra.mxu0 %v50
  %2188 = vmatprep.subr.mxu0 %v53
  %2189 = vmatpush1.msra.mxu0 %v52
  %2190 = vmatprep.subr.mxu0 %v55
  %2191 = vmatpush1.msra.mxu0 %v54
  %2192 = vmatprep.subr.mxu0 %v57
  %2193 = vmatpush1.msra.mxu0 %v56
  %2194 = vmatprep.subr.mxu0 0.0
  %2195 = vmatpush1.msra.mxu0 0.0
  %2196 = vmatprep.subr.mxu0 0.0
  %2197 = vmatpush1.msra.mxu0 0.0
  %2198 = vmatprep.subr.mxu0 0.0
  %2199 = vmatpush1.msra.mxu0 0.0
  %2200 = vmatprep.subr.mxu0 0.0
  %2201 = vmatpush1.msra.mxu0 0.0
  %2202 = vmatprep.subr.mxu0 0.0
  %2203 = vmatpush1.msra.mxu0 0.0
  %2204 = vmatprep.subr.mxu0 0.0
  %2205 = vmatpush1.msra.mxu0 0.0
  %2206 = vmatprep.subr.mxu0 0.0
  %2207 = vmatpush1.msra.mxu0 0.0
  %2208 = vmatprep.subr.mxu0 0.0
  %2209 = vmatpush1.msra.mxu0 0.0
  %2210 = vmatprep.subr.mxu0 0.0
  %2211 = vmatpush1.msra.mxu0 0.0
  %2212 = vmatprep.subr.mxu0 0.0
  %2213 = vmatpush1.msra.mxu0 0.0
  %2214 = vmatprep.subr.mxu0 0.0
  %2215 = vmatpush1.msra.mxu0 0.0
  %2216 = vmatprep.subr.mxu0 0.0
  %2217 = vmatpush1.msra.mxu0 0.0
  %2218 = vmatprep.subr.mxu0 0.0
  %2219 = vmatpush1.msra.mxu0 0.0
  %2220 = vmatprep.subr.mxu0 0.0
  %2221 = vmatpush1.msra.mxu0 0.0
  %2222 = vmatprep.subr.mxu0 0.0
  %2223 = vmatpush1.msra.mxu0 0.0
  %2224 = vmatprep.subr.mxu0 0.0
  %2225 = vmatpush1.msra.mxu0 0.0
  %2226 = vmatprep.subr.mxu0 0.0
  %2227 = vmatpush1.msra.mxu0 0.0
  %2228 = vmatprep.subr.mxu0 0.0
  %2229 = vmatpush1.msra.mxu0 0.0
  %2230 = vmatprep.subr.mxu0 0.0
  %2231 = vmatpush1.msra.mxu0 0.0
  %2232 = vmatprep.subr.mxu0 0.0
  %2233 = vmatpush1.msra.mxu0 0.0
  %2234 = vmatprep.subr.mxu0 0.0
  %2235 = vmatpush1.msra.mxu0 0.0
  %2236 = vmatprep.subr.mxu0 0.0
  %2237 = vmatpush1.msra.mxu0 0.0
  %2238 = vmatprep.subr.mxu0 0.0
  %2239 = vmatpush1.msra.mxu0 0.0
  %2240 = vmatprep.subr.mxu0 0.0
  %2241 = vmatpush1.msra.mxu0 0.0
  %2242 = vmatprep.subr.mxu0 0.0
  %2243 = vmatpush1.msra.mxu0 0.0
  %2244 = vmatprep.subr.mxu0 0.0
  %2245 = vmatpush1.msra.mxu0 0.0
  %2246 = vmatprep.subr.mxu0 0.0
  %2247 = vmatpush1.msra.mxu0 0.0
  %2248 = vmatprep.subr.mxu0 0.0
  %2249 = vmatpush1.msra.mxu0 0.0
  %2250 = vmatprep.mubr.f32.mxu0 0.0
  %2251 = vmatmul.mubr.f32.gmra.mrb[0].mxu0 %v2184
  %v2252 = vpop.f32.mrb[0].mxu0
  %v2253 = vadd.f32 0.0, %v2252
  %v2254 = vpop.f32.mrb[0].mxu0
  %v2255 = vadd.f32 0.0, %v2254
  %2256 = vdwg.mxu0
  %v2257 = vadd.f32 %v2178, %v2253
  %v2258 = vadd.f32 %v2179, %v2255
  %v2259 = vxor.u32 %v2257, 2147483648
  %v2260 = vmul.f32 %v2259, 1.442695
  %v2261 = vpow.pop %v2260
  %v2262 = vadd.f32 %v2261, 1.0
  %v2263 = vrcp.pop %v2262
  %v2264 = vmul.f32 1.0, %v2263
  %v2265 = vtanh.pop %v2257
  %2267 = vrot.lane.b32.xlu0 %v2182, 32
  %v2268 = vpop.permute.xlu0 %2267
  %v2270 = vmul.f32 %v2264, %v2268
  %2272 = vrot.lane.b32.xlu0 %v2265, 32
  %v2273 = vpop.permute.xlu0 %2272
  %v2275 = vmul.f32 %v2264, %v2273
  %2277 = vrot.lane.b32.xlu0 %v2275, 32
  %v2278 = vpop.permute.xlu0 %2277
  %v2280 = vadd.f32 %v2270, %v2278
  %v2281 = vtanh.pop %v2280
  %2283 = vrot.lane.b32.xlu0 %v2281, 32
  %v2284 = vpop.permute.xlu0 %2283
  %v2286 = vmul.f32 %v2264, %v2284
  %v2287 = vadd.f32 %v2280, 0.0
  %v2288 = vadd.f32 %v2286, 0.0
  %v2289 = vxor.u32 %v2258, 2147483648
  %v2290 = vmul.f32 %v2289, 1.442695
  %v2291 = vpow.pop %v2290
  %v2292 = vadd.f32 %v2291, 1.0
  %v2293 = vrcp.pop %v2292
  %v2294 = vmul.f32 1.0, %v2293
  %v2295 = vtanh.pop %v2258
  %v2296 = vmul.f32 %v2294, %v2268
  %2298 = vrot.lane.b32.xlu0 %v2295, 32
  %v2299 = vpop.permute.xlu0 %2298
  %v2301 = vmul.f32 %v2294, %v2299
  %2303 = vrot.lane.b32.xlu0 %v2301, 32
  %v2304 = vpop.permute.xlu0 %2303
  %v2306 = vadd.f32 %v2296, %v2304
  %v2307 = vtanh.pop %v2306
  %2309 = vrot.lane.b32.xlu0 %v2307, 32
  %v2310 = vpop.permute.xlu0 %2309
  %v2312 = vmul.f32 %v2294, %v2310
  %v2313 = vadd.f32 %v2287, %v2306
  %v2314 = vadd.f32 %v2288, %v2312
  %v2315 = vmul.f32 %v2313, 0.5
  %v2316 = vmul.f32 %v2314, 0.5
  %2318 = vrot.lane.b32.xlu0 %v2316, 64
  %v2319 = vpop.permute.xlu0 %2318
  %2320 = vrot.lane.b32.xlu0 %v45, 80
  %v2321 = vpop.permute.xlu0 %2320
  %2322 = vrot.lane.b32.xlu0 %v46, 80
  %v2323 = vpop.permute.xlu0 %2322
  %2324 = vrot.lane.b32.xlu0 %v47, 80
  %v2325 = vpop.permute.xlu0 %2324
  %2326 = vrot.lane.b32.xlu0 %v48, 80
  %v2327 = vpop.permute.xlu0 %2326
  %2332 = vrot.lane.b32.xlu0 %v79, 80
  %v2333 = vpop.permute.xlu0 %2332
  %v2335 = vsel %vm80, %v2319, 0
  %2337 = vmatprep.subr.mxu0 0.0
  %2338 = vmatpush1.msra.mxu0 %v2321
  %2339 = vmatprep.subr.mxu0 0.0
  %2340 = vmatpush1.msra.mxu0 %v2323
  %2341 = vmatprep.subr.mxu0 0.0
  %2342 = vmatpush1.msra.mxu0 %v2325
  %2343 = vmatprep.subr.mxu0 0.0
  %2344 = vmatpush1.msra.mxu0 %v2327
  %2345 = vmatprep.subr.mxu0 0.0
  %2346 = vmatpush1.msra.mxu0 0.0
  %2347 = vmatprep.subr.mxu0 0.0
  %2348 = vmatpush1.msra.mxu0 0.0
  %2349 = vmatprep.subr.mxu0 0.0
  %2350 = vmatpush1.msra.mxu0 0.0
  %2351 = vmatprep.subr.mxu0 0.0
  %2352 = vmatpush1.msra.mxu0 0.0
  %2353 = vmatprep.subr.mxu0 0.0
  %2354 = vmatpush1.msra.mxu0 0.0
  %2355 = vmatprep.subr.mxu0 0.0
  %2356 = vmatpush1.msra.mxu0 0.0
  %2357 = vmatprep.subr.mxu0 0.0
  %2358 = vmatpush1.msra.mxu0 0.0
  %2359 = vmatprep.subr.mxu0 0.0
  %2360 = vmatpush1.msra.mxu0 0.0
  %2361 = vmatprep.subr.mxu0 0.0
  %2362 = vmatpush1.msra.mxu0 0.0
  %2363 = vmatprep.subr.mxu0 0.0
  %2364 = vmatpush1.msra.mxu0 0.0
  %2365 = vmatprep.subr.mxu0 0.0
  %2366 = vmatpush1.msra.mxu0 0.0
  %2367 = vmatprep.subr.mxu0 0.0
  %2368 = vmatpush1.msra.mxu0 0.0
  %2369 = vmatprep.subr.mxu0 0.0
  %2370 = vmatpush1.msra.mxu0 0.0
  %2371 = vmatprep.subr.mxu0 0.0
  %2372 = vmatpush1.msra.mxu0 0.0
  %2373 = vmatprep.subr.mxu0 0.0
  %2374 = vmatpush1.msra.mxu0 0.0
  %2375 = vmatprep.subr.mxu0 0.0
  %2376 = vmatpush1.msra.mxu0 0.0
  %2377 = vmatprep.subr.mxu0 0.0
  %2378 = vmatpush1.msra.mxu0 0.0
  %2379 = vmatprep.subr.mxu0 0.0
  %2380 = vmatpush1.msra.mxu0 0.0
  %2381 = vmatprep.subr.mxu0 0.0
  %2382 = vmatpush1.msra.mxu0 0.0
  %2383 = vmatprep.subr.mxu0 0.0
  %2384 = vmatpush1.msra.mxu0 0.0
  %2385 = vmatprep.subr.mxu0 0.0
  %2386 = vmatpush1.msra.mxu0 0.0
  %2387 = vmatprep.subr.mxu0 0.0
  %2388 = vmatpush1.msra.mxu0 0.0
  %2389 = vmatprep.subr.mxu0 0.0
  %2390 = vmatpush1.msra.mxu0 0.0
  %2391 = vmatprep.subr.mxu0 0.0
  %2392 = vmatpush1.msra.mxu0 0.0
  %2393 = vmatprep.subr.mxu0 0.0
  %2394 = vmatpush1.msra.mxu0 0.0
  %2395 = vmatprep.subr.mxu0 0.0
  %2396 = vmatpush1.msra.mxu0 0.0
  %2397 = vmatprep.subr.mxu0 0.0
  %2398 = vmatpush1.msra.mxu0 0.0
  %2399 = vmatprep.subr.mxu0 0.0
  %2400 = vmatpush1.msra.mxu0 0.0
  %2401 = vmatprep.mubr.f32.mxu0 0.0
  %2402 = vmatmul.mubr.f32.gmra.mrb[0].mxu0 %v2335
  %v2403 = vpop.f32.mrb[0].mxu0
  %v2404 = vadd.f32 %v2333, %v2403
  %v2405 = vpop.f32.mrb[0].mxu0
  %2406 = vdwg.mxu0
  %v2407 = vmax.f32 %v2404, 0.0
  %v2408 = vlaneseq
  %v2409 = vshrl.u32 %v2408, 7
  %v2410 = vsub.s32 0, %v2409
  %v2411 = vrot.slane %v2407, %v2410
  %2413 = vbcast.lane.b32.xlu0 %v2411, 256
  %v2414 = vpop.permute.xlu0 %2413
  %s2416 = sor.u32 256, 8
  %2417 = vbcast.lane.b32.xlu0 %v2411, %s2416
  %v2418 = vpop.permute.xlu0 %2417
  %v2419 = vlaneseq
  %v2420 = vshrl.u32 %v2419, 7
  %v2421 = vsub.s32 1, %v2420
  %v2422 = vrot.slane %v2407, %v2421
  %2424 = vbcast.lane.b32.xlu0 %v2422, 256
  %v2425 = vpop.permute.xlu0 %2424
  %s2427 = sor.u32 256, 8
  %2428 = vbcast.lane.b32.xlu0 %v2422, %s2427
  %v2429 = vpop.permute.xlu0 %2428
  %v2430 = vlaneseq
  %v2431 = vshrl.u32 %v2430, 7
  %v2432 = vsub.s32 2, %v2431
  %v2433 = vrot.slane %v2407, %v2432
  %2435 = vbcast.lane.b32.xlu0 %v2433, 256
  %v2436 = vpop.permute.xlu0 %2435
  %s2438 = sor.u32 256, 8
  %2439 = vbcast.lane.b32.xlu0 %v2433, %s2438
  %v2440 = vpop.permute.xlu0 %2439
  %v2441 = vlaneseq
  %v2442 = vshrl.u32 %v2441, 7
  %v2443 = vsub.s32 3, %v2442
  %v2444 = vrot.slane %v2407, %v2443
  %2446 = vbcast.lane.b32.xlu0 %v2444, 256
  %v2447 = vpop.permute.xlu0 %2446
  %s2449 = sor.u32 256, 8
  %2450 = vbcast.lane.b32.xlu0 %v2444, %s2449
  %v2451 = vpop.permute.xlu0 %2450
  %v2452 = vlaneseq
  %v2453 = vshrl.u32 %v2452, 7
  %v2454 = vsub.s32 4, %v2453
  %v2455 = vrot.slane %v2407, %v2454
  %2457 = vbcast.lane.b32.xlu0 %v2455, 256
  %v2458 = vpop.permute.xlu0 %2457
  %s2460 = sor.u32 256, 8
  %2461 = vbcast.lane.b32.xlu0 %v2455, %s2460
  %v2462 = vpop.permute.xlu0 %2461
  %v2463 = vlaneseq
  %v2464 = vshrl.u32 %v2463, 7
  %v2465 = vsub.s32 5, %v2464
  %v2466 = vrot.slane %v2407, %v2465
  %2468 = vbcast.lane.b32.xlu0 %v2466, 256
  %v2469 = vpop.permute.xlu0 %2468
  %s2471 = sor.u32 256, 8
  %2472 = vbcast.lane.b32.xlu0 %v2466, %s2471
  %v2473 = vpop.permute.xlu0 %2472
  %v2474 = vlaneseq
  %v2475 = vshrl.u32 %v2474, 7
  %v2476 = vsub.s32 6, %v2475
  %v2477 = vrot.slane %v2407, %v2476
  %2479 = vbcast.lane.b32.xlu0 %v2477, 256
  %v2480 = vpop.permute.xlu0 %2479
  %s2482 = sor.u32 256, 8
  %2483 = vbcast.lane.b32.xlu0 %v2477, %s2482
  %v2484 = vpop.permute.xlu0 %2483
  %v2485 = vlaneseq
  %v2486 = vshrl.u32 %v2485, 7
  %v2487 = vsub.s32 7, %v2486
  %v2488 = vrot.slane %v2407, %v2487
  %2490 = vbcast.lane.b32.xlu0 %v2488, 256
  %v2491 = vpop.permute.xlu0 %2490
  %s2493 = sor.u32 256, 8
  %2494 = vbcast.lane.b32.xlu0 %v2488, %s2493
  %v2495 = vpop.permute.xlu0 %2494
  %v2496 = vadd.f32 %v274, %v2414
  %v2497 = vadd.f32 %v275, %v2418
  %v2498 = vadd.f32 %v276, %v2425
  %v2499 = vadd.f32 %v277, %v2429
  %v2500 = vadd.f32 %v278, %v2436
  %v2501 = vadd.f32 %v279, %v2440
  %v2502 = vadd.f32 %v280, %v2447
  %v2503 = vadd.f32 %v281, %v2451
  %v2504 = vadd.f32 %v282, %v2458
  %v2505 = vadd.f32 %v283, %v2462
  %v2506 = vadd.f32 %v284, %v2469
  %v2507 = vadd.f32 %v285, %v2473
  %v2508 = vadd.f32 %v286, %v2480
  %v2509 = vadd.f32 %v287, %v2484
  %v2510 = vadd.f32 %v288, %v2491
  %v2511 = vadd.f32 %v289, %v2495
  %v2512 = vtanh.pop %v2496
  %v2513 = vtanh.pop %v2497
  %v2514 = vtanh.pop %v2498
  %v2515 = vtanh.pop %v2499
  %v2516 = vtanh.pop %v2500
  %v2517 = vtanh.pop %v2501
  %v2518 = vtanh.pop %v2502
  %v2519 = vtanh.pop %v2503
  %v2520 = vtanh.pop %v2504
  %v2521 = vtanh.pop %v2505
  %v2522 = vtanh.pop %v2506
  %v2523 = vtanh.pop %v2507
  %v2524 = vtanh.pop %v2508
  %v2525 = vtanh.pop %v2509
  %v2526 = vtanh.pop %v2510
  %v2527 = vtanh.pop %v2511
  %v2528 = vmul.f32 %v2512, %v636
  %v2529 = vmul.f32 %v2513, %v636
  %v2530 = vmul.f32 %v2514, %v636
  %v2531 = vmul.f32 %v2515, %v636
  %v2532 = vmul.f32 %v2516, %v636
  %v2533 = vmul.f32 %v2517, %v636
  %v2534 = vmul.f32 %v2518, %v636
  %v2535 = vmul.f32 %v2519, %v636
  %v2536 = vmul.f32 %v2520, %v636
  %v2537 = vmul.f32 %v2521, %v636
  %v2538 = vmul.f32 %v2522, %v636
  %v2539 = vmul.f32 %v2523, %v636
  %v2540 = vmul.f32 %v2524, %v636
  %v2541 = vmul.f32 %v2525, %v636
  %v2542 = vmul.f32 %v2526, %v636
  %v2543 = vmul.f32 %v2527, %v636
  %2560 = vrot.lane.b32.xlu0 %v2528, 112
  %v2561 = vpop.permute.xlu0 %2560
  %2562 = vrot.lane.b32.xlu0 %v2529, 112
  %v2563 = vpop.permute.xlu0 %2562
  %2564 = vrot.lane.b32.xlu0 %v2530, 112
  %v2565 = vpop.permute.xlu0 %2564
  %2566 = vrot.lane.b32.xlu0 %v2531, 112
  %v2567 = vpop.permute.xlu0 %2566
  %2568 = vrot.lane.b32.xlu0 %v2532, 112
  %v2569 = vpop.permute.xlu0 %2568
  %2570 = vrot.lane.b32.xlu0 %v2533, 112
  %v2571 = vpop.permute.xlu0 %2570
  %2572 = vrot.lane.b32.xlu0 %v2534, 112
  %v2573 = vpop.permute.xlu0 %2572
  %2574 = vrot.lane.b32.xlu0 %v2535, 112
  %v2575 = vpop.permute.xlu0 %2574
  %2576 = vrot.lane.b32.xlu0 %v2536, 112
  %v2577 = vpop.permute.xlu0 %2576
  %2578 = vrot.lane.b32.xlu0 %v2537, 112
  %v2579 = vpop.permute.xlu0 %2578
  %2580 = vrot.lane.b32.xlu0 %v2538, 112
  %v2581 = vpop.permute.xlu0 %2580
  %2582 = vrot.lane.b32.xlu0 %v2539, 112
  %v2583 = vpop.permute.xlu0 %2582
  %2584 = vrot.lane.b32.xlu0 %v2540, 112
  %v2585 = vpop.permute.xlu0 %2584
  %2586 = vrot.lane.b32.xlu0 %v2541, 112
  %v2587 = vpop.permute.xlu0 %2586
  %2588 = vrot.lane.b32.xlu0 %v2542, 112
  %v2589 = vpop.permute.xlu0 %2588
  %2590 = vrot.lane.b32.xlu0 %v2543, 112
  %v2591 = vpop.permute.xlu0 %2590
  %v2608 = vsel %vm669, %v2561, 0.0
  %2609 = vadd.xlane.f32.xlu0 %v2608
  %v2610 = vpop.xlane.xlu0 %2609
  %v2611 = vsel %vm669, %v2563, 0.0
  %2612 = vadd.xlane.f32.xlu0 %v2611
  %v2613 = vpop.xlane.xlu0 %2612
  %v2614 = vsel %vm669, %v2565, 0.0
  %2615 = vadd.xlane.f32.xlu0 %v2614
  %v2616 = vpop.xlane.xlu0 %2615
  %v2617 = vsel %vm669, %v2567, 0.0
  %2618 = vadd.xlane.f32.xlu0 %v2617
  %v2619 = vpop.xlane.xlu0 %2618
  %v2620 = vsel %vm669, %v2569, 0.0
  %2621 = vadd.xlane.f32.xlu0 %v2620
  %v2622 = vpop.xlane.xlu0 %2621
  %v2623 = vsel %vm669, %v2571, 0.0
  %2624 = vadd.xlane.f32.xlu0 %v2623
  %v2625 = vpop.xlane.xlu0 %2624
  %v2626 = vsel %vm669, %v2573, 0.0
  %2627 = vadd.xlane.f32.xlu0 %v2626
  %v2628 = vpop.xlane.xlu0 %2627
  %v2629 = vsel %vm669, %v2575, 0.0
  %2630 = vadd.xlane.f32.xlu0 %v2629
  %v2631 = vpop.xlane.xlu0 %2630
  %v2632 = vsel %vm669, %v2577, 0.0
  %2633 = vadd.xlane.f32.xlu0 %v2632
  %v2634 = vpop.xlane.xlu0 %2633
  %v2635 = vsel %vm669, %v2579, 0.0
  %2636 = vadd.xlane.f32.xlu0 %v2635
  %v2637 = vpop.xlane.xlu0 %2636
  %v2638 = vsel %vm669, %v2581, 0.0
  %2639 = vadd.xlane.f32.xlu0 %v2638
  %v2640 = vpop.xlane.xlu0 %2639
  %v2641 = vsel %vm669, %v2583, 0.0
  %2642 = vadd.xlane.f32.xlu0 %v2641
  %v2643 = vpop.xlane.xlu0 %2642
  %v2644 = vsel %vm669, %v2585, 0.0
  %2645 = vadd.xlane.f32.xlu0 %v2644
  %v2646 = vpop.xlane.xlu0 %2645
  %v2647 = vsel %vm669, %v2587, 0.0
  %2648 = vadd.xlane.f32.xlu0 %v2647
  %v2649 = vpop.xlane.xlu0 %2648
  %v2650 = vsel %vm669, %v2589, 0.0
  %2651 = vadd.xlane.f32.xlu0 %v2650
  %v2652 = vpop.xlane.xlu0 %2651
  %v2653 = vsel %vm669, %v2591, 0.0
  %2654 = vadd.xlane.f32.xlu0 %v2653
  %v2655 = vpop.xlane.xlu0 %2654
  %2656 = vrot.lane.b32.xlu0 %v767, 127
  %v2657 = vpop.permute.xlu0 %2656
  %s2658 = vtos %v2657
  %v2659 = vstv %s2658
  %v2661 = vadd.f32 %v2610, %v2659
  %v2662 = vadd.f32 %v2613, %v2659
  %v2663 = vadd.f32 %v2616, %v2659
  %v2664 = vadd.f32 %v2619, %v2659
  %v2665 = vadd.f32 %v2622, %v2659
  %v2666 = vadd.f32 %v2625, %v2659
  %v2667 = vadd.f32 %v2628, %v2659
  %v2668 = vadd.f32 %v2631, %v2659
  %v2669 = vadd.f32 %v2634, %v2659
  %v2670 = vadd.f32 %v2637, %v2659
  %v2671 = vadd.f32 %v2640, %v2659
  %v2672 = vadd.f32 %v2643, %v2659
  %v2673 = vadd.f32 %v2646, %v2659
  %v2674 = vadd.f32 %v2649, %v2659
  %v2675 = vadd.f32 %v2652, %v2659
  %v2676 = vadd.f32 %v2655, %v2659
  %v2677 = vmax.f32 %v2661, 0.0
  %v2678 = vmax.f32 %v2662, 0.0
  %v2679 = vmax.f32 %v2663, 0.0
  %v2680 = vmax.f32 %v2664, 0.0
  %v2681 = vmax.f32 %v2665, 0.0
  %v2682 = vmax.f32 %v2666, 0.0
  %v2683 = vmax.f32 %v2667, 0.0
  %v2684 = vmax.f32 %v2668, 0.0
  %v2685 = vmax.f32 %v2669, 0.0
  %v2686 = vmax.f32 %v2670, 0.0
  %v2687 = vmax.f32 %v2671, 0.0
  %v2688 = vmax.f32 %v2672, 0.0
  %v2689 = vmax.f32 %v2673, 0.0
  %v2690 = vmax.f32 %v2674, 0.0
  %v2691 = vmax.f32 %v2675, 0.0
  %v2692 = vmax.f32 %v2676, 0.0
  %v2709 = vlaneseq
  %v2710 = vshrl.u32 %v2709, 7
  %v2711 = vsub.s32 %v868, %v2710
  %v2712 = vrot.slane %v2677, %v2711
  %v2713 = vlaneseq
  %v2714 = vshrl.u32 %v2713, 7
  %v2715 = vsub.s32 %v873, %v2714
  %v2716 = vrot.slane %v2678, %v2715
  %v2717 = vsel %vm878, %v2716, %v2712
  %v2718 = vlaneseq
  %v2719 = vshrl.u32 %v2718, 7
  %v2720 = vsub.s32 %v868, %v2719
  %v2721 = vrot.slane %v2679, %v2720
  %v2722 = vlaneseq
  %v2723 = vshrl.u32 %v2722, 7
  %v2724 = vsub.s32 %v873, %v2723
  %v2725 = vrot.slane %v2680, %v2724
  %v2726 = vsel %vm878, %v2725, %v2721
  %v2727 = vlaneseq
  %v2728 = vshrl.u32 %v2727, 7
  %v2729 = vsub.s32 %v868, %v2728
  %v2730 = vrot.slane %v2681, %v2729
  %v2731 = vlaneseq
  %v2732 = vshrl.u32 %v2731, 7
  %v2733 = vsub.s32 %v873, %v2732
  %v2734 = vrot.slane %v2682, %v2733
  %v2735 = vsel %vm878, %v2734, %v2730
  %v2736 = vlaneseq
  %v2737 = vshrl.u32 %v2736, 7
  %v2738 = vsub.s32 %v868, %v2737
  %v2739 = vrot.slane %v2683, %v2738
  %v2740 = vlaneseq
  %v2741 = vshrl.u32 %v2740, 7
  %v2742 = vsub.s32 %v873, %v2741
  %v2743 = vrot.slane %v2684, %v2742
  %v2744 = vsel %vm878, %v2743, %v2739
  %v2745 = vlaneseq
  %v2746 = vshrl.u32 %v2745, 7
  %v2747 = vsub.s32 %v868, %v2746
  %v2748 = vrot.slane %v2685, %v2747
  %v2749 = vlaneseq
  %v2750 = vshrl.u32 %v2749, 7
  %v2751 = vsub.s32 %v873, %v2750
  %v2752 = vrot.slane %v2686, %v2751
  %v2753 = vsel %vm878, %v2752, %v2748
  %v2754 = vlaneseq
  %v2755 = vshrl.u32 %v2754, 7
  %v2756 = vsub.s32 %v868, %v2755
  %v2757 = vrot.slane %v2687, %v2756
  %v2758 = vlaneseq
  %v2759 = vshrl.u32 %v2758, 7
  %v2760 = vsub.s32 %v873, %v2759
  %v2761 = vrot.slane %v2688, %v2760
  %v2762 = vsel %vm878, %v2761, %v2757
  %v2763 = vlaneseq
  %v2764 = vshrl.u32 %v2763, 7
  %v2765 = vsub.s32 %v868, %v2764
  %v2766 = vrot.slane %v2689, %v2765
  %v2767 = vlaneseq
  %v2768 = vshrl.u32 %v2767, 7
  %v2769 = vsub.s32 %v873, %v2768
  %v2770 = vrot.slane %v2690, %v2769
  %v2771 = vsel %vm878, %v2770, %v2766
  %v2772 = vlaneseq
  %v2773 = vshrl.u32 %v2772, 7
  %v2774 = vsub.s32 %v868, %v2773
  %v2775 = vrot.slane %v2691, %v2774
  %v2776 = vlaneseq
  %v2777 = vshrl.u32 %v2776, 7
  %v2778 = vsub.s32 %v873, %v2777
  %v2779 = vrot.slane %v2692, %v2778
  %v2780 = vsel %vm878, %v2779, %v2775
  %v2781 = vsel %vm1015, %v2726, %v2717
  %v2782 = vsel %vm1017, %v2735, %v2781
  %v2783 = vsel %vm1019, %v2744, %v2782
  %v2784 = vsel %vm1021, %v2753, %v2783
  %v2785 = vsel %vm1023, %v2762, %v2784
  %v2786 = vsel %vm1025, %v2771, %v2785
  %v2787 = vsel %vm1027, %v2780, %v2786
  %v2789 = vsel %vm669, %v2787, -inf
  %2790 = vmax.xlane.f32.xlu0 %v2789
  %v2791 = vpop.xlane.xlu0 %2790
  %v2793 = vlaneseq
  %v2794 = vshrl.u32 %v2793, 7
  %v2795 = vsub.s32 0, %v2794
  %v2796 = vrot.slane %v2791, %v2795
  %v2797 = vlaneseq
  %v2798 = vshrl.u32 %v2797, 7
  %v2799 = vsub.s32 1, %v2798
  %v2800 = vrot.slane %v2791, %v2799
  %v2801 = vlaneseq
  %v2802 = vshrl.u32 %v2801, 7
  %v2803 = vsub.s32 2, %v2802
  %v2804 = vrot.slane %v2791, %v2803
  %v2805 = vlaneseq
  %v2806 = vshrl.u32 %v2805, 7
  %v2807 = vsub.s32 3, %v2806
  %v2808 = vrot.slane %v2791, %v2807
  %v2809 = vlaneseq
  %v2810 = vshrl.u32 %v2809, 7
  %v2811 = vsub.s32 4, %v2810
  %v2812 = vrot.slane %v2791, %v2811
  %v2813 = vlaneseq
  %v2814 = vshrl.u32 %v2813, 7
  %v2815 = vsub.s32 5, %v2814
  %v2816 = vrot.slane %v2791, %v2815
  %v2817 = vlaneseq
  %v2818 = vshrl.u32 %v2817, 7
  %v2819 = vsub.s32 6, %v2818
  %v2820 = vrot.slane %v2791, %v2819
  %v2821 = vlaneseq
  %v2822 = vshrl.u32 %v2821, 7
  %v2823 = vsub.s32 7, %v2822
  %v2824 = vrot.slane %v2791, %v2823
  %v2833 = vsub.f32 %v2677, %v2796
  %v2834 = vsub.f32 %v2678, %v2796
  %v2835 = vsub.f32 %v2679, %v2800
  %v2836 = vsub.f32 %v2680, %v2800
  %v2837 = vsub.f32 %v2681, %v2804
  %v2838 = vsub.f32 %v2682, %v2804
  %v2839 = vsub.f32 %v2683, %v2808
  %v2840 = vsub.f32 %v2684, %v2808
  %v2841 = vsub.f32 %v2685, %v2812
  %v2842 = vsub.f32 %v2686, %v2812
  %v2843 = vsub.f32 %v2687, %v2816
  %v2844 = vsub.f32 %v2688, %v2816
  %v2845 = vsub.f32 %v2689, %v2820
  %v2846 = vsub.f32 %v2690, %v2820
  %v2847 = vsub.f32 %v2691, %v2824
  %v2848 = vsub.f32 %v2692, %v2824
  %v2849 = vmul.f32 %v2833, 1.442695
  %v2850 = vpow.pop %v2849
  %v2851 = vmul.f32 %v2834, 1.442695
  %v2852 = vpow.pop %v2851
  %v2853 = vmul.f32 %v2835, 1.442695
  %v2854 = vpow.pop %v2853
  %v2855 = vmul.f32 %v2836, 1.442695
  %v2856 = vpow.pop %v2855
  %v2857 = vmul.f32 %v2837, 1.442695
  %v2858 = vpow.pop %v2857
  %v2859 = vmul.f32 %v2838, 1.442695
  %v2860 = vpow.pop %v2859
  %v2861 = vmul.f32 %v2839, 1.442695
  %v2862 = vpow.pop %v2861
  %v2863 = vmul.f32 %v2840, 1.442695
  %v2864 = vpow.pop %v2863
  %v2865 = vmul.f32 %v2841, 1.442695
  %v2866 = vpow.pop %v2865
  %v2867 = vmul.f32 %v2842, 1.442695
  %v2868 = vpow.pop %v2867
  %v2869 = vmul.f32 %v2843, 1.442695
  %v2870 = vpow.pop %v2869
  %v2871 = vmul.f32 %v2844, 1.442695
  %v2872 = vpow.pop %v2871
  %v2873 = vmul.f32 %v2845, 1.442695
  %v2874 = vpow.pop %v2873
  %v2875 = vmul.f32 %v2846, 1.442695
  %v2876 = vpow.pop %v2875
  %v2877 = vmul.f32 %v2847, 1.442695
  %v2878 = vpow.pop %v2877
  %v2879 = vmul.f32 %v2848, 1.442695
  %v2880 = vpow.pop %v2879
  %2897 = vset.pattern.permute.xlu0 0
  %2898 = vperm.xlu0 %2897, %v2850
  %v2899 = vpop.permute.xlu0 %2898
  %2900 = vset.pattern.permute.xlu0 0
  %2901 = vperm.xlu0 %2900, %v2852
  %v2902 = vpop.permute.xlu0 %2901
  %2903 = vset.pattern.permute.xlu0 0
  %2904 = vperm.xlu0 %2903, %v2854
  %v2905 = vpop.permute.xlu0 %2904
  %2906 = vset.pattern.permute.xlu0 0
  %2907 = vperm.xlu0 %2906, %v2856
  %v2908 = vpop.permute.xlu0 %2907
  %2909 = vset.pattern.permute.xlu0 0
  %2910 = vperm.xlu0 %2909, %v2858
  %v2911 = vpop.permute.xlu0 %2910
  %2912 = vset.pattern.permute.xlu0 0
  %2913 = vperm.xlu0 %2912, %v2860
  %v2914 = vpop.permute.xlu0 %2913
  %2915 = vset.pattern.permute.xlu0 0
  %2916 = vperm.xlu0 %2915, %v2862
  %v2917 = vpop.permute.xlu0 %2916
  %2918 = vset.pattern.permute.xlu0 0
  %2919 = vperm.xlu0 %2918, %v2864
  %v2920 = vpop.permute.xlu0 %2919
  %2921 = vset.pattern.permute.xlu0 0
  %2922 = vperm.xlu0 %2921, %v2866
  %v2923 = vpop.permute.xlu0 %2922
  %2924 = vset.pattern.permute.xlu0 0
  %2925 = vperm.xlu0 %2924, %v2868
  %v2926 = vpop.permute.xlu0 %2925
  %2927 = vset.pattern.permute.xlu0 0
  %2928 = vperm.xlu0 %2927, %v2870
  %v2929 = vpop.permute.xlu0 %2928
  %2930 = vset.pattern.permute.xlu0 0
  %2931 = vperm.xlu0 %2930, %v2872
  %v2932 = vpop.permute.xlu0 %2931
  %2933 = vset.pattern.permute.xlu0 0
  %2934 = vperm.xlu0 %2933, %v2874
  %v2935 = vpop.permute.xlu0 %2934
  %2936 = vset.pattern.permute.xlu0 0
  %2937 = vperm.xlu0 %2936, %v2876
  %v2938 = vpop.permute.xlu0 %2937
  %2939 = vset.pattern.permute.xlu0 0
  %2940 = vperm.xlu0 %2939, %v2878
  %v2941 = vpop.permute.xlu0 %2940
  %2942 = vset.pattern.permute.xlu0 0
  %2943 = vperm.xlu0 %2942, %v2880
  %v2944 = vpop.permute.xlu0 %2943
  %v2945 = vlaneseq
  %v2946 = vshrl.u32 %v2945, 7
  %v2947 = vsub.s32 %v868, %v2946
  %v2948 = vrot.slane %v2899, %v2947
  %v2949 = vlaneseq
  %v2950 = vshrl.u32 %v2949, 7
  %v2951 = vsub.s32 %v873, %v2950
  %v2952 = vrot.slane %v2902, %v2951
  %v2953 = vsel %vm878, %v2952, %v2948
  %v2954 = vlaneseq
  %v2955 = vshrl.u32 %v2954, 7
  %v2956 = vsub.s32 %v868, %v2955
  %v2957 = vrot.slane %v2905, %v2956
  %v2958 = vlaneseq
  %v2959 = vshrl.u32 %v2958, 7
  %v2960 = vsub.s32 %v873, %v2959
  %v2961 = vrot.slane %v2908, %v2960
  %v2962 = vsel %vm878, %v2961, %v2957
  %v2963 = vlaneseq
  %v2964 = vshrl.u32 %v2963, 7
  %v2965 = vsub.s32 %v868, %v2964
  %v2966 = vrot.slane %v2911, %v2965
  %v2967 = vlaneseq
  %v2968 = vshrl.u32 %v2967, 7
  %v2969 = vsub.s32 %v873, %v2968
  %v2970 = vrot.slane %v2914, %v2969
  %v2971 = vsel %vm878, %v2970, %v2966
  %v2972 = vlaneseq
  %v2973 = vshrl.u32 %v2972, 7
  %v2974 = vsub.s32 %v868, %v2973
  %v2975 = vrot.slane %v2917, %v2974
  %v2976 = vlaneseq
  %v2977 = vshrl.u32 %v2976, 7
  %v2978 = vsub.s32 %v873, %v2977
  %v2979 = vrot.slane %v2920, %v2978
  %v2980 = vsel %vm878, %v2979, %v2975
  %v2981 = vlaneseq
  %v2982 = vshrl.u32 %v2981, 7
  %v2983 = vsub.s32 %v868, %v2982
  %v2984 = vrot.slane %v2923, %v2983
  %v2985 = vlaneseq
  %v2986 = vshrl.u32 %v2985, 7
  %v2987 = vsub.s32 %v873, %v2986
  %v2988 = vrot.slane %v2926, %v2987
  %v2989 = vsel %vm878, %v2988, %v2984
  %v2990 = vlaneseq
  %v2991 = vshrl.u32 %v2990, 7
  %v2992 = vsub.s32 %v868, %v2991
  %v2993 = vrot.slane %v2929, %v2992
  %v2994 = vlaneseq
  %v2995 = vshrl.u32 %v2994, 7
  %v2996 = vsub.s32 %v873, %v2995
  %v2997 = vrot.slane %v2932, %v2996
  %v2998 = vsel %vm878, %v2997, %v2993
  %v2999 = vlaneseq
  %v3000 = vshrl.u32 %v2999, 7
  %v3001 = vsub.s32 %v868, %v3000
  %v3002 = vrot.slane %v2935, %v3001
  %v3003 = vlaneseq
  %v3004 = vshrl.u32 %v3003, 7
  %v3005 = vsub.s32 %v873, %v3004
  %v3006 = vrot.slane %v2938, %v3005
  %v3007 = vsel %vm878, %v3006, %v3002
  %v3008 = vlaneseq
  %v3009 = vshrl.u32 %v3008, 7
  %v3010 = vsub.s32 %v868, %v3009
  %v3011 = vrot.slane %v2941, %v3010
  %v3012 = vlaneseq
  %v3013 = vshrl.u32 %v3012, 7
  %v3014 = vsub.s32 %v873, %v3013
  %v3015 = vrot.slane %v2944, %v3014
  %v3016 = vsel %vm878, %v3015, %v3011
  %v3017 = vsel %vm1015, %v2962, %v2953
  %v3018 = vsel %vm1017, %v2971, %v3017
  %v3019 = vsel %vm1019, %v2980, %v3018
  %v3020 = vsel %vm1021, %v2989, %v3019
  %v3021 = vsel %vm1023, %v2998, %v3020
  %v3022 = vsel %vm1025, %v3007, %v3021
  %v3023 = vsel %vm1027, %v3016, %v3022
  %v3025 = vsel %vm669, %v3023, 0.0
  %3026 = vadd.xlane.f32.xlu0 %v3025
  %v3027 = vpop.xlane.xlu0 %3026
  %v3029 = vlaneseq
  %v3030 = vshrl.u32 %v3029, 7
  %v3031 = vsub.s32 0, %v3030
  %v3032 = vrot.slane %v3027, %v3031
  %v3033 = vlaneseq
  %v3034 = vshrl.u32 %v3033, 7
  %v3035 = vsub.s32 1, %v3034
  %v3036 = vrot.slane %v3027, %v3035
  %v3037 = vlaneseq
  %v3038 = vshrl.u32 %v3037, 7
  %v3039 = vsub.s32 2, %v3038
  %v3040 = vrot.slane %v3027, %v3039
  %v3041 = vlaneseq
  %v3042 = vshrl.u32 %v3041, 7
  %v3043 = vsub.s32 3, %v3042
  %v3044 = vrot.slane %v3027, %v3043
  %v3045 = vlaneseq
  %v3046 = vshrl.u32 %v3045, 7
  %v3047 = vsub.s32 4, %v3046
  %v3048 = vrot.slane %v3027, %v3047
  %v3049 = vlaneseq
  %v3050 = vshrl.u32 %v3049, 7
  %v3051 = vsub.s32 5, %v3050
  %v3052 = vrot.slane %v3027, %v3051
  %v3053 = vlaneseq
  %v3054 = vshrl.u32 %v3053, 7
  %v3055 = vsub.s32 6, %v3054
  %v3056 = vrot.slane %v3027, %v3055
  %v3057 = vlaneseq
  %v3058 = vshrl.u32 %v3057, 7
  %v3059 = vsub.s32 7, %v3058
  %v3060 = vrot.slane %v3027, %v3059
  %v3069 = vrcp.pop %v3032
  %v3070 = vmul.f32 %v2850, %v3069
  %v3071 = vmul.f32 %v2852, %v3069
  %v3072 = vrcp.pop %v3036
  %v3073 = vmul.f32 %v2854, %v3072
  %v3074 = vmul.f32 %v2856, %v3072
  %v3075 = vrcp.pop %v3040
  %v3076 = vmul.f32 %v2858, %v3075
  %v3077 = vmul.f32 %v2860, %v3075
  %v3078 = vrcp.pop %v3044
  %v3079 = vmul.f32 %v2862, %v3078
  %v3080 = vmul.f32 %v2864, %v3078
  %v3081 = vrcp.pop %v3048
  %v3082 = vmul.f32 %v2866, %v3081
  %v3083 = vmul.f32 %v2868, %v3081
  %v3084 = vrcp.pop %v3052
  %v3085 = vmul.f32 %v2870, %v3084
  %v3086 = vmul.f32 %v2872, %v3084
  %v3087 = vrcp.pop %v3056
  %v3088 = vmul.f32 %v2874, %v3087
  %v3089 = vmul.f32 %v2876, %v3087
  %v3090 = vrcp.pop %v3060
  %v3091 = vmul.f32 %v2878, %v3090
  %v3092 = vmul.f32 %v2880, %v3090
  %3094 = vset.pattern.permute.xlu0 0
  %3095 = vperm.xlu0 %3094, %v3070
  %v3096 = vpop.permute.xlu0 %3095
  %3099 = vset.pattern.permute.xlu0 0
  %3100 = vperm.xlu0 %3099, %v3071
  %v3101 = vpop.permute.xlu0 %3100
  %3104 = vset.pattern.permute.xlu0 0
  %3105 = vperm.xlu0 %3104, %v3073
  %v3106 = vpop.permute.xlu0 %3105
  %3109 = vset.pattern.permute.xlu0 0
  %3110 = vperm.xlu0 %3109, %v3074
  %v3111 = vpop.permute.xlu0 %3110
  %3114 = vset.pattern.permute.xlu0 0
  %3115 = vperm.xlu0 %3114, %v3076
  %v3116 = vpop.permute.xlu0 %3115
  %3119 = vset.pattern.permute.xlu0 0
  %3120 = vperm.xlu0 %3119, %v3077
  %v3121 = vpop.permute.xlu0 %3120
  %3124 = vset.pattern.permute.xlu0 0
  %3125 = vperm.xlu0 %3124, %v3079
  %v3126 = vpop.permute.xlu0 %3125
  %3129 = vset.pattern.permute.xlu0 0
  %3130 = vperm.xlu0 %3129, %v3080
  %v3131 = vpop.permute.xlu0 %3130
  %3134 = vset.pattern.permute.xlu0 0
  %3135 = vperm.xlu0 %3134, %v3082
  %v3136 = vpop.permute.xlu0 %3135
  %3139 = vset.pattern.permute.xlu0 0
  %3140 = vperm.xlu0 %3139, %v3083
  %v3141 = vpop.permute.xlu0 %3140
  %3144 = vset.pattern.permute.xlu0 0
  %3145 = vperm.xlu0 %3144, %v3085
  %v3146 = vpop.permute.xlu0 %3145
  %3149 = vset.pattern.permute.xlu0 0
  %3150 = vperm.xlu0 %3149, %v3086
  %v3151 = vpop.permute.xlu0 %3150
  %3154 = vset.pattern.permute.xlu0 0
  %3155 = vperm.xlu0 %3154, %v3088
  %v3156 = vpop.permute.xlu0 %3155
  %3159 = vset.pattern.permute.xlu0 0
  %3160 = vperm.xlu0 %3159, %v3089
  %v3161 = vpop.permute.xlu0 %3160
  %3164 = vset.pattern.permute.xlu0 0
  %3165 = vperm.xlu0 %3164, %v3091
  %v3166 = vpop.permute.xlu0 %3165
  %3169 = vset.pattern.permute.xlu0 0
  %3170 = vperm.xlu0 %3169, %v3092
  %v3171 = vpop.permute.xlu0 %3170
  %v3173 = vmul.f32 %v27, %v3096
  %v3174 = vmul.f32 %v28, %v3101
  %v3175 = vmul.f32 %v29, %v3106
  %v3176 = vmul.f32 %v30, %v3111
  %v3177 = vmul.f32 %v31, %v3116
  %v3178 = vmul.f32 %v32, %v3121
  %v3179 = vmul.f32 %v33, %v3126
  %v3180 = vmul.f32 %v34, %v3131
  %v3181 = vmul.f32 %v35, %v3136
  %v3182 = vmul.f32 %v36, %v3141
  %v3183 = vmul.f32 %v37, %v3146
  %v3184 = vmul.f32 %v38, %v3151
  %v3185 = vmul.f32 %v39, %v3156
  %v3186 = vmul.f32 %v40, %v3161
  %v3187 = vmul.f32 %v41, %v3166
  %v3188 = vmul.f32 %v42, %v3171
  %v3189 = vsel %vm80, %v3173, 0.0
  %v3190 = vsel %vm80, %v3174, 0.0
  %v3191 = vadd.f32 %v3189, %v3190
  %v3192 = vrot.slane %v3191, 4
  %v3193 = vadd.f32 %v3191, %v3192
  %v3194 = vrot.slane %v3193, 2
  %v3195 = vadd.f32 %v3193, %v3194
  %v3196 = vrot.slane %v3195, 1
  %v3197 = vadd.f32 %v3195, %v3196
  %v3198 = vsel %vm80, %v3175, 0.0
  %v3199 = vsel %vm80, %v3176, 0.0
  %v3200 = vadd.f32 %v3198, %v3199
  %v3201 = vrot.slane %v3200, 4
  %v3202 = vadd.f32 %v3200, %v3201
  %v3203 = vrot.slane %v3202, 2
  %v3204 = vadd.f32 %v3202, %v3203
  %v3205 = vrot.slane %v3204, 1
  %v3206 = vadd.f32 %v3204, %v3205
  %v3207 = vsel %vm80, %v3177, 0.0
  %v3208 = vsel %vm80, %v3178, 0.0
  %v3209 = vadd.f32 %v3207, %v3208
  %v3210 = vrot.slane %v3209, 4
  %v3211 = vadd.f32 %v3209, %v3210
  %v3212 = vrot.slane %v3211, 2
  %v3213 = vadd.f32 %v3211, %v3212
  %v3214 = vrot.slane %v3213, 1
  %v3215 = vadd.f32 %v3213, %v3214
  %v3216 = vsel %vm80, %v3179, 0.0
  %v3217 = vsel %vm80, %v3180, 0.0
  %v3218 = vadd.f32 %v3216, %v3217
  %v3219 = vrot.slane %v3218, 4
  %v3220 = vadd.f32 %v3218, %v3219
  %v3221 = vrot.slane %v3220, 2
  %v3222 = vadd.f32 %v3220, %v3221
  %v3223 = vrot.slane %v3222, 1
  %v3224 = vadd.f32 %v3222, %v3223
  %v3225 = vsel %vm80, %v3181, 0.0
  %v3226 = vsel %vm80, %v3182, 0.0
  %v3227 = vadd.f32 %v3225, %v3226
  %v3228 = vrot.slane %v3227, 4
  %v3229 = vadd.f32 %v3227, %v3228
  %v3230 = vrot.slane %v3229, 2
  %v3231 = vadd.f32 %v3229, %v3230
  %v3232 = vrot.slane %v3231, 1
  %v3233 = vadd.f32 %v3231, %v3232
  %v3234 = vsel %vm80, %v3183, 0.0
  %v3235 = vsel %vm80, %v3184, 0.0
  %v3236 = vadd.f32 %v3234, %v3235
  %v3237 = vrot.slane %v3236, 4
  %v3238 = vadd.f32 %v3236, %v3237
  %v3239 = vrot.slane %v3238, 2
  %v3240 = vadd.f32 %v3238, %v3239
  %v3241 = vrot.slane %v3240, 1
  %v3242 = vadd.f32 %v3240, %v3241
  %v3243 = vsel %vm80, %v3185, 0.0
  %v3244 = vsel %vm80, %v3186, 0.0
  %v3245 = vadd.f32 %v3243, %v3244
  %v3246 = vrot.slane %v3245, 4
  %v3247 = vadd.f32 %v3245, %v3246
  %v3248 = vrot.slane %v3247, 2
  %v3249 = vadd.f32 %v3247, %v3248
  %v3250 = vrot.slane %v3249, 1
  %v3251 = vadd.f32 %v3249, %v3250
  %v3252 = vsel %vm80, %v3187, 0.0
  %v3253 = vsel %vm80, %v3188, 0.0
  %v3254 = vadd.f32 %v3252, %v3253
  %v3255 = vrot.slane %v3254, 4
  %v3256 = vadd.f32 %v3254, %v3255
  %v3257 = vrot.slane %v3256, 2
  %v3258 = vadd.f32 %v3256, %v3257
  %v3259 = vrot.slane %v3258, 1
  %v3260 = vadd.f32 %v3258, %v3259
  %v3261 = vrot.slane %v2316, 1
  %v3262 = vrot.slane %v2316, 2
  %v3263 = vrot.slane %v2316, 3
  %v3264 = vrot.slane %v2316, 4
  %v3265 = vrot.slane %v2316, 5
  %v3266 = vrot.slane %v2316, 6
  %v3267 = vrot.slane %v2316, 7
  %3268 = vrot.lane.b32.xlu0 %v3261, 64
  %v3269 = vpop.permute.xlu0 %3268
  %3270 = vrot.lane.b32.xlu0 %v3262, 64
  %v3271 = vpop.permute.xlu0 %3270
  %3272 = vrot.lane.b32.xlu0 %v3263, 64
  %v3273 = vpop.permute.xlu0 %3272
  %3274 = vrot.lane.b32.xlu0 %v3264, 64
  %v3275 = vpop.permute.xlu0 %3274
  %3276 = vrot.lane.b32.xlu0 %v3265, 64
  %v3277 = vpop.permute.xlu0 %3276
  %3278 = vrot.lane.b32.xlu0 %v3266, 64
  %v3279 = vpop.permute.xlu0 %3278
  %3280 = vrot.lane.b32.xlu0 %v3267, 64
  %v3281 = vpop.permute.xlu0 %3280
  %v3290 = vadd.f32 %v3197, %v2319
  %v3291 = vadd.f32 %v3206, %v3269
  %v3292 = vadd.f32 %v3215, %v3271
  %v3293 = vadd.f32 %v3224, %v3273
  %v3294 = vadd.f32 %v3233, %v3275
  %v3295 = vadd.f32 %v3242, %v3277
  %v3296 = vadd.f32 %v3251, %v3279
  %v3297 = vadd.f32 %v3260, %v3281
  %3299 = vrot.lane.b32.xlu0 %v2315, 96
  %v3300 = vpop.permute.xlu0 %3299
  %3302 = vst.msk [vmem:[%s7] sm:$0xff] %vm80, %v3300
  %v3311 = vrot.slane %v3291, 7
  %v3312 = vsel %vm1015, %v3311, %v3290
  %v3313 = vrot.slane %v3292, 6
  %v3314 = vsel %vm1017, %v3313, %v3312
  %v3315 = vrot.slane %v3293, 5
  %v3316 = vsel %vm1019, %v3315, %v3314
  %v3317 = vrot.slane %v3294, 4
  %v3318 = vsel %vm1021, %v3317, %v3316
  %v3319 = vrot.slane %v3295, 3
  %v3320 = vsel %vm1023, %v3319, %v3318
  %v3321 = vrot.slane %v3296, 2
  %v3322 = vsel %vm1025, %v3321, %v3320
  %v3323 = vrot.slane %v3297, 1
  %v3324 = vsel %vm1027, %v3323, %v3322
  %3325 = vrot.lane.b32.xlu0 %v3324, 64
  %v3326 = vpop.permute.xlu0 %3325
  %vm3328 = vcmask 785920
  %3329 = vst.msk [vmem:[%s7] sm:$0xff] %vm3328, %v3326
  %s3330 = scalar_lea.vmem %s2, 8
  %v3331 = vld [vmem:[%s3330] sm:$0xff]
  %v3333 = vadd.f32 %v26, %v3324
  %v3335 = vsel %vm80, %v3333, 0
  %3337 = vmatprep.subr.mxu0 %v51
  %3338 = vmatpush1.msra.mxu0 %v50
  %3339 = vmatprep.subr.mxu0 %v53
  %3340 = vmatpush1.msra.mxu0 %v52
  %3341 = vmatprep.subr.mxu0 %v55
  %3342 = vmatpush1.msra.mxu0 %v54
  %3343 = vmatprep.subr.mxu0 %v57
  %3344 = vmatpush1.msra.mxu0 %v56
  %3345 = vmatprep.subr.mxu0 0.0
  %3346 = vmatpush1.msra.mxu0 0.0
  %3347 = vmatprep.subr.mxu0 0.0
  %3348 = vmatpush1.msra.mxu0 0.0
  %3349 = vmatprep.subr.mxu0 0.0
  %3350 = vmatpush1.msra.mxu0 0.0
  %3351 = vmatprep.subr.mxu0 0.0
  %3352 = vmatpush1.msra.mxu0 0.0
  %3353 = vmatprep.subr.mxu0 0.0
  %3354 = vmatpush1.msra.mxu0 0.0
  %3355 = vmatprep.subr.mxu0 0.0
  %3356 = vmatpush1.msra.mxu0 0.0
  %3357 = vmatprep.subr.mxu0 0.0
  %3358 = vmatpush1.msra.mxu0 0.0
  %3359 = vmatprep.subr.mxu0 0.0
  %3360 = vmatpush1.msra.mxu0 0.0
  %3361 = vmatprep.subr.mxu0 0.0
  %3362 = vmatpush1.msra.mxu0 0.0
  %3363 = vmatprep.subr.mxu0 0.0
  %3364 = vmatpush1.msra.mxu0 0.0
  %3365 = vmatprep.subr.mxu0 0.0
  %3366 = vmatpush1.msra.mxu0 0.0
  %3367 = vmatprep.subr.mxu0 0.0
  %3368 = vmatpush1.msra.mxu0 0.0
  %3369 = vmatprep.subr.mxu0 0.0
  %3370 = vmatpush1.msra.mxu0 0.0
  %3371 = vmatprep.subr.mxu0 0.0
  %3372 = vmatpush1.msra.mxu0 0.0
  %3373 = vmatprep.subr.mxu0 0.0
  %3374 = vmatpush1.msra.mxu0 0.0
  %3375 = vmatprep.subr.mxu0 0.0
  %3376 = vmatpush1.msra.mxu0 0.0
  %3377 = vmatprep.subr.mxu0 0.0
  %3378 = vmatpush1.msra.mxu0 0.0
  %3379 = vmatprep.subr.mxu0 0.0
  %3380 = vmatpush1.msra.mxu0 0.0
  %3381 = vmatprep.subr.mxu0 0.0
  %3382 = vmatpush1.msra.mxu0 0.0
  %3383 = vmatprep.subr.mxu0 0.0
  %3384 = vmatpush1.msra.mxu0 0.0
  %3385 = vmatprep.subr.mxu0 0.0
  %3386 = vmatpush1.msra.mxu0 0.0
  %3387 = vmatprep.subr.mxu0 0.0
  %3388 = vmatpush1.msra.mxu0 0.0
  %3389 = vmatprep.subr.mxu0 0.0
  %3390 = vmatpush1.msra.mxu0 0.0
  %3391 = vmatprep.subr.mxu0 0.0
  %3392 = vmatpush1.msra.mxu0 0.0
  %3393 = vmatprep.subr.mxu0 0.0
  %3394 = vmatpush1.msra.mxu0 0.0
  %3395 = vmatprep.subr.mxu0 0.0
  %3396 = vmatpush1.msra.mxu0 0.0
  %3397 = vmatprep.subr.mxu0 0.0
  %3398 = vmatpush1.msra.mxu0 0.0
  %3399 = vmatprep.subr.mxu0 0.0
  %3400 = vmatpush1.msra.mxu0 0.0
  %3401 = vmatprep.mubr.f32.mxu0 0.0
  %3402 = vmatmul.mubr.f32.gmra.mrb[0].mxu0 %v3335
  %v3403 = vpop.f32.mrb[0].mxu0
  %v3404 = vadd.f32 0.0, %v3403
  %v3405 = vpop.f32.mrb[0].mxu0
  %v3406 = vadd.f32 0.0, %v3405
  %3407 = vdwg.mxu0
  %v3408 = vadd.f32 %v2180, %v3404
  %v3409 = vadd.f32 %v2181, %v3406
  %v3410 = vxor.u32 %v3408, 2147483648
  %v3411 = vmul.f32 %v3410, 1.442695
  %v3412 = vpow.pop %v3411
  %v3413 = vadd.f32 %v3412, 1.0
  %v3414 = vrcp.pop %v3413
  %v3415 = vmul.f32 1.0, %v3414
  %v3416 = vtanh.pop %v3408
  %3418 = vrot.lane.b32.xlu0 %v3331, 32
  %v3419 = vpop.permute.xlu0 %3418
  %v3421 = vmul.f32 %v3415, %v3419
  %3423 = vrot.lane.b32.xlu0 %v3416, 32
  %v3424 = vpop.permute.xlu0 %3423
  %v3426 = vmul.f32 %v3415, %v3424
  %3428 = vrot.lane.b32.xlu0 %v3426, 32
  %v3429 = vpop.permute.xlu0 %3428
  %v3431 = vadd.f32 %v3421, %v3429
  %v3432 = vtanh.pop %v3431
  %3434 = vrot.lane.b32.xlu0 %v3432, 32
  %v3435 = vpop.permute.xlu0 %3434
  %v3437 = vmul.f32 %v3415, %v3435
  %v3438 = vadd.f32 %v3431, 0.0
  %v3439 = vadd.f32 %v3437, 0.0
  %v3440 = vxor.u32 %v3409, 2147483648
  %v3441 = vmul.f32 %v3440, 1.442695
  %v3442 = vpow.pop %v3441
  %v3443 = vadd.f32 %v3442, 1.0
  %v3444 = vrcp.pop %v3443
  %v3445 = vmul.f32 1.0, %v3444
  %v3446 = vtanh.pop %v3409
  %v3447 = vmul.f32 %v3445, %v3419
  %3449 = vrot.lane.b32.xlu0 %v3446, 32
  %v3450 = vpop.permute.xlu0 %3449
  %v3452 = vmul.f32 %v3445, %v3450
  %3454 = vrot.lane.b32.xlu0 %v3452, 32
  %v3455 = vpop.permute.xlu0 %3454
  %v3457 = vadd.f32 %v3447, %v3455
  %v3458 = vtanh.pop %v3457
  %3460 = vrot.lane.b32.xlu0 %v3458, 32
  %v3461 = vpop.permute.xlu0 %3460
  %v3463 = vmul.f32 %v3445, %v3461
  %v3464 = vadd.f32 %v3438, %v3457
  %v3465 = vadd.f32 %v3439, %v3463
  %v3466 = vmul.f32 %v3464, 0.5
  %v3467 = vmul.f32 %v3465, 0.5
  %3469 = vrot.lane.b32.xlu0 %v3467, 64
  %v3470 = vpop.permute.xlu0 %3469
  %v3471 = vsel %vm80, %v3470, 0
  %3473 = vmatprep.subr.mxu0 0.0
  %3474 = vmatpush1.msra.mxu0 %v2321
  %3475 = vmatprep.subr.mxu0 0.0
  %3476 = vmatpush1.msra.mxu0 %v2323
  %3477 = vmatprep.subr.mxu0 0.0
  %3478 = vmatpush1.msra.mxu0 %v2325
  %3479 = vmatprep.subr.mxu0 0.0
  %3480 = vmatpush1.msra.mxu0 %v2327
  %3481 = vmatprep.subr.mxu0 0.0
  %3482 = vmatpush1.msra.mxu0 0.0
  %3483 = vmatprep.subr.mxu0 0.0
  %3484 = vmatpush1.msra.mxu0 0.0
  %3485 = vmatprep.subr.mxu0 0.0
  %3486 = vmatpush1.msra.mxu0 0.0
  %3487 = vmatprep.subr.mxu0 0.0
  %3488 = vmatpush1.msra.mxu0 0.0
  %3489 = vmatprep.subr.mxu0 0.0
  %3490 = vmatpush1.msra.mxu0 0.0
  %3491 = vmatprep.subr.mxu0 0.0
  %3492 = vmatpush1.msra.mxu0 0.0
  %3493 = vmatprep.subr.mxu0 0.0
  %3494 = vmatpush1.msra.mxu0 0.0
  %3495 = vmatprep.subr.mxu0 0.0
  %3496 = vmatpush1.msra.mxu0 0.0
  %3497 = vmatprep.subr.mxu0 0.0
  %3498 = vmatpush1.msra.mxu0 0.0
  %3499 = vmatprep.subr.mxu0 0.0
  %3500 = vmatpush1.msra.mxu0 0.0
  %3501 = vmatprep.subr.mxu0 0.0
  %3502 = vmatpush1.msra.mxu0 0.0
  %3503 = vmatprep.subr.mxu0 0.0
  %3504 = vmatpush1.msra.mxu0 0.0
  %3505 = vmatprep.subr.mxu0 0.0
  %3506 = vmatpush1.msra.mxu0 0.0
  %3507 = vmatprep.subr.mxu0 0.0
  %3508 = vmatpush1.msra.mxu0 0.0
  %3509 = vmatprep.subr.mxu0 0.0
  %3510 = vmatpush1.msra.mxu0 0.0
  %3511 = vmatprep.subr.mxu0 0.0
  %3512 = vmatpush1.msra.mxu0 0.0
  %3513 = vmatprep.subr.mxu0 0.0
  %3514 = vmatpush1.msra.mxu0 0.0
  %3515 = vmatprep.subr.mxu0 0.0
  %3516 = vmatpush1.msra.mxu0 0.0
  %3517 = vmatprep.subr.mxu0 0.0
  %3518 = vmatpush1.msra.mxu0 0.0
  %3519 = vmatprep.subr.mxu0 0.0
  %3520 = vmatpush1.msra.mxu0 0.0
  %3521 = vmatprep.subr.mxu0 0.0
  %3522 = vmatpush1.msra.mxu0 0.0
  %3523 = vmatprep.subr.mxu0 0.0
  %3524 = vmatpush1.msra.mxu0 0.0
  %3525 = vmatprep.subr.mxu0 0.0
  %3526 = vmatpush1.msra.mxu0 0.0
  %3527 = vmatprep.subr.mxu0 0.0
  %3528 = vmatpush1.msra.mxu0 0.0
  %3529 = vmatprep.subr.mxu0 0.0
  %3530 = vmatpush1.msra.mxu0 0.0
  %3531 = vmatprep.subr.mxu0 0.0
  %3532 = vmatpush1.msra.mxu0 0.0
  %3533 = vmatprep.subr.mxu0 0.0
  %3534 = vmatpush1.msra.mxu0 0.0
  %3535 = vmatprep.subr.mxu0 0.0
  %3536 = vmatpush1.msra.mxu0 0.0
  %3537 = vmatprep.mubr.f32.mxu0 0.0
  %3538 = vmatmul.mubr.f32.gmra.mrb[0].mxu0 %v3471
  %v3539 = vpop.f32.mrb[0].mxu0
  %v3540 = vadd.f32 %v2333, %v3539
  %v3541 = vpop.f32.mrb[0].mxu0
  %3542 = vdwg.mxu0
  %v3543 = vmax.f32 %v3540, 0.0
  %v3544 = vlaneseq
  %v3545 = vshrl.u32 %v3544, 7
  %v3546 = vsub.s32 0, %v3545
  %v3547 = vrot.slane %v3543, %v3546
  %3549 = vbcast.lane.b32.xlu0 %v3547, 256
  %v3550 = vpop.permute.xlu0 %3549
  %s3552 = sor.u32 256, 8
  %3553 = vbcast.lane.b32.xlu0 %v3547, %s3552
  %v3554 = vpop.permute.xlu0 %3553
  %v3555 = vlaneseq
  %v3556 = vshrl.u32 %v3555, 7
  %v3557 = vsub.s32 1, %v3556
  %v3558 = vrot.slane %v3543, %v3557
  %3560 = vbcast.lane.b32.xlu0 %v3558, 256
  %v3561 = vpop.permute.xlu0 %3560
  %s3563 = sor.u32 256, 8
  %3564 = vbcast.lane.b32.xlu0 %v3558, %s3563
  %v3565 = vpop.permute.xlu0 %3564
  %v3566 = vlaneseq
  %v3567 = vshrl.u32 %v3566, 7
  %v3568 = vsub.s32 2, %v3567
  %v3569 = vrot.slane %v3543, %v3568
  %3571 = vbcast.lane.b32.xlu0 %v3569, 256
  %v3572 = vpop.permute.xlu0 %3571
  %s3574 = sor.u32 256, 8
  %3575 = vbcast.lane.b32.xlu0 %v3569, %s3574
  %v3576 = vpop.permute.xlu0 %3575
  %v3577 = vlaneseq
  %v3578 = vshrl.u32 %v3577, 7
  %v3579 = vsub.s32 3, %v3578
  %v3580 = vrot.slane %v3543, %v3579
  %3582 = vbcast.lane.b32.xlu0 %v3580, 256
  %v3583 = vpop.permute.xlu0 %3582
  %s3585 = sor.u32 256, 8
  %3586 = vbcast.lane.b32.xlu0 %v3580, %s3585
  %v3587 = vpop.permute.xlu0 %3586
  %v3588 = vlaneseq
  %v3589 = vshrl.u32 %v3588, 7
  %v3590 = vsub.s32 4, %v3589
  %v3591 = vrot.slane %v3543, %v3590
  %3593 = vbcast.lane.b32.xlu0 %v3591, 256
  %v3594 = vpop.permute.xlu0 %3593
  %s3596 = sor.u32 256, 8
  %3597 = vbcast.lane.b32.xlu0 %v3591, %s3596
  %v3598 = vpop.permute.xlu0 %3597
  %v3599 = vlaneseq
  %v3600 = vshrl.u32 %v3599, 7
  %v3601 = vsub.s32 5, %v3600
  %v3602 = vrot.slane %v3543, %v3601
  %3604 = vbcast.lane.b32.xlu0 %v3602, 256
  %v3605 = vpop.permute.xlu0 %3604
  %s3607 = sor.u32 256, 8
  %3608 = vbcast.lane.b32.xlu0 %v3602, %s3607
  %v3609 = vpop.permute.xlu0 %3608
  %v3610 = vlaneseq
  %v3611 = vshrl.u32 %v3610, 7
  %v3612 = vsub.s32 6, %v3611
  %v3613 = vrot.slane %v3543, %v3612
  %3615 = vbcast.lane.b32.xlu0 %v3613, 256
  %v3616 = vpop.permute.xlu0 %3615
  %s3618 = sor.u32 256, 8
  %3619 = vbcast.lane.b32.xlu0 %v3613, %s3618
  %v3620 = vpop.permute.xlu0 %3619
  %v3621 = vlaneseq
  %v3622 = vshrl.u32 %v3621, 7
  %v3623 = vsub.s32 7, %v3622
  %v3624 = vrot.slane %v3543, %v3623
  %3626 = vbcast.lane.b32.xlu0 %v3624, 256
  %v3627 = vpop.permute.xlu0 %3626
  %s3629 = sor.u32 256, 8
  %3630 = vbcast.lane.b32.xlu0 %v3624, %s3629
  %v3631 = vpop.permute.xlu0 %3630
  %v3632 = vadd.f32 %v274, %v3550
  %v3633 = vadd.f32 %v275, %v3554
  %v3634 = vadd.f32 %v276, %v3561
  %v3635 = vadd.f32 %v277, %v3565
  %v3636 = vadd.f32 %v278, %v3572
  %v3637 = vadd.f32 %v279, %v3576
  %v3638 = vadd.f32 %v280, %v3583
  %v3639 = vadd.f32 %v281, %v3587
  %v3640 = vadd.f32 %v282, %v3594
  %v3641 = vadd.f32 %v283, %v3598
  %v3642 = vadd.f32 %v284, %v3605
  %v3643 = vadd.f32 %v285, %v3609
  %v3644 = vadd.f32 %v286, %v3616
  %v3645 = vadd.f32 %v287, %v3620
  %v3646 = vadd.f32 %v288, %v3627
  %v3647 = vadd.f32 %v289, %v3631
  %v3648 = vtanh.pop %v3632
  %v3649 = vtanh.pop %v3633
  %v3650 = vtanh.pop %v3634
  %v3651 = vtanh.pop %v3635
  %v3652 = vtanh.pop %v3636
  %v3653 = vtanh.pop %v3637
  %v3654 = vtanh.pop %v3638
  %v3655 = vtanh.pop %v3639
  %v3656 = vtanh.pop %v3640
  %v3657 = vtanh.pop %v3641
  %v3658 = vtanh.pop %v3642
  %v3659 = vtanh.pop %v3643
  %v3660 = vtanh.pop %v3644
  %v3661 = vtanh.pop %v3645
  %v3662 = vtanh.pop %v3646
  %v3663 = vtanh.pop %v3647
  %v3664 = vmul.f32 %v3648, %v636
  %v3665 = vmul.f32 %v3649, %v636
  %v3666 = vmul.f32 %v3650, %v636
  %v3667 = vmul.f32 %v3651, %v636
  %v3668 = vmul.f32 %v3652, %v636
  %v3669 = vmul.f32 %v3653, %v636
  %v3670 = vmul.f32 %v3654, %v636
  %v3671 = vmul.f32 %v3655, %v636
  %v3672 = vmul.f32 %v3656, %v636
  %v3673 = vmul.f32 %v3657, %v636
  %v3674 = vmul.f32 %v3658, %v636
  %v3675 = vmul.f32 %v3659, %v636
  %v3676 = vmul.f32 %v3660, %v636
  %v3677 = vmul.f32 %v3661, %v636
  %v3678 = vmul.f32 %v3662, %v636
  %v3679 = vmul.f32 %v3663, %v636
  %3696 = vrot.lane.b32.xlu0 %v3664, 112
  %v3697 = vpop.permute.xlu0 %3696
  %3698 = vrot.lane.b32.xlu0 %v3665, 112
  %v3699 = vpop.permute.xlu0 %3698
  %3700 = vrot.lane.b32.xlu0 %v3666, 112
  %v3701 = vpop.permute.xlu0 %3700
  %3702 = vrot.lane.b32.xlu0 %v3667, 112
  %v3703 = vpop.permute.xlu0 %3702
  %3704 = vrot.lane.b32.xlu0 %v3668, 112
  %v3705 = vpop.permute.xlu0 %3704
  %3706 = vrot.lane.b32.xlu0 %v3669, 112
  %v3707 = vpop.permute.xlu0 %3706
  %3708 = vrot.lane.b32.xlu0 %v3670, 112
  %v3709 = vpop.permute.xlu0 %3708
  %3710 = vrot.lane.b32.xlu0 %v3671, 112
  %v3711 = vpop.permute.xlu0 %3710
  %3712 = vrot.lane.b32.xlu0 %v3672, 112
  %v3713 = vpop.permute.xlu0 %3712
  %3714 = vrot.lane.b32.xlu0 %v3673, 112
  %v3715 = vpop.permute.xlu0 %3714
  %3716 = vrot.lane.b32.xlu0 %v3674, 112
  %v3717 = vpop.permute.xlu0 %3716
  %3718 = vrot.lane.b32.xlu0 %v3675, 112
  %v3719 = vpop.permute.xlu0 %3718
  %3720 = vrot.lane.b32.xlu0 %v3676, 112
  %v3721 = vpop.permute.xlu0 %3720
  %3722 = vrot.lane.b32.xlu0 %v3677, 112
  %v3723 = vpop.permute.xlu0 %3722
  %3724 = vrot.lane.b32.xlu0 %v3678, 112
  %v3725 = vpop.permute.xlu0 %3724
  %3726 = vrot.lane.b32.xlu0 %v3679, 112
  %v3727 = vpop.permute.xlu0 %3726
  %v3744 = vsel %vm669, %v3697, 0.0
  %3745 = vadd.xlane.f32.xlu0 %v3744
  %v3746 = vpop.xlane.xlu0 %3745
  %v3747 = vsel %vm669, %v3699, 0.0
  %3748 = vadd.xlane.f32.xlu0 %v3747
  %v3749 = vpop.xlane.xlu0 %3748
  %v3750 = vsel %vm669, %v3701, 0.0
  %3751 = vadd.xlane.f32.xlu0 %v3750
  %v3752 = vpop.xlane.xlu0 %3751
  %v3753 = vsel %vm669, %v3703, 0.0
  %3754 = vadd.xlane.f32.xlu0 %v3753
  %v3755 = vpop.xlane.xlu0 %3754
  %v3756 = vsel %vm669, %v3705, 0.0
  %3757 = vadd.xlane.f32.xlu0 %v3756
  %v3758 = vpop.xlane.xlu0 %3757
  %v3759 = vsel %vm669, %v3707, 0.0
  %3760 = vadd.xlane.f32.xlu0 %v3759
  %v3761 = vpop.xlane.xlu0 %3760
  %v3762 = vsel %vm669, %v3709, 0.0
  %3763 = vadd.xlane.f32.xlu0 %v3762
  %v3764 = vpop.xlane.xlu0 %3763
  %v3765 = vsel %vm669, %v3711, 0.0
  %3766 = vadd.xlane.f32.xlu0 %v3765
  %v3767 = vpop.xlane.xlu0 %3766
  %v3768 = vsel %vm669, %v3713, 0.0
  %3769 = vadd.xlane.f32.xlu0 %v3768
  %v3770 = vpop.xlane.xlu0 %3769
  %v3771 = vsel %vm669, %v3715, 0.0
  %3772 = vadd.xlane.f32.xlu0 %v3771
  %v3773 = vpop.xlane.xlu0 %3772
  %v3774 = vsel %vm669, %v3717, 0.0
  %3775 = vadd.xlane.f32.xlu0 %v3774
  %v3776 = vpop.xlane.xlu0 %3775
  %v3777 = vsel %vm669, %v3719, 0.0
  %3778 = vadd.xlane.f32.xlu0 %v3777
  %v3779 = vpop.xlane.xlu0 %3778
  %v3780 = vsel %vm669, %v3721, 0.0
  %3781 = vadd.xlane.f32.xlu0 %v3780
  %v3782 = vpop.xlane.xlu0 %3781
  %v3783 = vsel %vm669, %v3723, 0.0
  %3784 = vadd.xlane.f32.xlu0 %v3783
  %v3785 = vpop.xlane.xlu0 %3784
  %v3786 = vsel %vm669, %v3725, 0.0
  %3787 = vadd.xlane.f32.xlu0 %v3786
  %v3788 = vpop.xlane.xlu0 %3787
  %v3789 = vsel %vm669, %v3727, 0.0
  %3790 = vadd.xlane.f32.xlu0 %v3789
  %v3791 = vpop.xlane.xlu0 %3790
  %v3792 = vadd.f32 %v3746, %v2659
  %v3793 = vadd.f32 %v3749, %v2659
  %v3794 = vadd.f32 %v3752, %v2659
  %v3795 = vadd.f32 %v3755, %v2659
  %v3796 = vadd.f32 %v3758, %v2659
  %v3797 = vadd.f32 %v3761, %v2659
  %v3798 = vadd.f32 %v3764, %v2659
  %v3799 = vadd.f32 %v3767, %v2659
  %v3800 = vadd.f32 %v3770, %v2659
  %v3801 = vadd.f32 %v3773, %v2659
  %v3802 = vadd.f32 %v3776, %v2659
  %v3803 = vadd.f32 %v3779, %v2659
  %v3804 = vadd.f32 %v3782, %v2659
  %v3805 = vadd.f32 %v3785, %v2659
  %v3806 = vadd.f32 %v3788, %v2659
  %v3807 = vadd.f32 %v3791, %v2659
  %v3808 = vmax.f32 %v3792, 0.0
  %v3809 = vmax.f32 %v3793, 0.0
  %v3810 = vmax.f32 %v3794, 0.0
  %v3811 = vmax.f32 %v3795, 0.0
  %v3812 = vmax.f32 %v3796, 0.0
  %v3813 = vmax.f32 %v3797, 0.0
  %v3814 = vmax.f32 %v3798, 0.0
  %v3815 = vmax.f32 %v3799, 0.0
  %v3816 = vmax.f32 %v3800, 0.0
  %v3817 = vmax.f32 %v3801, 0.0
  %v3818 = vmax.f32 %v3802, 0.0
  %v3819 = vmax.f32 %v3803, 0.0
  %v3820 = vmax.f32 %v3804, 0.0
  %v3821 = vmax.f32 %v3805, 0.0
  %v3822 = vmax.f32 %v3806, 0.0
  %v3823 = vmax.f32 %v3807, 0.0
  %v3840 = vlaneseq
  %v3841 = vshrl.u32 %v3840, 7
  %v3842 = vsub.s32 %v868, %v3841
  %v3843 = vrot.slane %v3808, %v3842
  %v3844 = vlaneseq
  %v3845 = vshrl.u32 %v3844, 7
  %v3846 = vsub.s32 %v873, %v3845
  %v3847 = vrot.slane %v3809, %v3846
  %v3848 = vsel %vm878, %v3847, %v3843
  %v3849 = vlaneseq
  %v3850 = vshrl.u32 %v3849, 7
  %v3851 = vsub.s32 %v868, %v3850
  %v3852 = vrot.slane %v3810, %v3851
  %v3853 = vlaneseq
  %v3854 = vshrl.u32 %v3853, 7
  %v3855 = vsub.s32 %v873, %v3854
  %v3856 = vrot.slane %v3811, %v3855
  %v3857 = vsel %vm878, %v3856, %v3852
  %v3858 = vlaneseq
  %v3859 = vshrl.u32 %v3858, 7
  %v3860 = vsub.s32 %v868, %v3859
  %v3861 = vrot.slane %v3812, %v3860
  %v3862 = vlaneseq
  %v3863 = vshrl.u32 %v3862, 7
  %v3864 = vsub.s32 %v873, %v3863
  %v3865 = vrot.slane %v3813, %v3864
  %v3866 = vsel %vm878, %v3865, %v3861
  %v3867 = vlaneseq
  %v3868 = vshrl.u32 %v3867, 7
  %v3869 = vsub.s32 %v868, %v3868
  %v3870 = vrot.slane %v3814, %v3869
  %v3871 = vlaneseq
  %v3872 = vshrl.u32 %v3871, 7
  %v3873 = vsub.s32 %v873, %v3872
  %v3874 = vrot.slane %v3815, %v3873
  %v3875 = vsel %vm878, %v3874, %v3870
  %v3876 = vlaneseq
  %v3877 = vshrl.u32 %v3876, 7
  %v3878 = vsub.s32 %v868, %v3877
  %v3879 = vrot.slane %v3816, %v3878
  %v3880 = vlaneseq
  %v3881 = vshrl.u32 %v3880, 7
  %v3882 = vsub.s32 %v873, %v3881
  %v3883 = vrot.slane %v3817, %v3882
  %v3884 = vsel %vm878, %v3883, %v3879
  %v3885 = vlaneseq
  %v3886 = vshrl.u32 %v3885, 7
  %v3887 = vsub.s32 %v868, %v3886
  %v3888 = vrot.slane %v3818, %v3887
  %v3889 = vlaneseq
  %v3890 = vshrl.u32 %v3889, 7
  %v3891 = vsub.s32 %v873, %v3890
  %v3892 = vrot.slane %v3819, %v3891
  %v3893 = vsel %vm878, %v3892, %v3888
  %v3894 = vlaneseq
  %v3895 = vshrl.u32 %v3894, 7
  %v3896 = vsub.s32 %v868, %v3895
  %v3897 = vrot.slane %v3820, %v3896
  %v3898 = vlaneseq
  %v3899 = vshrl.u32 %v3898, 7
  %v3900 = vsub.s32 %v873, %v3899
  %v3901 = vrot.slane %v3821, %v3900
  %v3902 = vsel %vm878, %v3901, %v3897
  %v3903 = vlaneseq
  %v3904 = vshrl.u32 %v3903, 7
  %v3905 = vsub.s32 %v868, %v3904
  %v3906 = vrot.slane %v3822, %v3905
  %v3907 = vlaneseq
  %v3908 = vshrl.u32 %v3907, 7
  %v3909 = vsub.s32 %v873, %v3908
  %v3910 = vrot.slane %v3823, %v3909
  %v3911 = vsel %vm878, %v3910, %v3906
  %v3912 = vsel %vm1015, %v3857, %v3848
  %v3913 = vsel %vm1017, %v3866, %v3912
  %v3914 = vsel %vm1019, %v3875, %v3913
  %v3915 = vsel %vm1021, %v3884, %v3914
  %v3916 = vsel %vm1023, %v3893, %v3915
  %v3917 = vsel %vm1025, %v3902, %v3916
  %v3918 = vsel %vm1027, %v3911, %v3917
  %v3920 = vsel %vm669, %v3918, -inf
  %3921 = vmax.xlane.f32.xlu0 %v3920
  %v3922 = vpop.xlane.xlu0 %3921
  %v3924 = vlaneseq
  %v3925 = vshrl.u32 %v3924, 7
  %v3926 = vsub.s32 0, %v3925
  %v3927 = vrot.slane %v3922, %v3926
  %v3928 = vlaneseq
  %v3929 = vshrl.u32 %v3928, 7
  %v3930 = vsub.s32 1, %v3929
  %v3931 = vrot.slane %v3922, %v3930
  %v3932 = vlaneseq
  %v3933 = vshrl.u32 %v3932, 7
  %v3934 = vsub.s32 2, %v3933
  %v3935 = vrot.slane %v3922, %v3934
  %v3936 = vlaneseq
  %v3937 = vshrl.u32 %v3936, 7
  %v3938 = vsub.s32 3, %v3937
  %v3939 = vrot.slane %v3922, %v3938
  %v3940 = vlaneseq
  %v3941 = vshrl.u32 %v3940, 7
  %v3942 = vsub.s32 4, %v3941
  %v3943 = vrot.slane %v3922, %v3942
  %v3944 = vlaneseq
  %v3945 = vshrl.u32 %v3944, 7
  %v3946 = vsub.s32 5, %v3945
  %v3947 = vrot.slane %v3922, %v3946
  %v3948 = vlaneseq
  %v3949 = vshrl.u32 %v3948, 7
  %v3950 = vsub.s32 6, %v3949
  %v3951 = vrot.slane %v3922, %v3950
  %v3952 = vlaneseq
  %v3953 = vshrl.u32 %v3952, 7
  %v3954 = vsub.s32 7, %v3953
  %v3955 = vrot.slane %v3922, %v3954
  %v3964 = vsub.f32 %v3808, %v3927
  %v3965 = vsub.f32 %v3809, %v3927
  %v3966 = vsub.f32 %v3810, %v3931
  %v3967 = vsub.f32 %v3811, %v3931
  %v3968 = vsub.f32 %v3812, %v3935
  %v3969 = vsub.f32 %v3813, %v3935
  %v3970 = vsub.f32 %v3814, %v3939
  %v3971 = vsub.f32 %v3815, %v3939
  %v3972 = vsub.f32 %v3816, %v3943
  %v3973 = vsub.f32 %v3817, %v3943
  %v3974 = vsub.f32 %v3818, %v3947
  %v3975 = vsub.f32 %v3819, %v3947
  %v3976 = vsub.f32 %v3820, %v3951
  %v3977 = vsub.f32 %v3821, %v3951
  %v3978 = vsub.f32 %v3822, %v3955
  %v3979 = vsub.f32 %v3823, %v3955
  %v3980 = vmul.f32 %v3964, 1.442695
  %v3981 = vpow.pop %v3980
  %v3982 = vmul.f32 %v3965, 1.442695
  %v3983 = vpow.pop %v3982
  %v3984 = vmul.f32 %v3966, 1.442695
  %v3985 = vpow.pop %v3984
  %v3986 = vmul.f32 %v3967, 1.442695
  %v3987 = vpow.pop %v3986
  %v3988 = vmul.f32 %v3968, 1.442695
  %v3989 = vpow.pop %v3988
  %v3990 = vmul.f32 %v3969, 1.442695
  %v3991 = vpow.pop %v3990
  %v3992 = vmul.f32 %v3970, 1.442695
  %v3993 = vpow.pop %v3992
  %v3994 = vmul.f32 %v3971, 1.442695
  %v3995 = vpow.pop %v3994
  %v3996 = vmul.f32 %v3972, 1.442695
  %v3997 = vpow.pop %v3996
  %v3998 = vmul.f32 %v3973, 1.442695
  %v3999 = vpow.pop %v3998
  %v4000 = vmul.f32 %v3974, 1.442695
  %v4001 = vpow.pop %v4000
  %v4002 = vmul.f32 %v3975, 1.442695
  %v4003 = vpow.pop %v4002
  %v4004 = vmul.f32 %v3976, 1.442695
  %v4005 = vpow.pop %v4004
  %v4006 = vmul.f32 %v3977, 1.442695
  %v4007 = vpow.pop %v4006
  %v4008 = vmul.f32 %v3978, 1.442695
  %v4009 = vpow.pop %v4008
  %v4010 = vmul.f32 %v3979, 1.442695
  %v4011 = vpow.pop %v4010
  %4028 = vset.pattern.permute.xlu0 0
  %4029 = vperm.xlu0 %4028, %v3981
  %v4030 = vpop.permute.xlu0 %4029
  %4031 = vset.pattern.permute.xlu0 0
  %4032 = vperm.xlu0 %4031, %v3983
  %v4033 = vpop.permute.xlu0 %4032
  %4034 = vset.pattern.permute.xlu0 0
  %4035 = vperm.xlu0 %4034, %v3985
  %v4036 = vpop.permute.xlu0 %4035
  %4037 = vset.pattern.permute.xlu0 0
  %4038 = vperm.xlu0 %4037, %v3987
  %v4039 = vpop.permute.xlu0 %4038
  %4040 = vset.pattern.permute.xlu0 0
  %4041 = vperm.xlu0 %4040, %v3989
  %v4042 = vpop.permute.xlu0 %4041
  %4043 = vset.pattern.permute.xlu0 0
  %4044 = vperm.xlu0 %4043, %v3991
  %v4045 = vpop.permute.xlu0 %4044
  %4046 = vset.pattern.permute.xlu0 0
  %4047 = vperm.xlu0 %4046, %v3993
  %v4048 = vpop.permute.xlu0 %4047
  %4049 = vset.pattern.permute.xlu0 0
  %4050 = vperm.xlu0 %4049, %v3995
  %v4051 = vpop.permute.xlu0 %4050
  %4052 = vset.pattern.permute.xlu0 0
  %4053 = vperm.xlu0 %4052, %v3997
  %v4054 = vpop.permute.xlu0 %4053
  %4055 = vset.pattern.permute.xlu0 0
  %4056 = vperm.xlu0 %4055, %v3999
  %v4057 = vpop.permute.xlu0 %4056
  %4058 = vset.pattern.permute.xlu0 0
  %4059 = vperm.xlu0 %4058, %v4001
  %v4060 = vpop.permute.xlu0 %4059
  %4061 = vset.pattern.permute.xlu0 0
  %4062 = vperm.xlu0 %4061, %v4003
  %v4063 = vpop.permute.xlu0 %4062
  %4064 = vset.pattern.permute.xlu0 0
  %4065 = vperm.xlu0 %4064, %v4005
  %v4066 = vpop.permute.xlu0 %4065
  %4067 = vset.pattern.permute.xlu0 0
  %4068 = vperm.xlu0 %4067, %v4007
  %v4069 = vpop.permute.xlu0 %4068
  %4070 = vset.pattern.permute.xlu0 0
  %4071 = vperm.xlu0 %4070, %v4009
  %v4072 = vpop.permute.xlu0 %4071
  %4073 = vset.pattern.permute.xlu0 0
  %4074 = vperm.xlu0 %4073, %v4011
  %v4075 = vpop.permute.xlu0 %4074
  %v4076 = vlaneseq
  %v4077 = vshrl.u32 %v4076, 7
  %v4078 = vsub.s32 %v868, %v4077
  %v4079 = vrot.slane %v4030, %v4078
  %v4080 = vlaneseq
  %v4081 = vshrl.u32 %v4080, 7
  %v4082 = vsub.s32 %v873, %v4081
  %v4083 = vrot.slane %v4033, %v4082
  %v4084 = vsel %vm878, %v4083, %v4079
  %v4085 = vlaneseq
  %v4086 = vshrl.u32 %v4085, 7
  %v4087 = vsub.s32 %v868, %v4086
  %v4088 = vrot.slane %v4036, %v4087
  %v4089 = vlaneseq
  %v4090 = vshrl.u32 %v4089, 7
  %v4091 = vsub.s32 %v873, %v4090
  %v4092 = vrot.slane %v4039, %v4091
  %v4093 = vsel %vm878, %v4092, %v4088
  %v4094 = vlaneseq
  %v4095 = vshrl.u32 %v4094, 7
  %v4096 = vsub.s32 %v868, %v4095
  %v4097 = vrot.slane %v4042, %v4096
  %v4098 = vlaneseq
  %v4099 = vshrl.u32 %v4098, 7
  %v4100 = vsub.s32 %v873, %v4099
  %v4101 = vrot.slane %v4045, %v4100
  %v4102 = vsel %vm878, %v4101, %v4097
  %v4103 = vlaneseq
  %v4104 = vshrl.u32 %v4103, 7
  %v4105 = vsub.s32 %v868, %v4104
  %v4106 = vrot.slane %v4048, %v4105
  %v4107 = vlaneseq
  %v4108 = vshrl.u32 %v4107, 7
  %v4109 = vsub.s32 %v873, %v4108
  %v4110 = vrot.slane %v4051, %v4109
  %v4111 = vsel %vm878, %v4110, %v4106
  %v4112 = vlaneseq
  %v4113 = vshrl.u32 %v4112, 7
  %v4114 = vsub.s32 %v868, %v4113
  %v4115 = vrot.slane %v4054, %v4114
  %v4116 = vlaneseq
  %v4117 = vshrl.u32 %v4116, 7
  %v4118 = vsub.s32 %v873, %v4117
  %v4119 = vrot.slane %v4057, %v4118
  %v4120 = vsel %vm878, %v4119, %v4115
  %v4121 = vlaneseq
  %v4122 = vshrl.u32 %v4121, 7
  %v4123 = vsub.s32 %v868, %v4122
  %v4124 = vrot.slane %v4060, %v4123
  %v4125 = vlaneseq
  %v4126 = vshrl.u32 %v4125, 7
  %v4127 = vsub.s32 %v873, %v4126
  %v4128 = vrot.slane %v4063, %v4127
  %v4129 = vsel %vm878, %v4128, %v4124
  %v4130 = vlaneseq
  %v4131 = vshrl.u32 %v4130, 7
  %v4132 = vsub.s32 %v868, %v4131
  %v4133 = vrot.slane %v4066, %v4132
  %v4134 = vlaneseq
  %v4135 = vshrl.u32 %v4134, 7
  %v4136 = vsub.s32 %v873, %v4135
  %v4137 = vrot.slane %v4069, %v4136
  %v4138 = vsel %vm878, %v4137, %v4133
  %v4139 = vlaneseq
  %v4140 = vshrl.u32 %v4139, 7
  %v4141 = vsub.s32 %v868, %v4140
  %v4142 = vrot.slane %v4072, %v4141
  %v4143 = vlaneseq
  %v4144 = vshrl.u32 %v4143, 7
  %v4145 = vsub.s32 %v873, %v4144
  %v4146 = vrot.slane %v4075, %v4145
  %v4147 = vsel %vm878, %v4146, %v4142
  %v4148 = vsel %vm1015, %v4093, %v4084
  %v4149 = vsel %vm1017, %v4102, %v4148
  %v4150 = vsel %vm1019, %v4111, %v4149
  %v4151 = vsel %vm1021, %v4120, %v4150
  %v4152 = vsel %vm1023, %v4129, %v4151
  %v4153 = vsel %vm1025, %v4138, %v4152
  %v4154 = vsel %vm1027, %v4147, %v4153
  %v4156 = vsel %vm669, %v4154, 0.0
  %4157 = vadd.xlane.f32.xlu0 %v4156
  %v4158 = vpop.xlane.xlu0 %4157
  %v4160 = vlaneseq
  %v4161 = vshrl.u32 %v4160, 7
  %v4162 = vsub.s32 0, %v4161
  %v4163 = vrot.slane %v4158, %v4162
  %v4164 = vlaneseq
  %v4165 = vshrl.u32 %v4164, 7
  %v4166 = vsub.s32 1, %v4165
  %v4167 = vrot.slane %v4158, %v4166
  %v4168 = vlaneseq
  %v4169 = vshrl.u32 %v4168, 7
  %v4170 = vsub.s32 2, %v4169
  %v4171 = vrot.slane %v4158, %v4170
  %v4172 = vlaneseq
  %v4173 = vshrl.u32 %v4172, 7
  %v4174 = vsub.s32 3, %v4173
  %v4175 = vrot.slane %v4158, %v4174
  %v4176 = vlaneseq
  %v4177 = vshrl.u32 %v4176, 7
  %v4178 = vsub.s32 4, %v4177
  %v4179 = vrot.slane %v4158, %v4178
  %v4180 = vlaneseq
  %v4181 = vshrl.u32 %v4180, 7
  %v4182 = vsub.s32 5, %v4181
  %v4183 = vrot.slane %v4158, %v4182
  %v4184 = vlaneseq
  %v4185 = vshrl.u32 %v4184, 7
  %v4186 = vsub.s32 6, %v4185
  %v4187 = vrot.slane %v4158, %v4186
  %v4188 = vlaneseq
  %v4189 = vshrl.u32 %v4188, 7
  %v4190 = vsub.s32 7, %v4189
  %v4191 = vrot.slane %v4158, %v4190
  %v4200 = vrcp.pop %v4163
  %v4201 = vmul.f32 %v3981, %v4200
  %v4202 = vmul.f32 %v3983, %v4200
  %v4203 = vrcp.pop %v4167
  %v4204 = vmul.f32 %v3985, %v4203
  %v4205 = vmul.f32 %v3987, %v4203
  %v4206 = vrcp.pop %v4171
  %v4207 = vmul.f32 %v3989, %v4206
  %v4208 = vmul.f32 %v3991, %v4206
  %v4209 = vrcp.pop %v4175
  %v4210 = vmul.f32 %v3993, %v4209
  %v4211 = vmul.f32 %v3995, %v4209
  %v4212 = vrcp.pop %v4179
  %v4213 = vmul.f32 %v3997, %v4212
  %v4214 = vmul.f32 %v3999, %v4212
  %v4215 = vrcp.pop %v4183
  %v4216 = vmul.f32 %v4001, %v4215
  %v4217 = vmul.f32 %v4003, %v4215
  %v4218 = vrcp.pop %v4187
  %v4219 = vmul.f32 %v4005, %v4218
  %v4220 = vmul.f32 %v4007, %v4218
  %v4221 = vrcp.pop %v4191
  %v4222 = vmul.f32 %v4009, %v4221
  %v4223 = vmul.f32 %v4011, %v4221
  %4225 = vset.pattern.permute.xlu0 0
  %4226 = vperm.xlu0 %4225, %v4201
  %v4227 = vpop.permute.xlu0 %4226
  %4230 = vset.pattern.permute.xlu0 0
  %4231 = vperm.xlu0 %4230, %v4202
  %v4232 = vpop.permute.xlu0 %4231
  %4235 = vset.pattern.permute.xlu0 0
  %4236 = vperm.xlu0 %4235, %v4204
  %v4237 = vpop.permute.xlu0 %4236
  %4240 = vset.pattern.permute.xlu0 0
  %4241 = vperm.xlu0 %4240, %v4205
  %v4242 = vpop.permute.xlu0 %4241
  %4245 = vset.pattern.permute.xlu0 0
  %4246 = vperm.xlu0 %4245, %v4207
  %v4247 = vpop.permute.xlu0 %4246
  %4250 = vset.pattern.permute.xlu0 0
  %4251 = vperm.xlu0 %4250, %v4208
  %v4252 = vpop.permute.xlu0 %4251
  %4255 = vset.pattern.permute.xlu0 0
  %4256 = vperm.xlu0 %4255, %v4210
  %v4257 = vpop.permute.xlu0 %4256
  %4260 = vset.pattern.permute.xlu0 0
  %4261 = vperm.xlu0 %4260, %v4211
  %v4262 = vpop.permute.xlu0 %4261
  %4265 = vset.pattern.permute.xlu0 0
  %4266 = vperm.xlu0 %4265, %v4213
  %v4267 = vpop.permute.xlu0 %4266
  %4270 = vset.pattern.permute.xlu0 0
  %4271 = vperm.xlu0 %4270, %v4214
  %v4272 = vpop.permute.xlu0 %4271
  %4275 = vset.pattern.permute.xlu0 0
  %4276 = vperm.xlu0 %4275, %v4216
  %v4277 = vpop.permute.xlu0 %4276
  %4280 = vset.pattern.permute.xlu0 0
  %4281 = vperm.xlu0 %4280, %v4217
  %v4282 = vpop.permute.xlu0 %4281
  %4285 = vset.pattern.permute.xlu0 0
  %4286 = vperm.xlu0 %4285, %v4219
  %v4287 = vpop.permute.xlu0 %4286
  %4290 = vset.pattern.permute.xlu0 0
  %4291 = vperm.xlu0 %4290, %v4220
  %v4292 = vpop.permute.xlu0 %4291
  %4295 = vset.pattern.permute.xlu0 0
  %4296 = vperm.xlu0 %4295, %v4222
  %v4297 = vpop.permute.xlu0 %4296
  %4300 = vset.pattern.permute.xlu0 0
  %4301 = vperm.xlu0 %4300, %v4223
  %v4302 = vpop.permute.xlu0 %4301
  %v4304 = vmul.f32 %v27, %v4227
  %v4305 = vmul.f32 %v28, %v4232
  %v4306 = vmul.f32 %v29, %v4237
  %v4307 = vmul.f32 %v30, %v4242
  %v4308 = vmul.f32 %v31, %v4247
  %v4309 = vmul.f32 %v32, %v4252
  %v4310 = vmul.f32 %v33, %v4257
  %v4311 = vmul.f32 %v34, %v4262
  %v4312 = vmul.f32 %v35, %v4267
  %v4313 = vmul.f32 %v36, %v4272
  %v4314 = vmul.f32 %v37, %v4277
  %v4315 = vmul.f32 %v38, %v4282
  %v4316 = vmul.f32 %v39, %v4287
  %v4317 = vmul.f32 %v40, %v4292
  %v4318 = vmul.f32 %v41, %v4297
  %v4319 = vmul.f32 %v42, %v4302
  %v4320 = vsel %vm80, %v4304, 0.0
  %v4321 = vsel %vm80, %v4305, 0.0
  %v4322 = vadd.f32 %v4320, %v4321
  %v4323 = vrot.slane %v4322, 4
  %v4324 = vadd.f32 %v4322, %v4323
  %v4325 = vrot.slane %v4324, 2
  %v4326 = vadd.f32 %v4324, %v4325
  %v4327 = vrot.slane %v4326, 1
  %v4328 = vadd.f32 %v4326, %v4327
  %v4329 = vsel %vm80, %v4306, 0.0
  %v4330 = vsel %vm80, %v4307, 0.0
  %v4331 = vadd.f32 %v4329, %v4330
  %v4332 = vrot.slane %v4331, 4
  %v4333 = vadd.f32 %v4331, %v4332
  %v4334 = vrot.slane %v4333, 2
  %v4335 = vadd.f32 %v4333, %v4334
  %v4336 = vrot.slane %v4335, 1
  %v4337 = vadd.f32 %v4335, %v4336
  %v4338 = vsel %vm80, %v4308, 0.0
  %v4339 = vsel %vm80, %v4309, 0.0
  %v4340 = vadd.f32 %v4338, %v4339
  %v4341 = vrot.slane %v4340, 4
  %v4342 = vadd.f32 %v4340, %v4341
  %v4343 = vrot.slane %v4342, 2
  %v4344 = vadd.f32 %v4342, %v4343
  %v4345 = vrot.slane %v4344, 1
  %v4346 = vadd.f32 %v4344, %v4345
  %v4347 = vsel %vm80, %v4310, 0.0
  %v4348 = vsel %vm80, %v4311, 0.0
  %v4349 = vadd.f32 %v4347, %v4348
  %v4350 = vrot.slane %v4349, 4
  %v4351 = vadd.f32 %v4349, %v4350
  %v4352 = vrot.slane %v4351, 2
  %v4353 = vadd.f32 %v4351, %v4352
  %v4354 = vrot.slane %v4353, 1
  %v4355 = vadd.f32 %v4353, %v4354
  %v4356 = vsel %vm80, %v4312, 0.0
  %v4357 = vsel %vm80, %v4313, 0.0
  %v4358 = vadd.f32 %v4356, %v4357
  %v4359 = vrot.slane %v4358, 4
  %v4360 = vadd.f32 %v4358, %v4359
  %v4361 = vrot.slane %v4360, 2
  %v4362 = vadd.f32 %v4360, %v4361
  %v4363 = vrot.slane %v4362, 1
  %v4364 = vadd.f32 %v4362, %v4363
  %v4365 = vsel %vm80, %v4314, 0.0
  %v4366 = vsel %vm80, %v4315, 0.0
  %v4367 = vadd.f32 %v4365, %v4366
  %v4368 = vrot.slane %v4367, 4
  %v4369 = vadd.f32 %v4367, %v4368
  %v4370 = vrot.slane %v4369, 2
  %v4371 = vadd.f32 %v4369, %v4370
  %v4372 = vrot.slane %v4371, 1
  %v4373 = vadd.f32 %v4371, %v4372
  %v4374 = vsel %vm80, %v4316, 0.0
  %v4375 = vsel %vm80, %v4317, 0.0
  %v4376 = vadd.f32 %v4374, %v4375
  %v4377 = vrot.slane %v4376, 4
  %v4378 = vadd.f32 %v4376, %v4377
  %v4379 = vrot.slane %v4378, 2
  %v4380 = vadd.f32 %v4378, %v4379
  %v4381 = vrot.slane %v4380, 1
  %v4382 = vadd.f32 %v4380, %v4381
  %v4383 = vsel %vm80, %v4318, 0.0
  %v4384 = vsel %vm80, %v4319, 0.0
  %v4385 = vadd.f32 %v4383, %v4384
  %v4386 = vrot.slane %v4385, 4
  %v4387 = vadd.f32 %v4385, %v4386
  %v4388 = vrot.slane %v4387, 2
  %v4389 = vadd.f32 %v4387, %v4388
  %v4390 = vrot.slane %v4389, 1
  %v4391 = vadd.f32 %v4389, %v4390
  %v4392 = vrot.slane %v3467, 1
  %v4393 = vrot.slane %v3467, 2
  %v4394 = vrot.slane %v3467, 3
  %v4395 = vrot.slane %v3467, 4
  %v4396 = vrot.slane %v3467, 5
  %v4397 = vrot.slane %v3467, 6
  %v4398 = vrot.slane %v3467, 7
  %4399 = vrot.lane.b32.xlu0 %v4392, 64
  %v4400 = vpop.permute.xlu0 %4399
  %4401 = vrot.lane.b32.xlu0 %v4393, 64
  %v4402 = vpop.permute.xlu0 %4401
  %4403 = vrot.lane.b32.xlu0 %v4394, 64
  %v4404 = vpop.permute.xlu0 %4403
  %4405 = vrot.lane.b32.xlu0 %v4395, 64
  %v4406 = vpop.permute.xlu0 %4405
  %4407 = vrot.lane.b32.xlu0 %v4396, 64
  %v4408 = vpop.permute.xlu0 %4407
  %4409 = vrot.lane.b32.xlu0 %v4397, 64
  %v4410 = vpop.permute.xlu0 %4409
  %4411 = vrot.lane.b32.xlu0 %v4398, 64
  %v4412 = vpop.permute.xlu0 %4411
  %v4421 = vadd.f32 %v4328, %v3470
  %v4422 = vadd.f32 %v4337, %v4400
  %v4423 = vadd.f32 %v4346, %v4402
  %v4424 = vadd.f32 %v4355, %v4404
  %v4425 = vadd.f32 %v4364, %v4406
  %v4426 = vadd.f32 %v4373, %v4408
  %v4427 = vadd.f32 %v4382, %v4410
  %v4428 = vadd.f32 %v4391, %v4412
  %vm4429 = vcmask 523520
  %4430 = vst.msk [vmem:[%s7] sm:$0xff] %vm4429, %v3466
  %v4439 = vrot.slane %v4422, 7
  %v4440 = vsel %vm1015, %v4439, %v4421
  %v4441 = vrot.slane %v4423, 6
  %v4442 = vsel %vm1017, %v4441, %v4440
  %v4443 = vrot.slane %v4424, 5
  %v4444 = vsel %vm1019, %v4443, %v4442
  %v4445 = vrot.slane %v4425, 4
  %v4446 = vsel %vm1021, %v4445, %v4444
  %v4447 = vrot.slane %v4426, 3
  %v4448 = vsel %vm1023, %v4447, %v4446
  %v4449 = vrot.slane %v4427, 2
  %v4450 = vsel %vm1025, %v4449, %v4448
  %v4451 = vrot.slane %v4428, 1
  %v4452 = vsel %vm1027, %v4451, %v4450
  %4453 = vrot.lane.b32.xlu0 %v4452, 96
  %v4454 = vpop.permute.xlu0 %4453
  %vm4456 = vcmask 1048320
  %4457 = vst.msk [vmem:[%s7] sm:$0xff] %vm4456, %v4454
  %4458 = vrot.lane.b32.xlu0 %v45, 64
  %v4459 = vpop.permute.xlu0 %4458
  %4460 = vrot.lane.b32.xlu0 %v46, 64
  %v4461 = vpop.permute.xlu0 %4460
  %4462 = vrot.lane.b32.xlu0 %v47, 64
  %v4463 = vpop.permute.xlu0 %4462
  %4464 = vrot.lane.b32.xlu0 %v48, 64
  %v4465 = vpop.permute.xlu0 %4464
  %4470 = vrot.lane.b32.xlu0 %v79, 64
  %v4471 = vpop.permute.xlu0 %4470
  %v4473 = vsel %vm80, %v4452, 0
  %4475 = vmatprep.subr.mxu0 0.0
  %4476 = vmatpush1.msra.mxu0 %v4459
  %4477 = vmatprep.subr.mxu0 0.0
  %4478 = vmatpush1.msra.mxu0 %v4461
  %4479 = vmatprep.subr.mxu0 0.0
  %4480 = vmatpush1.msra.mxu0 %v4463
  %4481 = vmatprep.subr.mxu0 0.0
  %4482 = vmatpush1.msra.mxu0 %v4465
  %4483 = vmatprep.subr.mxu0 0.0
  %4484 = vmatpush1.msra.mxu0 0.0
  %4485 = vmatprep.subr.mxu0 0.0
  %4486 = vmatpush1.msra.mxu0 0.0
  %4487 = vmatprep.subr.mxu0 0.0
  %4488 = vmatpush1.msra.mxu0 0.0
  %4489 = vmatprep.subr.mxu0 0.0
  %4490 = vmatpush1.msra.mxu0 0.0
  %4491 = vmatprep.subr.mxu0 0.0
  %4492 = vmatpush1.msra.mxu0 0.0
  %4493 = vmatprep.subr.mxu0 0.0
  %4494 = vmatpush1.msra.mxu0 0.0
  %4495 = vmatprep.subr.mxu0 0.0
  %4496 = vmatpush1.msra.mxu0 0.0
  %4497 = vmatprep.subr.mxu0 0.0
  %4498 = vmatpush1.msra.mxu0 0.0
  %4499 = vmatprep.subr.mxu0 0.0
  %4500 = vmatpush1.msra.mxu0 0.0
  %4501 = vmatprep.subr.mxu0 0.0
  %4502 = vmatpush1.msra.mxu0 0.0
  %4503 = vmatprep.subr.mxu0 0.0
  %4504 = vmatpush1.msra.mxu0 0.0
  %4505 = vmatprep.subr.mxu0 0.0
  %4506 = vmatpush1.msra.mxu0 0.0
  %4507 = vmatprep.subr.mxu0 0.0
  %4508 = vmatpush1.msra.mxu0 0.0
  %4509 = vmatprep.subr.mxu0 0.0
  %4510 = vmatpush1.msra.mxu0 0.0
  %4511 = vmatprep.subr.mxu0 0.0
  %4512 = vmatpush1.msra.mxu0 0.0
  %4513 = vmatprep.subr.mxu0 0.0
  %4514 = vmatpush1.msra.mxu0 0.0
  %4515 = vmatprep.subr.mxu0 0.0
  %4516 = vmatpush1.msra.mxu0 0.0
  %4517 = vmatprep.subr.mxu0 0.0
  %4518 = vmatpush1.msra.mxu0 0.0
  %4519 = vmatprep.subr.mxu0 0.0
  %4520 = vmatpush1.msra.mxu0 0.0
  %4521 = vmatprep.subr.mxu0 0.0
  %4522 = vmatpush1.msra.mxu0 0.0
  %4523 = vmatprep.subr.mxu0 0.0
  %4524 = vmatpush1.msra.mxu0 0.0
  %4525 = vmatprep.subr.mxu0 0.0
  %4526 = vmatpush1.msra.mxu0 0.0
  %4527 = vmatprep.subr.mxu0 0.0
  %4528 = vmatpush1.msra.mxu0 0.0
  %4529 = vmatprep.subr.mxu0 0.0
  %4530 = vmatpush1.msra.mxu0 0.0
  %4531 = vmatprep.subr.mxu0 0.0
  %4532 = vmatpush1.msra.mxu0 0.0
  %4533 = vmatprep.subr.mxu0 0.0
  %4534 = vmatpush1.msra.mxu0 0.0
  %4535 = vmatprep.subr.mxu0 0.0
  %4536 = vmatpush1.msra.mxu0 0.0
  %4537 = vmatprep.subr.mxu0 0.0
  %4538 = vmatpush1.msra.mxu0 0.0
  %4539 = vmatprep.mubr.f32.mxu0 0.0
  %4540 = vmatmul.mubr.f32.gmra.mrb[0].mxu0 %v4473
  %v4541 = vpop.f32.mrb[0].mxu0
  %v4542 = vadd.f32 %v4471, %v4541
  %v4543 = vpop.f32.mrb[0].mxu0
  %4544 = vdwg.mxu0
  %v4545 = vsel %vm669, %v4542, -inf
  %4546 = vmax.xlane.f32.xlu0 %v4545
  %v4547 = vpop.xlane.xlu0 %4546
  %v4548 = vsub.f32 %v4542, %v4547
  %v4549 = vmul.f32 %v4548, 1.442695
  %v4550 = vpow.pop %v4549
  %v4551 = vsel %vm669, %v4550, 0.0
  %4552 = vadd.xlane.f32.xlu0 %v4551
  %v4553 = vpop.xlane.xlu0 %4552
  %v4554 = vlog2.pop %v4553
  %v4555 = vmul.f32 %v4554, 0.6931472
  %v4556 = vadd.f32 %v4547, %v4555
  %v4557 = vsub.f32 %v4542, %v4556
  %4558 = vst.msk [vmem:[%s7 + $0x8] sm:$0xff] %vm669, %v4557
  // Predicated region
  $region30: #{lstm_double_att_forward.1} parent=0 // pred_check
    _
  $region31: #{lstm_double_att_forward.1} parent=0 // pred_check_branch
    %4560 = sbr.rel (0) target = $region33
  $region32: #{lstm_double_att_forward.1} parent=0 // pred_region
    _
  $region33: #{lstm_double_att_forward.1} parent=0 // pred_fallthru
    _
  // Predicated region
  $region34: #{lstm_double_att_forward.1} parent=0 // pred_check
    _
  $region35: #{lstm_double_att_forward.1} parent=0 // pred_check_branch
    %4562 = sbr.rel (0) target = $region37
  $region36: #{lstm_double_att_forward.1} parent=0 // pred_region
    _
  $region37: #{lstm_double_att_forward.1} parent=0 // pred_fallthru
    _

</llo_original>
